<compile_context>
chip_gen: v7x
topology: tpu7x:2x2x1
jax: 0.10.0
libtpu: 0.0.40
codegen_flags: <defaults>
</compile_context>

<pallas_src>
import math
import functools

import jax
import jax.numpy as jnp
from jax import lax
from jax.experimental import pallas as pl
from jax.experimental.pallas import tpu as pltpu


# ---------------------------------------------------------------------------
# Kernel: one grid step = (batch element b, query tile qt).
# ---------------------------------------------------------------------------
def mha_attn_kernel(qh_ref, kh_ref, vh_ref, woh_ref, res_ref,
                    out_ref, attn_ref, *, exp_dtype):
    """
    qh_ref  : (1, h, Tq, d_k)  scaled, projected, head-major Q tile
    kh_ref  : (1, h, L,  d_k)  projected head-major K (whole sequence)
    vh_ref  : (1, h, L,  d_k)  projected head-major V (whole sequence)
    woh_ref : (h, d_k, D)      output-projection weight, head-major rows
    res_ref : (1, Tq, D)       raw query tile (residual)
    out_ref : (1, Tq, D)
    attn_ref: (1, h, Tq, L)
    """
    qh = qh_ref[0]                                   # (h, Tq, d_k)
    kh = kh_ref[0]                                   # (h, L,  d_k)
    vh = vh_ref[0]                                   # (h, L,  d_k)
    cdt = vh.dtype

    # scores = Q @ K^T batched over heads; contraction is the minor (lane)
    # dim of both operands -> MXU matmul with transposed RHS, no XLU transpose.
    scores = lax.dot_general(
        qh, kh,
        dimension_numbers=(((2,), (2,)), ((0,), (0,))),
        preferred_element_type=jnp.float32)          # (h, Tq, L) f32

    # Numerically stable softmax over the key axis; exp optionally in bf16
    # (v6e/v7x EUP bf16 path), reductions stay in f32.
    m = jnp.max(scores, axis=-1, keepdims=True)
    e = jnp.exp((scores - m).astype(exp_dtype)).astype(jnp.float32)
    denom = jnp.sum(e, axis=-1, keepdims=True)
    p = e * pl.reciprocal(denom, approx=True)        # EUP slot, ~free

    attn_ref[0] = p.astype(attn_ref.dtype)

    # ctx = P @ V, batched over heads.
    ctx = lax.dot_general(
        p.astype(cdt), vh,
        dimension_numbers=(((2,), (1,)), ((0,), (0,))),
        preferred_element_type=jnp.float32)          # (h, Tq, d_k) f32

    # Output projection + residual, accumulated per head in registers
    # (no (Tq, h*d_k) scratch round-trip, no masked per-head lane stores).
    # TODO(synk): for very large h*Tq*L, process heads in unrolled
    #             lax.fori_loop chunks to bound live f32 intermediates.
    acc = res_ref[0].astype(jnp.float32)             # (Tq, D)
    for hi in range(ctx.shape[0]):
        acc = acc + jnp.dot(ctx[hi].astype(cdt), woh_ref[hi],
                            preferred_element_type=jnp.float32)
    out_ref[0] = acc.astype(out_ref.dtype)


# ---------------------------------------------------------------------------
# Sizing helpers (review: re-derive Tq / vmem_limit_bytes from chip VMEM).
# ---------------------------------------------------------------------------
def _vmem_capacity_bytes():
    try:
        return int(pltpu.get_tpu_info().vmem_capacity_bytes)
    except Exception:
        return 64 << 20      # v7x per-core VMEM; conservative fallback


def _vmem_estimate(Tq, L, h, d_k, D, in_isz, attn_isz, kv_bufs, w_bufs):
    """Rough per-step VMEM residency: pipelined blocks + f32 intermediates."""
    blocks = (2 * h * Tq * d_k * in_isz                 # qh (double-buffered)
              + kv_bufs * 2 * h * L * d_k * in_isz      # kh + vh
              + w_bufs * h * d_k * D * in_isz           # woh
              + 2 * Tq * D * in_isz                     # residual q tile
              + 2 * Tq * D * in_isz                     # out tile
              + 2 * h * Tq * L * attn_isz)              # attn output tile
    interm = (2 * h * Tq * L + h * Tq * d_k + 2 * Tq * D) * 4  # f32 scores/p/ctx/acc
    return blocks + interm


def _pick_q_tile(L, h, d_k, D, in_isz, attn_isz, kv_bufs, w_bufs,
                 budget, q_tile_max=256):
    """Largest Tq dividing L, %8==0, whose VMEM estimate fits the budget."""
    cands = sorted({t for t in (q_tile_max, 256, 128, 64, 32, 16, 8)
                    if 0 < t <= L and L % t == 0 and t % 8 == 0},
                   reverse=True)
    for t in cands:
        if _vmem_estimate(t, L, h, d_k, D, in_isz, attn_isz,
                          kv_bufs, w_bufs) <= budget:
            return t
    if cands:
        return cands[-1]
    # TODO(synk): ragged L falls back to one full-sequence tile; can exceed
    #             VMEM for very long ragged sequences.
    return L


def _block_spec(block_shape, index_map, single_buffer=False):
    """BlockSpec; single-buffer grid/batch-invariant operands when supported."""
    if single_buffer and hasattr(pl, "Buffered"):
        try:
            return pl.BlockSpec(block_shape, index_map,
                                pipeline_mode=pl.Buffered(1))
        except TypeError:        # jax version without pipeline_mode kwarg
            pass
    return pl.BlockSpec(block_shape, index_map)


# ---------------------------------------------------------------------------
# Wrapper.
# ---------------------------------------------------------------------------
def multi_head_attention(query, key, value, wq, wk, wv, wo, *, h,
                         q_tile=256, attn_dtype=jnp.bfloat16,
                         exp_dtype=None, single_buffer_consts=True,
                         vmem_limit_bytes=None):
    """Inference-mode MultiHeadAttention forward. Returns (output, attn)."""
    B, L, D = query.shape
    HD = wq.shape[1]                 # h * d_k
    d_k = HD // h
    assert HD == D and D % h == 0, "kernel assumes d_k = d_model // h"

    cdt = query.dtype
    in_isz = jnp.dtype(cdt).itemsize
    attn_isz = jnp.dtype(attn_dtype).itemsize

    if exp_dtype is None:
        # bf16 exp uses the v6e/v7x bf16 EUP path (~2x rate); f32 otherwise.
        # TODO(synk): on v5e with bf16 activations pass exp_dtype=jnp.float32.
        exp_dtype = jnp.bfloat16 if jnp.dtype(cdt) == jnp.bfloat16 else jnp.float32

    # ---- Q/K/V projections hoisted out of the kernel (review feedback). ----
    # XLA matmuls batched over B*L rows get good MXU shapes and keep raw +
    # projected K/V out of the attention kernel's VMEM residency.
    def proj(x, w, scale=None):
        wh = w.reshape(D, h, d_k)
        y = jnp.einsum('bld,dhk->bhlk', x, wh,
                       preferred_element_type=jnp.float32)
        if scale is not None:
            y = y * scale
        return y.astype(cdt)                          # (B, h, L, d_k)

    qh = proj(query, wq, scale=1.0 / math.sqrt(d_k))  # scale folded into Q
    kh = proj(key, wk)
    vh = proj(value, wv)
    woh = wo.reshape(h, d_k, D).astype(cdt)

    kv_bufs = 1 if single_buffer_consts else 2
    w_bufs = kv_bufs

    capacity = _vmem_capacity_bytes()
    Tq = _pick_q_tile(L, h, d_k, D, in_isz, attn_isz, kv_bufs, w_bufs,
                      budget=int(0.75 * capacity), q_tile_max=q_tile)
    num_q = L // Tq

    if vmem_limit_bytes is None:
        est = _vmem_estimate(Tq, L, h, d_k, D, in_isz, attn_isz,
                             kv_bufs, w_bufs)
        vmem_limit_bytes = int(min(int(0.9 * capacity),
                                   max(2 * est, 32 << 20)))

    kernel = functools.partial(mha_attn_kernel, exp_dtype=exp_dtype)

    qh_spec = pl.BlockSpec((1, h, Tq, d_k), lambda b, q: (b, 0, q, 0))
    kv_spec = _block_spec((1, h, L, d_k), lambda b, q: (b, 0, 0, 0),
                          single_buffer=single_buffer_consts)
    wo_spec = _block_spec((h, d_k, D), lambda b, q: (0, 0, 0),
                          single_buffer=single_buffer_consts)
    res_spec = pl.BlockSpec((1, Tq, D), lambda b, q: (b, q, 0))

    cost = pl.CostEstimate(
        flops=int(4 * B * h * L * L * d_k       # scores + ctx
                  + 2 * B * L * HD * D),        # output projection
        transcendentals=int(B * h * L * L),     # exp in softmax
        bytes_accessed=int(in_isz * (3 * B * L * HD + HD * D + 2 * B * L * D)
                           + attn_isz * B * h * L * L),
    )

    out, attn = pl.pallas_call(
        kernel,
        out_shape=(
            jax.ShapeDtypeStruct((B, L, D), cdt),
            jax.ShapeDtypeStruct((B, h, L, L), attn_dtype),
        ),
        grid_spec=pltpu.PrefetchScalarGridSpec(
            num_scalar_prefetch=0,
            grid=(B, num_q),
            in_specs=[qh_spec, kv_spec, kv_spec, wo_spec, res_spec],
            out_specs=[
                pl.BlockSpec((1, Tq, D), lambda b, q: (b, q, 0)),
                pl.BlockSpec((1, h, Tq, L), lambda b, q: (b, 0, q, 0)),
            ],
        ),
        compiler_params=pltpu.CompilerParams(
            dimension_semantics=("parallel", "parallel"),
            vmem_limit_bytes=vmem_limit_bytes,
        ),
        cost_estimate=cost,
    )(qh, kh, vh, woh, query)
    return out, attn


# ---------------------------------------------------------------------------
# Pure-JAX reference matching the PyTorch forward (eval mode, no mask).
# ---------------------------------------------------------------------------
def reference_mha(query, key, value, wq, wk, wv, wo, *, h):
    B, L, D = query.shape
    d_k = D // h

    def proj(x, w):
        y = x @ w                                               # (B, L, h*d_k)
        return y.reshape(B, L, h, d_k).transpose(0, 2, 1, 3)    # (B, h, L, d_k)

    Q, K, V = proj(query, wq), proj(key, wk), proj(value, wv)
    scores = jnp.einsum("bhqd,bhkd->bhqk", Q, K) / math.sqrt(d_k)
    p = jax.nn.softmax(scores, axis=-1)
    ctx = jnp.einsum("bhqk,bhkd->bhqd", p, V)
    ctx = ctx.transpose(0, 2, 1, 3).reshape(B, L, h * d_k)
    out = ctx @ wo + query
    return out, p


if __name__ == "__main__":
    B, L = 2, 8
    h, d_model = 4, 32
    d_k = d_v = d_model // h          # nn.Linear(d_model, d_k*h) == (d_model, d_model)

    key0 = jax.random.PRNGKey(0)
    kq, kk, kv_, k1, k2, k3, k4 = jax.random.split(key0, 7)

    query = jax.random.normal(kq, (B, L, d_model), dtype=jnp.float32)
    key_in = jax.random.normal(kk, (B, L, d_model), dtype=jnp.float32)
    value = jax.random.normal(kv_, (B, L, d_model), dtype=jnp.float32)

    # Deterministic weight init, stored pre-transposed: (d_model, h*d_k).
    winit = 1.0 / math.sqrt(d_model)
    wq = jax.random.uniform(k1, (d_model, h * d_k), jnp.float32, -winit, winit)
    wk = jax.random.uniform(k2, (d_model, h * d_k), jnp.float32, -winit, winit)
    wv = jax.random.uniform(k3, (d_model, h * d_k), jnp.float32, -winit, winit)
    wo = jax.random.uniform(k4, (h * d_k, d_model), jnp.float32, -winit, winit)

    try:
        out, attn = multi_head_attention(query, key_in, value,
                                         wq, wk, wv, wo, h=h)
    except Exception:
        # TODO(synk): pipeline_mode=pl.Buffered(1) may be unsupported on some
        #             jax/Mosaic versions; retry with default double-buffering.
        out, attn = multi_head_attention(query, key_in, value,
                                         wq, wk, wv, wo, h=h,
                                         single_buffer_consts=False)
    out = jax.block_until_ready(out)
    attn = jax.block_until_ready(attn)

    out_ref, attn_ref = reference_mha(query, key_in, value, wq, wk, wv, wo, h=h)
    assert out.shape == (B, L, d_model) and attn.shape == (B, h, L, L)
    # out: f32 accumulation; only error source is the approximate EUP reciprocal.
    assert jnp.allclose(out, out_ref, atol=1e-2, rtol=1e-2)
    # attn: written back in bf16 (review: halves the (B,h,L,L) HBM writeback).
    assert jnp.allclose(attn.astype(jnp.float32), attn_ref, atol=2e-2, rtol=2e-2)

    print("KERNEL_OK")
</pallas_src>

<mosaic_0001>
module attributes {stable_mosaic.version = 11 : i64} {
  func.func @mha_attn_kernel(%arg0: i32, %arg1: i32, %arg2: memref<1x4x8x8xf32, #tpu.memory_space<vmem>>, %arg3: memref<1x4x8x8xf32, #tpu.memory_space<vmem>>, %arg4: memref<1x4x8x8xf32, #tpu.memory_space<vmem>>, %arg5: memref<4x8x32xf32, #tpu.memory_space<vmem>>, %arg6: memref<1x8x32xf32, #tpu.memory_space<vmem>>, %arg7: memref<1x8x32xf32, #tpu.memory_space<vmem>>, %arg8: memref<1x4x8x8xbf16, #tpu.memory_space<vmem>>) attributes {dimension_semantics = [#tpu.dimension_semantics<parallel>, #tpu.dimension_semantics<parallel>], iteration_bounds = array<i64: 2, 1>, scalar_prefetch = 0 : i64, scratch_operands = 0 : i64, tpu.core_type = #tpu.core_type<tc>, window_params = [{transform_indices = @transform_0, window_bounds = array<i64: 1, 4, 8, 8>}, {pipeline_mode = #tpu.pipeline_mode<synchronous>, transform_indices = @transform_1, window_bounds = array<i64: 1, 4, 8, 8>}, {pipeline_mode = #tpu.pipeline_mode<synchronous>, transform_indices = @transform_2, window_bounds = array<i64: 1, 4, 8, 8>}, {pipeline_mode = #tpu.pipeline_mode<synchronous>, transform_indices = @transform_3, window_bounds = array<i64: 4, 8, 32>}, {transform_indices = @transform_4, window_bounds = array<i64: 1, 8, 32>}, {transform_indices = @transform_5, window_bounds = array<i64: 1, 8, 32>}, {transform_indices = @transform_6, window_bounds = array<i64: 1, 4, 8, 8>}]} {
    %c0 = arith.constant 0 : index
    %c0_0 = arith.constant 0 : index
    %c0_1 = arith.constant 0 : index
    %c0_2 = arith.constant 0 : index
    %0 = vector.load %arg2[%c0, %c0_0, %c0_1, %c0_2] : memref<1x4x8x8xf32, #tpu.memory_space<vmem>>, vector<1x4x8x8xf32>
    %1 = vector.shape_cast %0 : vector<1x4x8x8xf32> to vector<4x8x8xf32>
    %c0_3 = arith.constant 0 : index
    %c0_4 = arith.constant 0 : index
    %c0_5 = arith.constant 0 : index
    %c0_6 = arith.constant 0 : index
    %2 = vector.load %arg3[%c0_3, %c0_4, %c0_5, %c0_6] : memref<1x4x8x8xf32, #tpu.memory_space<vmem>>, vector<1x4x8x8xf32>
    %3 = vector.shape_cast %2 : vector<1x4x8x8xf32> to vector<4x8x8xf32>
    %c0_7 = arith.constant 0 : index
    %c0_8 = arith.constant 0 : index
    %c0_9 = arith.constant 0 : index
    %c0_10 = arith.constant 0 : index
    %4 = vector.load %arg4[%c0_7, %c0_8, %c0_9, %c0_10] : memref<1x4x8x8xf32, #tpu.memory_space<vmem>>, vector<1x4x8x8xf32>
    %5 = vector.shape_cast %4 : vector<1x4x8x8xf32> to vector<4x8x8xf32>
    %cst = arith.constant dense<0.000000e+00> : vector<4x8x8xf32>
    %6 = tpu.matmul %1, %3, %cst {dimension_numbers = #tpu.dot_dimension_numbers<[2], [2], [1], [1], [0, 0, 0, 1, 1, 1], [0], [0]>} : vector<4x8x8xf32>, vector<4x8x8xf32>, vector<4x8x8xf32> -> vector<4x8x8xf32>
    %cst_11 = arith.constant dense<0xFF800000> : vector<4x8xf32>
    %7 = vector.multi_reduction <maximumf>, %6, %cst_11 [2] : vector<4x8x8xf32> to vector<4x8xf32>
    %8 = vector.shape_cast %7 : vector<4x8xf32> to vector<4x8x1xf32>
    %9 = vector.broadcast %8 : vector<4x8x1xf32> to vector<4x8x8xf32>
    %10 = arith.subf %6, %9 : vector<4x8x8xf32>
    %11 = math.exp %10 : vector<4x8x8xf32>
    %cst_12 = arith.constant dense<0.000000e+00> : vector<4x8xf32>
    %12 = vector.multi_reduction <add>, %11, %cst_12 [2] : vector<4x8x8xf32> to vector<4x8xf32>
    %13 = vector.shape_cast %12 : vector<4x8xf32> to vector<4x8x1xf32>
    %14 = tpu.reciprocal %13 {approx = true} : vector<4x8x1xf32> -> vector<4x8x1xf32>
    %15 = vector.broadcast %14 : vector<4x8x1xf32> to vector<4x8x8xf32>
    %16 = arith.mulf %11, %15 : vector<4x8x8xf32>
    %17 = arith.truncf %16 : vector<4x8x8xf32> to vector<4x8x8xbf16>
    %c0_13 = arith.constant 0 : index
    %c0_14 = arith.constant 0 : index
    %c0_15 = arith.constant 0 : index
    %c0_16 = arith.constant 0 : index
    %18 = vector.load %arg8[%c0_13, %c0_14, %c0_15, %c0_16] : memref<1x4x8x8xbf16, #tpu.memory_space<vmem>>, vector<1x4x8x8xbf16>
    %19 = vector.shape_cast %18 : vector<1x4x8x8xbf16> to vector<4x8x8xbf16>
    %20 = vector.shape_cast %17 : vector<4x8x8xbf16> to vector<1x4x8x8xbf16>
    tpu.vector_store %arg8[%c0_13, %c0_14, %c0_15, %c0_16], %20 {strides = array<i32>} : memref<1x4x8x8xbf16, #tpu.memory_space<vmem>>, vector<1x4x8x8xbf16>,
    %cst_17 = arith.constant dense<0.000000e+00> : vector<4x8x8xf32>
    %21 = tpu.matmul %16, %5, %cst_17 {dimension_numbers = #tpu.dot_dimension_numbers<[2], [1], [1], [2], [0, 0, 0, 1, 1, 2], [0], [0]>} : vector<4x8x8xf32>, vector<4x8x8xf32>, vector<4x8x8xf32> -> vector<4x8x8xf32>
    %c0_18 = arith.constant 0 : index
    %c0_19 = arith.constant 0 : index
    %c0_20 = arith.constant 0 : index
    %22 = vector.load %arg6[%c0_18, %c0_19, %c0_20] : memref<1x8x32xf32, #tpu.memory_space<vmem>>, vector<1x8x32xf32>
    %23 = vector.shape_cast %22 : vector<1x8x32xf32> to vector<8x32xf32>
    %24 = vector.extract_strided_slice %21 {offsets = [0, 0, 0], sizes = [1, 8, 8], strides = [1, 1, 1]} : vector<4x8x8xf32> to vector<1x8x8xf32>
    %25 = vector.shape_cast %24 : vector<1x8x8xf32> to vector<8x8xf32>
    %c0_21 = arith.constant 0 : index
    %c0_22 = arith.constant 0 : index
    %c0_23 = arith.constant 0 : index
    %26 = vector.load %arg5[%c0_21, %c0_22, %c0_23] : memref<4x8x32xf32, #tpu.memory_space<vmem>>, vector<1x8x32xf32>
    %27 = vector.shape_cast %26 : vector<1x8x32xf32> to vector<8x32xf32>
    %cst_24 = arith.constant dense<0.000000e+00> : vector<8x32xf32>
    %28 = tpu.matmul %25, %27, %cst_24 {dimension_numbers = #tpu.dot_dimension_numbers<[1], [0], [0], [1], [0, 0, 1, 1], [], []>} : vector<8x8xf32>, vector<8x32xf32>, vector<8x32xf32> -> vector<8x32xf32>
    %29 = arith.addf %23, %28 : vector<8x32xf32>
    %30 = vector.extract_strided_slice %21 {offsets = [1, 0, 0], sizes = [1, 8, 8], strides = [1, 1, 1]} : vector<4x8x8xf32> to vector<1x8x8xf32>
    %31 = vector.shape_cast %30 : vector<1x8x8xf32> to vector<8x8xf32>
    %c1 = arith.constant 1 : index
    %c0_25 = arith.constant 0 : index
    %c0_26 = arith.constant 0 : index
    %32 = vector.load %arg5[%c1, %c0_25, %c0_26] : memref<4x8x32xf32, #tpu.memory_space<vmem>>, vector<1x8x32xf32>
    %33 = vector.shape_cast %32 : vector<1x8x32xf32> to vector<8x32xf32>
    %cst_27 = arith.constant dense<0.000000e+00> : vector<8x32xf32>
    %34 = tpu.matmul %31, %33, %cst_27 {dimension_numbers = #tpu.dot_dimension_numbers<[1], [0], [0], [1], [0, 0, 1, 1], [], []>} : vector<8x8xf32>, vector<8x32xf32>, vector<8x32xf32> -> vector<8x32xf32>
    %35 = arith.addf %29, %34 : vector<8x32xf32>
    %36 = vector.extract_strided_slice %21 {offsets = [2, 0, 0], sizes = [1, 8, 8], strides = [1, 1, 1]} : vector<4x8x8xf32> to vector<1x8x8xf32>
    %37 = vector.shape_cast %36 : vector<1x8x8xf32> to vector<8x8xf32>
    %c2 = arith.constant 2 : index
    %c0_28 = arith.constant 0 : index
    %c0_29 = arith.constant 0 : index
    %38 = vector.load %arg5[%c2, %c0_28, %c0_29] : memref<4x8x32xf32, #tpu.memory_space<vmem>>, vector<1x8x32xf32>
    %39 = vector.shape_cast %38 : vector<1x8x32xf32> to vector<8x32xf32>
    %cst_30 = arith.constant dense<0.000000e+00> : vector<8x32xf32>
    %40 = tpu.matmul %37, %39, %cst_30 {dimension_numbers = #tpu.dot_dimension_numbers<[1], [0], [0], [1], [0, 0, 1, 1], [], []>} : vector<8x8xf32>, vector<8x32xf32>, vector<8x32xf32> -> vector<8x32xf32>
    %41 = arith.addf %35, %40 : vector<8x32xf32>
    %42 = vector.extract_strided_slice %21 {offsets = [3, 0, 0], sizes = [1, 8, 8], strides = [1, 1, 1]} : vector<4x8x8xf32> to vector<1x8x8xf32>
    %43 = vector.shape_cast %42 : vector<1x8x8xf32> to vector<8x8xf32>
    %c3 = arith.constant 3 : index
    %c0_31 = arith.constant 0 : index
    %c0_32 = arith.constant 0 : index
    %44 = vector.load %arg5[%c3, %c0_31, %c0_32] : memref<4x8x32xf32, #tpu.memory_space<vmem>>, vector<1x8x32xf32>
    %45 = vector.shape_cast %44 : vector<1x8x32xf32> to vector<8x32xf32>
    %cst_33 = arith.constant dense<0.000000e+00> : vector<8x32xf32>
    %46 = tpu.matmul %43, %45, %cst_33 {dimension_numbers = #tpu.dot_dimension_numbers<[1], [0], [0], [1], [0, 0, 1, 1], [], []>} : vector<8x8xf32>, vector<8x32xf32>, vector<8x32xf32> -> vector<8x32xf32>
    %47 = arith.addf %41, %46 : vector<8x32xf32>
    %c0_34 = arith.constant 0 : index
    %c0_35 = arith.constant 0 : index
    %c0_36 = arith.constant 0 : index
    %48 = vector.load %arg7[%c0_34, %c0_35, %c0_36] : memref<1x8x32xf32, #tpu.memory_space<vmem>>, vector<1x8x32xf32>
    %49 = vector.shape_cast %48 : vector<1x8x32xf32> to vector<8x32xf32>
    %50 = vector.shape_cast %47 : vector<8x32xf32> to vector<1x8x32xf32>
    tpu.vector_store %arg7[%c0_34, %c0_35, %c0_36], %50 {strides = array<i32>} : memref<1x8x32xf32, #tpu.memory_space<vmem>>, vector<1x8x32xf32>,
    return
  }
  func.func @transform_0(%arg0: i32, %arg1: i32) -> (i32, i32, i32, i32) {
    %c0_i32 = arith.constant 0 : i32
    %c0_i32_0 = arith.constant 0 : i32
    %c0_i32_1 = arith.constant 0 : i32
    return %arg0, %c0_i32, %arg1, %c0_i32_0 : i32, i32, i32, i32
  }
  func.func @transform_1(%arg0: i32, %arg1: i32) -> (i32, i32, i32, i32) {
    %c0_i32 = arith.constant 0 : i32
    %c0_i32_0 = arith.constant 0 : i32
    %c0_i32_1 = arith.constant 0 : i32
    %c0_i32_2 = arith.constant 0 : i32
    return %arg0, %c0_i32, %c0_i32_0, %c0_i32_1 : i32, i32, i32, i32
  }
  func.func @transform_2(%arg0: i32, %arg1: i32) -> (i32, i32, i32, i32) {
    %c0_i32 = arith.constant 0 : i32
    %c0_i32_0 = arith.constant 0 : i32
    %c0_i32_1 = arith.constant 0 : i32
    %c0_i32_2 = arith.constant 0 : i32
    return %arg0, %c0_i32, %c0_i32_0, %c0_i32_1 : i32, i32, i32, i32
  }
  func.func @transform_3(%arg0: i32, %arg1: i32) -> (i32, i32, i32) {
    %c0_i32 = arith.constant 0 : i32
    %c0_i32_0 = arith.constant 0 : i32
    %c0_i32_1 = arith.constant 0 : i32
    %c0_i32_2 = arith.constant 0 : i32
    return %c0_i32, %c0_i32_0, %c0_i32_1 : i32, i32, i32
  }
  func.func @transform_4(%arg0: i32, %arg1: i32) -> (i32, i32, i32) {
    %c0_i32 = arith.constant 0 : i32
    %c0_i32_0 = arith.constant 0 : i32
    return %arg0, %arg1, %c0_i32 : i32, i32, i32
  }
  func.func @transform_5(%arg0: i32, %arg1: i32) -> (i32, i32, i32) {
    %c0_i32 = arith.constant 0 : i32
    %c0_i32_0 = arith.constant 0 : i32
    return %arg0, %arg1, %c0_i32 : i32, i32, i32
  }
  func.func @transform_6(%arg0: i32, %arg1: i32) -> (i32, i32, i32, i32) {
    %c0_i32 = arith.constant 0 : i32
    %c0_i32_0 = arith.constant 0 : i32
    %c0_i32_1 = arith.constant 0 : i32
    return %arg0, %c0_i32, %arg1, %c0_i32_0 : i32, i32, i32, i32
  }
}

module attributes {stable_mosaic.version = 11 : i64} {
  func.func @mha_attn_kernel(%arg0: i32, %arg1: i32, %arg2: memref<1x4x8x8xf32, #tpu.memory_space<vmem>>, %arg3: memref<1x4x8x8xf32, #tpu.memory_space<vmem>>, %arg4: memref<1x4x8x8xf32, #tpu.memory_space<vmem>>, %arg5: memref<4x8x32xf32, #tpu.memory_space<vmem>>, %arg6: memref<1x8x32xf32, #tpu.memory_space<vmem>>, %arg7: memref<1x8x32xf32, #tpu.memory_space<vmem>>, %arg8: memref<1x4x8x8xbf16, #tpu.memory_space<vmem>>) attributes {dimension_semantics = [#tpu.dimension_semantics<parallel>, #tpu.dimension_semantics<parallel>], iteration_bounds = array<i64: 2, 1>, scalar_prefetch = 0 : i64, scratch_operands = 0 : i64, tpu.core_type = #tpu.core_type<tc>, window_params = [{transform_indices = @transform_0, window_bounds = array<i64: 1, 4, 8, 8>}, {transform_indices = @transform_1, window_bounds = array<i64: 1, 4, 8, 8>}, {transform_indices = @transform_2, window_bounds = array<i64: 1, 4, 8, 8>}, {pipeline_mode = #tpu.pipeline_mode<synchronous>, transform_indices = @transform_3, window_bounds = array<i64: 4, 8, 32>}, {transform_indices = @transform_4, window_bounds = array<i64: 1, 8, 32>}, {transform_indices = @transform_5, window_bounds = array<i64: 1, 8, 32>}, {transform_indices = @transform_6, window_bounds = array<i64: 1, 4, 8, 8>}]} {
    %c0 = arith.constant 0 : index
    %c0_0 = arith.constant 0 : index
    %c0_1 = arith.constant 0 : index
    %c0_2 = arith.constant 0 : index
    %0 = vector.load %arg2[%c0, %c0_0, %c0_1, %c0_2] : memref<1x4x8x8xf32, #tpu.memory_space<vmem>>, vector<1x4x8x8xf32>
    %1 = vector.shape_cast %0 : vector<1x4x8x8xf32> to vector<4x8x8xf32>
    %c0_3 = arith.constant 0 : index
    %c0_4 = arith.constant 0 : index
    %c0_5 = arith.constant 0 : index
    %c0_6 = arith.constant 0 : index
    %2 = vector.load %arg3[%c0_3, %c0_4, %c0_5, %c0_6] : memref<1x4x8x8xf32, #tpu.memory_space<vmem>>, vector<1x4x8x8xf32>
    %3 = vector.shape_cast %2 : vector<1x4x8x8xf32> to vector<4x8x8xf32>
    %c0_7 = arith.constant 0 : index
    %c0_8 = arith.constant 0 : index
    %c0_9 = arith.constant 0 : index
    %c0_10 = arith.constant 0 : index
    %4 = vector.load %arg4[%c0_7, %c0_8, %c0_9, %c0_10] : memref<1x4x8x8xf32, #tpu.memory_space<vmem>>, vector<1x4x8x8xf32>
    %5 = vector.shape_cast %4 : vector<1x4x8x8xf32> to vector<4x8x8xf32>
    %cst = arith.constant dense<0.000000e+00> : vector<4x8x8xf32>
    %6 = tpu.matmul %1, %3, %cst {dimension_numbers = #tpu.dot_dimension_numbers<[2], [2], [1], [1], [0, 0, 0, 1, 1, 1], [0], [0]>} : vector<4x8x8xf32>, vector<4x8x8xf32>, vector<4x8x8xf32> -> vector<4x8x8xf32>
    %cst_11 = arith.constant dense<0xFF800000> : vector<4x8xf32>
    %7 = vector.multi_reduction <maximumf>, %6, %cst_11 [2] : vector<4x8x8xf32> to vector<4x8xf32>
    %8 = vector.shape_cast %7 : vector<4x8xf32> to vector<4x8x1xf32>
    %9 = vector.broadcast %8 : vector<4x8x1xf32> to vector<4x8x8xf32>
    %10 = arith.subf %6, %9 : vector<4x8x8xf32>
    %11 = math.exp %10 : vector<4x8x8xf32>
    %cst_12 = arith.constant dense<0.000000e+00> : vector<4x8xf32>
    %12 = vector.multi_reduction <add>, %11, %cst_12 [2] : vector<4x8x8xf32> to vector<4x8xf32>
    %13 = vector.shape_cast %12 : vector<4x8xf32> to vector<4x8x1xf32>
    %14 = tpu.reciprocal %13 {approx = true} : vector<4x8x1xf32> -> vector<4x8x1xf32>
    %15 = vector.broadcast %14 : vector<4x8x1xf32> to vector<4x8x8xf32>
    %16 = arith.mulf %11, %15 : vector<4x8x8xf32>
    %17 = arith.truncf %16 : vector<4x8x8xf32> to vector<4x8x8xbf16>
    %c0_13 = arith.constant 0 : index
    %c0_14 = arith.constant 0 : index
    %c0_15 = arith.constant 0 : index
    %c0_16 = arith.constant 0 : index
    %18 = vector.load %arg8[%c0_13, %c0_14, %c0_15, %c0_16] : memref<1x4x8x8xbf16, #tpu.memory_space<vmem>>, vector<1x4x8x8xbf16>
    %19 = vector.shape_cast %18 : vector<1x4x8x8xbf16> to vector<4x8x8xbf16>
    %20 = vector.shape_cast %17 : vector<4x8x8xbf16> to vector<1x4x8x8xbf16>
    tpu.vector_store %arg8[%c0_13, %c0_14, %c0_15, %c0_16], %20 {strides = array<i32>} : memref<1x4x8x8xbf16, #tpu.memory_space<vmem>>, vector<1x4x8x8xbf16>,
    %cst_17 = arith.constant dense<0.000000e+00> : vector<4x8x8xf32>
    %21 = tpu.matmul %16, %5, %cst_17 {dimension_numbers = #tpu.dot_dimension_numbers<[2], [1], [1], [2], [0, 0, 0, 1, 1, 2], [0], [0]>} : vector<4x8x8xf32>, vector<4x8x8xf32>, vector<4x8x8xf32> -> vector<4x8x8xf32>
    %c0_18 = arith.constant 0 : index
    %c0_19 = arith.constant 0 : index
    %c0_20 = arith.constant 0 : index
    %22 = vector.load %arg6[%c0_18, %c0_19, %c0_20] : memref<1x8x32xf32, #tpu.memory_space<vmem>>, vector<1x8x32xf32>
    %23 = vector.shape_cast %22 : vector<1x8x32xf32> to vector<8x32xf32>
    %24 = vector.extract_strided_slice %21 {offsets = [0, 0, 0], sizes = [1, 8, 8], strides = [1, 1, 1]} : vector<4x8x8xf32> to vector<1x8x8xf32>
    %25 = vector.shape_cast %24 : vector<1x8x8xf32> to vector<8x8xf32>
    %c0_21 = arith.constant 0 : index
    %c0_22 = arith.constant 0 : index
    %c0_23 = arith.constant 0 : index
    %26 = vector.load %arg5[%c0_21, %c0_22, %c0_23] : memref<4x8x32xf32, #tpu.memory_space<vmem>>, vector<1x8x32xf32>
    %27 = vector.shape_cast %26 : vector<1x8x32xf32> to vector<8x32xf32>
    %cst_24 = arith.constant dense<0.000000e+00> : vector<8x32xf32>
    %28 = tpu.matmul %25, %27, %cst_24 {dimension_numbers = #tpu.dot_dimension_numbers<[1], [0], [0], [1], [0, 0, 1, 1], [], []>} : vector<8x8xf32>, vector<8x32xf32>, vector<8x32xf32> -> vector<8x32xf32>
    %29 = arith.addf %23, %28 : vector<8x32xf32>
    %30 = vector.extract_strided_slice %21 {offsets = [1, 0, 0], sizes = [1, 8, 8], strides = [1, 1, 1]} : vector<4x8x8xf32> to vector<1x8x8xf32>
    %31 = vector.shape_cast %30 : vector<1x8x8xf32> to vector<8x8xf32>
    %c1 = arith.constant 1 : index
    %c0_25 = arith.constant 0 : index
    %c0_26 = arith.constant 0 : index
    %32 = vector.load %arg5[%c1, %c0_25, %c0_26] : memref<4x8x32xf32, #tpu.memory_space<vmem>>, vector<1x8x32xf32>
    %33 = vector.shape_cast %32 : vector<1x8x32xf32> to vector<8x32xf32>
    %cst_27 = arith.constant dense<0.000000e+00> : vector<8x32xf32>
    %34 = tpu.matmul %31, %33, %cst_27 {dimension_numbers = #tpu.dot_dimension_numbers<[1], [0], [0], [1], [0, 0, 1, 1], [], []>} : vector<8x8xf32>, vector<8x32xf32>, vector<8x32xf32> -> vector<8x32xf32>
    %35 = arith.addf %29, %34 : vector<8x32xf32>
    %36 = vector.extract_strided_slice %21 {offsets = [2, 0, 0], sizes = [1, 8, 8], strides = [1, 1, 1]} : vector<4x8x8xf32> to vector<1x8x8xf32>
    %37 = vector.shape_cast %36 : vector<1x8x8xf32> to vector<8x8xf32>
    %c2 = arith.constant 2 : index
    %c0_28 = arith.constant 0 : index
    %c0_29 = arith.constant 0 : index
    %38 = vector.load %arg5[%c2, %c0_28, %c0_29] : memref<4x8x32xf32, #tpu.memory_space<vmem>>, vector<1x8x32xf32>
    %39 = vector.shape_cast %38 : vector<1x8x32xf32> to vector<8x32xf32>
    %cst_30 = arith.constant dense<0.000000e+00> : vector<8x32xf32>
    %40 = tpu.matmul %37, %39, %cst_30 {dimension_numbers = #tpu.dot_dimension_numbers<[1], [0], [0], [1], [0, 0, 1, 1], [], []>} : vector<8x8xf32>, vector<8x32xf32>, vector<8x32xf32> -> vector<8x32xf32>
    %41 = arith.addf %35, %40 : vector<8x32xf32>
    %42 = vector.extract_strided_slice %21 {offsets = [3, 0, 0], sizes = [1, 8, 8], strides = [1, 1, 1]} : vector<4x8x8xf32> to vector<1x8x8xf32>
    %43 = vector.shape_cast %42 : vector<1x8x8xf32> to vector<8x8xf32>
    %c3 = arith.constant 3 : index
    %c0_31 = arith.constant 0 : index
    %c0_32 = arith.constant 0 : index
    %44 = vector.load %arg5[%c3, %c0_31, %c0_32] : memref<4x8x32xf32, #tpu.memory_space<vmem>>, vector<1x8x32xf32>
    %45 = vector.shape_cast %44 : vector<1x8x32xf32> to vector<8x32xf32>
    %cst_33 = arith.constant dense<0.000000e+00> : vector<8x32xf32>
    %46 = tpu.matmul %43, %45, %cst_33 {dimension_numbers = #tpu.dot_dimension_numbers<[1], [0], [0], [1], [0, 0, 1, 1], [], []>} : vector<8x8xf32>, vector<8x32xf32>, vector<8x32xf32> -> vector<8x32xf32>
    %47 = arith.addf %41, %46 : vector<8x32xf32>
    %c0_34 = arith.constant 0 : index
    %c0_35 = arith.constant 0 : index
    %c0_36 = arith.constant 0 : index
    %48 = vector.load %arg7[%c0_34, %c0_35, %c0_36] : memref<1x8x32xf32, #tpu.memory_space<vmem>>, vector<1x8x32xf32>
    %49 = vector.shape_cast %48 : vector<1x8x32xf32> to vector<8x32xf32>
    %50 = vector.shape_cast %47 : vector<8x32xf32> to vector<1x8x32xf32>
    tpu.vector_store %arg7[%c0_34, %c0_35, %c0_36], %50 {strides = array<i32>} : memref<1x8x32xf32, #tpu.memory_space<vmem>>, vector<1x8x32xf32>,
    return
  }
  func.func @transform_0(%arg0: i32, %arg1: i32) -> (i32, i32, i32, i32) {
    %c0_i32 = arith.constant 0 : i32
    %c0_i32_0 = arith.constant 0 : i32
    %c0_i32_1 = arith.constant 0 : i32
    return %arg0, %c0_i32, %arg1, %c0_i32_0 : i32, i32, i32, i32
  }
  func.func @transform_1(%arg0: i32, %arg1: i32) -> (i32, i32, i32, i32) {
    %c0_i32 = arith.constant 0 : i32
    %c0_i32_0 = arith.constant 0 : i32
    %c0_i32_1 = arith.constant 0 : i32
    %c0_i32_2 = arith.constant 0 : i32
    return %arg0, %c0_i32, %c0_i32_0, %c0_i32_1 : i32, i32, i32, i32
  }
  func.func @transform_2(%arg0: i32, %arg1: i32) -> (i32, i32, i32, i32) {
    %c0_i32 = arith.constant 0 : i32
    %c0_i32_0 = arith.constant 0 : i32
    %c0_i32_1 = arith.constant 0 : i32
    %c0_i32_2 = arith.constant 0 : i32
    return %arg0, %c0_i32, %c0_i32_0, %c0_i32_1 : i32, i32, i32, i32
  }
  func.func @transform_3(%arg0: i32, %arg1: i32) -> (i32, i32, i32) {
    %c0_i32 = arith.constant 0 : i32
    %c0_i32_0 = arith.constant 0 : i32
    %c0_i32_1 = arith.constant 0 : i32
    %c0_i32_2 = arith.constant 0 : i32
    return %c0_i32, %c0_i32_0, %c0_i32_1 : i32, i32, i32
  }
  func.func @transform_4(%arg0: i32, %arg1: i32) -> (i32, i32, i32) {
    %c0_i32 = arith.constant 0 : i32
    %c0_i32_0 = arith.constant 0 : i32
    return %arg0, %arg1, %c0_i32 : i32, i32, i32
  }
  func.func @transform_5(%arg0: i32, %arg1: i32) -> (i32, i32, i32) {
    %c0_i32 = arith.constant 0 : i32
    %c0_i32_0 = arith.constant 0 : i32
    return %arg0, %arg1, %c0_i32 : i32, i32, i32
  }
  func.func @transform_6(%arg0: i32, %arg1: i32) -> (i32, i32, i32, i32) {
    %c0_i32 = arith.constant 0 : i32
    %c0_i32_0 = arith.constant 0 : i32
    %c0_i32_1 = arith.constant 0 : i32
    return %arg0, %c0_i32, %arg1, %c0_i32_0 : i32, i32, i32, i32
  }
}

</mosaic_0001>

<llo_original>
// kernel: tpu_custom_call.1
$region0: #{tpu_custom_call.1}
  #allocation0 [shape = 'u32[]', space=smem, size = 0x4, offset = 0x4, fixed_abs, tag = 'smem constant byte address 0x4 - core index']
  #allocation1 [shape = 'u32[144,128]{1,0:T(1,128)}', space=vmem, size = 0x12000, scoped, tag = 'internal scratch']
  %s0 = inlined_call_operand.hbm [shape: f32[2,4,8,8], index: 0, kind: input, shape index: {}]
  %s1 = inlined_call_operand.hbm [shape: f32[2,4,8,8], index: 1, kind: input, shape index: {}]
  %s2 = inlined_call_operand.hbm [shape: f32[2,4,8,8], index: 2, kind: input, shape index: {}]
  %s3 = inlined_call_operand.hbm [shape: f32[4,8,32], index: 3, kind: input, shape index: {}]
  %s4 = inlined_call_operand.hbm [shape: f32[2,8,32], index: 4, kind: input, shape index: {}]
  %s5 = inlined_call_operand.hbm [shape: f32[2,8,32], index: 5, kind: output, shape index: {0}]
  %s6 = inlined_call_operand.hbm [shape: bf16[2,4,8,8], index: 6, kind: output, shape index: {1}]
  %7 = xla_tuple %s5, %s6
  %s8 = sld [smem:[#allocation0]]
  $region81: #{tpu_custom_call.1} parent=0
    _
  %s10 = ssub.s32 1, %s8
  %s11 = scalar_select 0, %s10, %s8
  $region1: #{tpu_custom_call.1} parent=0
    #allocation2 [shape = 'u8[32768]{0}', space=vmem, size = 0x8000, scoped, tag = 'input window, operand 0']
    #allocation3 [shape = 's32[2]{0}', space=sflag, size = 0x8, scoped, tag = 'scoped memory for tpu_custom_call.1']
    #allocation4 [shape = 's32[2]{0}', space=sflag, size = 0x8, scoped, tag = 'scoped memory for tpu_custom_call.1']
    #allocation5 [shape = 'u8[16384]{0}', space=vmem, size = 0x4000, scoped, tag = 'input window, operand 1, single buffered']
    #allocation6 [shape = 's32[1]{0}', space=sflag, size = 0x4, scoped, tag = 'scoped memory for tpu_custom_call.1']
    #allocation7 [shape = 'u8[16384]{0}', space=vmem, size = 0x4000, scoped, tag = 'input window, operand 2, single buffered']
    #allocation8 [shape = 'u8[16384]{0}', space=vmem, size = 0x4000, scoped, tag = 'input window, operand 3, single buffered']
    #allocation9 [shape = 's32[1]{0}', space=sflag, size = 0x4, scoped, tag = 'scoped memory for tpu_custom_call.1']
    #allocation10 [shape = 'u8[8192]{0}', space=vmem, size = 0x2000, scoped, tag = 'input window, operand 4']
    #allocation11 [shape = 'u8[8192]{0}', space=vmem, size = 0x2000, scoped, tag = 'output window, operand 0']
    #allocation12 [shape = 'u8[16384]{0}', space=vmem, size = 0x4000, scoped, tag = 'output window, operand 1']
    #allocation13 [shape = 's32[2]{0}', space=sflag, size = 0x8, scoped, tag = 'scoped memory for tpu_custom_call.1']
    %12 = vsyncpa [#allocation3], 0
    %s13 = scalar_lea.sflag [#allocation3], 1
    %14 = vsyncpa %s13, 0
    %15 = vsyncpa [#allocation6], 0
    %16 = vsyncpa [#allocation9], 0
    %17 = vsyncpa [#allocation4], 0
    %s18 = scalar_lea.sflag [#allocation4], 1
    %19 = vsyncpa %s18, 0
    %20 = vsyncpa [#allocation13], 0
    %s21 = scalar_lea.sflag [#allocation13], 1
    %22 = vsyncpa %s21, 0
    loop: start=0, step=1, limit=4
    $region2: #{tpu_custom_call.1} parent=1 // loop_pre_header
      _
    $region3: #{tpu_custom_call.1} parent=1 // loop_header
      %s24 = sphi 0, %s28
      %p25 = scmp.ge.s32.totalorder %s24, 4
      %s31 = sphi 0, %s43
      %s32 = sphi 0, %s39
      %s33 = sphi 0, %s31
      %s34 = sphi 0, %s32
      %s35 = sphi 0, %s33
      %s36 = sphi 0, %s34
      %s48 = sphi 0, %s50
      %s51 = sphi 0, %s48
      %s52 = sphi 0, %s51
      %s68 = sphi 0, %s52
      %s74 = sphi 0, %s76
      %s77 = sphi 0, %s74
      %s78 = sphi 0, %s77
      %s94 = sphi 0, %s78
      %s100 = sphi 0, %s102
      %s103 = sphi 0, %s100
      %s104 = sphi 0, %s103
      %s120 = sphi 0, %s104
      %s124 = sphi 0, %s124
      %s126 = sphi 0, %s124
      %s127 = sphi 0, %s126
      %s141 = sphi 0, %s127
      %s149 = sphi 0, %s151
      %s152 = sphi 0, %s149
      %s153 = sphi 0, %s152
      %s169 = sphi 0, %s153
      %s177 = sphi 0, %s179
      %s180 = sphi 0, %s177
      %s181 = sphi 0, %s180
      %s197 = sphi 0, %s181
      %s205 = sphi 0, %s207
      %s208 = sphi 0, %s205
      %s209 = sphi 0, %s208
      %s225 = sphi 0, %s209
    $region4: #{tpu_custom_call.1} parent=1 // loop_header_branch
      %27 = sbr.rel (%p25) target = $region8
    $region5: #{tpu_custom_call.1} parent=1 // loop_body
      %s29 = ssub.s32 %s24, 1
      %s30 = ssub.s32 %s24, 2
      %s37 = sadd.s32 1, %s32
      %p38 = scmp.ge.s32.totalorder %s37, 1
      %s39 = scalar_select %p38, 0, %s37
      %s40 = sadd.s32 1, %s31
      %s41 = scalar_select %p38, %s40, %s31
      %p42 = scmp.ge.s32.totalorder %s41, 2
      %s43 = scalar_select %p42, 0, %s41
      %s44 = ssub.s32 %s31, %s43
      %s45 = ssub.s32 %s32, %s39
      %s46 = sor.u32 %s44, %s45
      %p47 = scmp.eq.s32.totalorder %s46, 0
      %s49 = sadd.s32 %s48, 1
      %s50 = scalar_select %p47, %s48, %s49
      %p53 = pneg %p47
      %p54 = scmp.eq.s32.totalorder %s24, 1
      %p55 = por %p53, %p54
      %p56 = scmp.ne.s32.totalorder %s48, %s51
      %p57 = scmp.eq.s32.totalorder %s24, 0
      %p58 = por %p56, %p57
      %p59 = scmp.ne.s32.totalorder %s48, %s51
      %p60 = scmp.eq.s32.totalorder %s29, 1
      %p61 = por %p59, %p60
      %p62 = scmp.ne.s32.totalorder %s51, %s52
      %p63 = scmp.eq.s32.totalorder %s29, 0
      %p64 = por %p62, %p63
      %p65 = scmp.ne.s32.totalorder %s51, %s52
      %p66 = scmp.eq.s32.totalorder %s30, 1
      %p67 = por %p65, %p66
      %p69 = scmp.ne.s32.totalorder %s52, %s68
      %p70 = scmp.eq.s32.totalorder %s30, 0
      %p71 = por %p69, %p70
      %s72 = ssub.s32 %s31, %s43
      %p73 = scmp.eq.s32.totalorder %s72, 0
      %s75 = sadd.s32 %s74, 1
      %s76 = scalar_select %p73, %s74, %s75
      %p79 = pneg %p73
      %p80 = scmp.eq.s32.totalorder %s24, 1
      %p81 = por %p79, %p80
      %p82 = scmp.ne.s32.totalorder %s74, %s77
      %p83 = scmp.eq.s32.totalorder %s24, 0
      %p84 = por %p82, %p83
      %p85 = scmp.ne.s32.totalorder %s74, %s77
      %p86 = scmp.eq.s32.totalorder %s29, 1
      %p87 = por %p85, %p86
      %p88 = scmp.ne.s32.totalorder %s77, %s78
      %p89 = scmp.eq.s32.totalorder %s29, 0
      %p90 = por %p88, %p89
      %p91 = scmp.ne.s32.totalorder %s77, %s78
      %p92 = scmp.eq.s32.totalorder %s30, 1
      %p93 = por %p91, %p92
      %p95 = scmp.ne.s32.totalorder %s78, %s94
      %p96 = scmp.eq.s32.totalorder %s30, 0
      %p97 = por %p95, %p96
      %s98 = ssub.s32 %s31, %s43
      %p99 = scmp.eq.s32.totalorder %s98, 0
      %s101 = sadd.s32 %s100, 1
      %s102 = scalar_select %p99, %s100, %s101
      %p105 = pneg %p99
      %p106 = scmp.eq.s32.totalorder %s24, 1
      %p107 = por %p105, %p106
      %p108 = scmp.ne.s32.totalorder %s100, %s103
      %p109 = scmp.eq.s32.totalorder %s24, 0
      %p110 = por %p108, %p109
      %p111 = scmp.ne.s32.totalorder %s100, %s103
      %p112 = scmp.eq.s32.totalorder %s29, 1
      %p113 = por %p111, %p112
      %p114 = scmp.ne.s32.totalorder %s103, %s104
      %p115 = scmp.eq.s32.totalorder %s29, 0
      %p116 = por %p114, %p115
      %p117 = scmp.ne.s32.totalorder %s103, %s104
      %p118 = scmp.eq.s32.totalorder %s30, 1
      %p119 = por %p117, %p118
      %p121 = scmp.ne.s32.totalorder %s104, %s120
      %p122 = scmp.eq.s32.totalorder %s30, 0
      %p123 = por %p121, %p122
      %s125 = sadd.s32 %s124, 1
      %p128 = scmp.eq.s32.totalorder %s24, 1
      %p129 = scmp.ne.s32.totalorder %s124, %s126
      %p130 = scmp.eq.s32.totalorder %s24, 0
      %p131 = por %p129, %p130
      %p132 = scmp.ne.s32.totalorder %s124, %s126
      %p133 = scmp.eq.s32.totalorder %s29, 1
      %p134 = por %p132, %p133
      %p135 = scmp.ne.s32.totalorder %s126, %s127
      %p136 = scmp.eq.s32.totalorder %s29, 0
      %p137 = por %p135, %p136
      %p138 = scmp.ne.s32.totalorder %s126, %s127
      %p139 = scmp.eq.s32.totalorder %s30, 1
      %p140 = por %p138, %p139
      %p142 = scmp.ne.s32.totalorder %s127, %s141
      %p143 = scmp.eq.s32.totalorder %s30, 0
      %p144 = por %p142, %p143
      %s145 = ssub.s32 %s31, %s43
      %s146 = ssub.s32 %s32, %s39
      %s147 = sor.u32 %s145, %s146
      %p148 = scmp.eq.s32.totalorder %s147, 0
      %s150 = sadd.s32 %s149, 1
      %s151 = scalar_select %p148, %s149, %s150
      %p154 = pneg %p148
      %p155 = scmp.eq.s32.totalorder %s24, 1
      %p156 = por %p154, %p155
      %p157 = scmp.ne.s32.totalorder %s149, %s152
      %p158 = scmp.eq.s32.totalorder %s24, 0
      %p159 = por %p157, %p158
      %p160 = scmp.ne.s32.totalorder %s149, %s152
      %p161 = scmp.eq.s32.totalorder %s29, 1
      %p162 = por %p160, %p161
      %p163 = scmp.ne.s32.totalorder %s152, %s153
      %p164 = scmp.eq.s32.totalorder %s29, 0
      %p165 = por %p163, %p164
      %p166 = scmp.ne.s32.totalorder %s152, %s153
      %p167 = scmp.eq.s32.totalorder %s30, 1
      %p168 = por %p166, %p167
      %p170 = scmp.ne.s32.totalorder %s153, %s169
      %p171 = scmp.eq.s32.totalorder %s30, 0
      %p172 = por %p170, %p171
      %s173 = ssub.s32 %s31, %s43
      %s174 = ssub.s32 %s32, %s39
      %s175 = sor.u32 %s173, %s174
      %p176 = scmp.eq.s32.totalorder %s175, 0
      %s178 = sadd.s32 %s177, 1
      %s179 = scalar_select %p176, %s177, %s178
      %p182 = pneg %p176
      %p183 = scmp.eq.s32.totalorder %s24, 1
      %p184 = por %p182, %p183
      %p185 = scmp.ne.s32.totalorder %s177, %s180
      %p186 = scmp.eq.s32.totalorder %s24, 0
      %p187 = por %p185, %p186
      %p188 = scmp.ne.s32.totalorder %s177, %s180
      %p189 = scmp.eq.s32.totalorder %s29, 1
      %p190 = por %p188, %p189
      %p191 = scmp.ne.s32.totalorder %s180, %s181
      %p192 = scmp.eq.s32.totalorder %s29, 0
      %p193 = por %p191, %p192
      %p194 = scmp.ne.s32.totalorder %s180, %s181
      %p195 = scmp.eq.s32.totalorder %s30, 1
      %p196 = por %p194, %p195
      %p198 = scmp.ne.s32.totalorder %s181, %s197
      %p199 = scmp.eq.s32.totalorder %s30, 0
      %p200 = por %p198, %p199
      %s201 = ssub.s32 %s31, %s43
      %s202 = ssub.s32 %s32, %s39
      %s203 = sor.u32 %s201, %s202
      %p204 = scmp.eq.s32.totalorder %s203, 0
      %s206 = sadd.s32 %s205, 1
      %s207 = scalar_select %p204, %s205, %s206
      %p210 = pneg %p204
      %p211 = scmp.eq.s32.totalorder %s24, 1
      %p212 = por %p210, %p211
      %p213 = scmp.ne.s32.totalorder %s205, %s208
      %p214 = scmp.eq.s32.totalorder %s24, 0
      %p215 = por %p213, %p214
      %p216 = scmp.ne.s32.totalorder %s205, %s208
      %p217 = scmp.eq.s32.totalorder %s29, 1
      %p218 = por %p216, %p217
      %p219 = scmp.ne.s32.totalorder %s208, %s209
      %p220 = scmp.eq.s32.totalorder %s29, 0
      %p221 = por %p219, %p220
      %p222 = scmp.ne.s32.totalorder %s208, %s209
      %p223 = scmp.eq.s32.totalorder %s30, 1
      %p224 = por %p222, %p223
      %p226 = scmp.ne.s32.totalorder %s209, %s225
      %p227 = scmp.eq.s32.totalorder %s30, 0
      %p228 = por %p226, %p227
      %p229 = scmp.le.s32.totalorder 1, %s24
      %p230 = scmp.lt.s32.totalorder %s24, 3
      %p231 = pnand %p229, %p230
      %p232 = pneg %p231
      // Predicated region
      $region9: #{tpu_custom_call.1} parent=5 // pred_check
        _
      $region10: #{tpu_custom_call.1} parent=5 // pred_check_branch
        %234 = sbr.rel (%p231) target = $region12
      $region11: #{tpu_custom_call.1} parent=5 // pred_region
        %s235 = ssub.s32 %s24, 1
        // Predicated region
        $region13: #{tpu_custom_call.1} parent=11 // pred_check
          %p236 = pneg %p90
        $region14: #{tpu_custom_call.1} parent=11 // pred_check_branch
          %238 = sbr.rel (%p236) target = $region16
        $region15: #{tpu_custom_call.1} parent=11 // pred_region
          %s240 = ssub.s32 512, 512
          %241 = vsyncadd [#allocation6], %s240
          %s242 = smul.addr %s33, 4
          %s243 = smul.addr %s242, 128
          %s244 = scalar_lea.hbm %s1, %s243
          %s245 = sshll.u32 [#allocation5], 4
          %s246 = int_to_ptr.vmem [resolvable:$true] %s245
          %251 = dma.hbm_to_vmem [thread:$0]  %s244, 512, %s246, [#allocation6], 128, 128, 8
        $region16: #{tpu_custom_call.1} parent=11 // pred_fallthru
          _
        // Predicated region
        $region17: #{tpu_custom_call.1} parent=11 // pred_check
          %p252 = pneg %p116
        $region18: #{tpu_custom_call.1} parent=11 // pred_check_branch
          %254 = sbr.rel (%p252) target = $region20
        $region19: #{tpu_custom_call.1} parent=11 // pred_region
          %s256 = ssub.s32 512, 512
          %257 = vsyncadd [#allocation6], %s256
          %s258 = smul.addr %s33, 4
          %s259 = smul.addr %s258, 128
          %s260 = scalar_lea.hbm %s2, %s259
          %s261 = sshll.u32 [#allocation7], 4
          %s262 = int_to_ptr.vmem [resolvable:$true] %s261
          %267 = dma.hbm_to_vmem [thread:$0]  %s260, 512, %s262, [#allocation6], 128, 128, 8
        $region20: #{tpu_custom_call.1} parent=11 // pred_fallthru
          _
        // Predicated region
        $region21: #{tpu_custom_call.1} parent=11 // pred_check
          %p268 = pneg %p137
        $region22: #{tpu_custom_call.1} parent=11 // pred_check_branch
          %270 = sbr.rel (%p268) target = $region24
        $region23: #{tpu_custom_call.1} parent=11 // pred_region
          %s272 = ssub.s32 512, 512
          %273 = vsyncadd [#allocation9], %s272
          %s274 = sshll.u32 [#allocation8], 4
          %s275 = int_to_ptr.vmem [resolvable:$true] %s274
          %280 = dma.hbm_to_vmem [thread:$0]  %s3, 512, %s275, [#allocation9], 128, 128, 8
        $region24: #{tpu_custom_call.1} parent=11 // pred_fallthru
          _
      $region12: #{tpu_custom_call.1} parent=5 // pred_fallthru
        _
      %p281 = scmp.lt.s32.totalorder %s24, 2
      // Predicated region
      $region25: #{tpu_custom_call.1} parent=5 // pred_check
        %p282 = pneg %p281
      $region26: #{tpu_custom_call.1} parent=5 // pred_check_branch
        %284 = sbr.rel (%p282) target = $region28
      $region27: #{tpu_custom_call.1} parent=5 // pred_region
        // Predicated region
        $region29: #{tpu_custom_call.1} parent=27 // pred_check
          %p285 = pneg %p58
        $region30: #{tpu_custom_call.1} parent=27 // pred_check_branch
          %287 = sbr.rel (%p285) target = $region32
        $region31: #{tpu_custom_call.1} parent=27 // pred_region
          %s288 = sand.u32 %s24, 1
          %s289 = scalar_lea.sflag [#allocation3], %s288
          %s290 = sand.u32 %s48, 1
          %s291 = smul.addr %s290, 32
          %s292 = scalar_lea.vmem [#allocation2], %s291
          %s294 = ssub.s32 512, 512
          %295 = vsyncadd %s289, %s294
          %s296 = smul.addr %s31, 4
          %s297 = sadd.s32 %s32, %s296
          %s298 = smul.addr %s297, 128
          %s299 = scalar_lea.hbm %s0, %s298
          %s300 = sshll.u32 %s292, 4
          %s301 = int_to_ptr.vmem [resolvable:$true] %s300
          %306 = dma.hbm_to_vmem [thread:$0]  %s299, 512, %s301, %s289, 128, 128, 8
        $region32: #{tpu_custom_call.1} parent=27 // pred_fallthru
          _
        // Predicated region
        $region33: #{tpu_custom_call.1} parent=27 // pred_check
          %p307 = pneg %p159
        $region34: #{tpu_custom_call.1} parent=27 // pred_check_branch
          %309 = sbr.rel (%p307) target = $region36
        $region35: #{tpu_custom_call.1} parent=27 // pred_region
          %s310 = sand.u32 %s24, 1
          %s311 = scalar_lea.sflag [#allocation3], %s310
          %s312 = sand.u32 %s149, 1
          %s313 = smul.addr %s312, 8
          %s314 = scalar_lea.vmem [#allocation10], %s313
          %s316 = ssub.s32 128, 128
          %317 = vsyncadd %s311, %s316
          %s318 = sadd.s32 %s32, %s31
          %s319 = smul.addr %s318, 128
          %s320 = scalar_lea.hbm %s4, %s319
          %s322 = sshll.u32 %s314, 4
          %s323 = int_to_ptr.vmem [resolvable:$true] %s322
          %325 = dma.hbm_to_vmem [thread:$0]  %s320, 128, %s323, %s311
        $region36: #{tpu_custom_call.1} parent=27 // pred_fallthru
          _
      $region28: #{tpu_custom_call.1} parent=5 // pred_fallthru
        _
      %p326 = scmp.le.s32.totalorder 1, %s24
      %p327 = scmp.lt.s32.totalorder %s24, 3
      %p328 = pnand %p326, %p327
      %p329 = pneg %p328
      // Predicated region
      $region37: #{tpu_custom_call.1} parent=5 // pred_check
        _
      $region38: #{tpu_custom_call.1} parent=5 // pred_check_branch
        %331 = sbr.rel (%p328) target = $region40
      $region39: #{tpu_custom_call.1} parent=5 // pred_region
        %s332 = ssub.s32 %s24, 1
        %s333 = sand.u32 %s29, 1
        %s334 = scalar_lea.sflag [#allocation3], %s333
        %s335 = sand.u32 %s51, 1
        %s336 = smul.addr %s335, 32
        %s337 = scalar_lea.vmem [#allocation2], %s336
        // Predicated region
        $region41: #{tpu_custom_call.1} parent=39 // pred_check
          %p338 = pneg %p64
        $region42: #{tpu_custom_call.1} parent=39 // pred_check_branch
          %340 = sbr.rel (%p338) target = $region44
        $region43: #{tpu_custom_call.1} parent=39 // pred_region
          %341 = dma.done %s334, 512
        $region44: #{tpu_custom_call.1} parent=39 // pred_fallthru
          _
        // Predicated region
        $region45: #{tpu_custom_call.1} parent=39 // pred_check
          %p342 = pneg %p90
        $region46: #{tpu_custom_call.1} parent=39 // pred_check_branch
          %344 = sbr.rel (%p342) target = $region48
        $region47: #{tpu_custom_call.1} parent=39 // pred_region
          %345 = dma.done [#allocation6], 512
        $region48: #{tpu_custom_call.1} parent=39 // pred_fallthru
          _
        // Predicated region
        $region49: #{tpu_custom_call.1} parent=39 // pred_check
          %p346 = pneg %p116
        $region50: #{tpu_custom_call.1} parent=39 // pred_check_branch
          %348 = sbr.rel (%p346) target = $region52
        $region51: #{tpu_custom_call.1} parent=39 // pred_region
          %349 = dma.done [#allocation6], 512
        $region52: #{tpu_custom_call.1} parent=39 // pred_fallthru
          _
        // Predicated region
        $region53: #{tpu_custom_call.1} parent=39 // pred_check
          %p350 = pneg %p137
        $region54: #{tpu_custom_call.1} parent=39 // pred_check_branch
          %352 = sbr.rel (%p350) target = $region56
        $region55: #{tpu_custom_call.1} parent=39 // pred_region
          %353 = dma.done [#allocation9], 512
        $region56: #{tpu_custom_call.1} parent=39 // pred_fallthru
          _
        %s354 = sand.u32 %s29, 1
        %s355 = scalar_lea.sflag [#allocation3], %s354
        %s356 = sand.u32 %s152, 1
        %s357 = smul.addr %s356, 8
        %s358 = scalar_lea.vmem [#allocation10], %s357
        // Predicated region
        $region57: #{tpu_custom_call.1} parent=39 // pred_check
          %p359 = pneg %p165
        $region58: #{tpu_custom_call.1} parent=39 // pred_check_branch
          %361 = sbr.rel (%p359) target = $region60
        $region59: #{tpu_custom_call.1} parent=39 // pred_region
          %362 = dma.done %s355, 128
        $region60: #{tpu_custom_call.1} parent=39 // pred_fallthru
          _
        %s363 = sand.u32 %s29, 1
        %s364 = scalar_lea.sflag [#allocation3], %s363
        %s365 = sand.u32 %s51, 1
        %s366 = smul.addr %s365, 32
        %s367 = scalar_lea.vmem [#allocation2], %s366
        %p368 = pneg %p64
        %p369 = pneg %p61
        %p370 = pneg %p90
        %p371 = pneg %p87
        %p372 = pneg %p116
        %p373 = pneg %p113
        %p374 = pneg %p137
        %p375 = pneg %p134
        %s376 = sand.u32 %s29, 1
        %s377 = scalar_lea.sflag [#allocation3], %s376
        %s378 = sand.u32 %s152, 1
        %s379 = smul.addr %s378, 8
        %s380 = scalar_lea.vmem [#allocation10], %s379
        %p381 = pneg %p165
        %p382 = pneg %p162
        %p383 = pneg %p193
        %p384 = pneg %p190
        %s385 = sand.u32 %s180, 1
        %s386 = scalar_lea.sflag [#allocation4], %s385
        %s387 = sand.u32 %s180, 1
        %s388 = smul.addr %s387, 8
        %s389 = scalar_lea.vmem [#allocation11], %s388
        %p390 = pneg %p221
        %p391 = pneg %p218
        %s392 = sand.u32 %s208, 1
        %s393 = scalar_lea.sflag [#allocation13], %s392
        %s394 = sand.u32 %s208, 1
        %s395 = smul.addr %s394, 16
        %s396 = scalar_lea.vmem [#allocation12], %s395
        %v397 = vld [vmem:[%s337] sm:$0xff]
        %v398 = vld [vmem:[%s337 + $0x8] sm:$0xff]
        %v399 = vld [vmem:[%s337 + $0x10] sm:$0xff]
        %v400 = vld [vmem:[%s337 + $0x18] sm:$0xff]
        %v401 = vld [vmem:[#allocation5] sm:$0xff]
        %v402 = vld [vmem:[#allocation5 + $0x8] sm:$0xff]
        %v403 = vld [vmem:[#allocation5 + $0x10] sm:$0xff]
        %v404 = vld [vmem:[#allocation5 + $0x18] sm:$0xff]
        %v405 = vld [vmem:[#allocation7] sm:$0xff]
        %v406 = vld [vmem:[#allocation7 + $0x8] sm:$0xff]
        %v407 = vld [vmem:[#allocation7 + $0x10] sm:$0xff]
        %v408 = vld [vmem:[#allocation7 + $0x18] sm:$0xff]
        %vm409 = vcmask 64512
        %v411 = vsel %vm409, %v397, 0
        %v414 = vsel %vm409, %v401, 0
        %416 = vmatprep.subr.mxu0 0.0
        %417 = vmatpush1.xpose.msra.mxu0 %v414
        %418 = vmatprep.subr.mxu0 0.0
        %419 = vmatpush1.xpose.msra.mxu0 0.0
        %420 = vmatprep.subr.mxu0 0.0
        %421 = vmatpush1.xpose.msra.mxu0 0.0
        %422 = vmatprep.subr.mxu0 0.0
        %423 = vmatpush1.xpose.msra.mxu0 0.0
        %424 = vmatprep.subr.mxu0 0.0
        %425 = vmatpush1.xpose.msra.mxu0 0.0
        %426 = vmatprep.subr.mxu0 0.0
        %427 = vmatpush1.xpose.msra.mxu0 0.0
        %428 = vmatprep.subr.mxu0 0.0
        %429 = vmatpush1.xpose.msra.mxu0 0.0
        %430 = vmatprep.subr.mxu0 0.0
        %431 = vmatpush1.xpose.msra.mxu0 0.0
        %432 = vmatprep.subr.mxu0 0.0
        %433 = vmatpush1.xpose.msra.mxu0 0.0
        %434 = vmatprep.subr.mxu0 0.0
        %435 = vmatpush1.xpose.msra.mxu0 0.0
        %436 = vmatprep.subr.mxu0 0.0
        %437 = vmatpush1.xpose.msra.mxu0 0.0
        %438 = vmatprep.subr.mxu0 0.0
        %439 = vmatpush1.xpose.msra.mxu0 0.0
        %440 = vmatprep.subr.mxu0 0.0
        %441 = vmatpush1.xpose.msra.mxu0 0.0
        %442 = vmatprep.subr.mxu0 0.0
        %443 = vmatpush1.xpose.msra.mxu0 0.0
        %444 = vmatprep.subr.mxu0 0.0
        %445 = vmatpush1.xpose.msra.mxu0 0.0
        %446 = vmatprep.subr.mxu0 0.0
        %447 = vmatpush1.xpose.msra.mxu0 0.0
        %448 = vmatprep.subr.mxu0 0.0
        %449 = vmatpush1.xpose.msra.mxu0 0.0
        %450 = vmatprep.subr.mxu0 0.0
        %451 = vmatpush1.xpose.msra.mxu0 0.0
        %452 = vmatprep.subr.mxu0 0.0
        %453 = vmatpush1.xpose.msra.mxu0 0.0
        %454 = vmatprep.subr.mxu0 0.0
        %455 = vmatpush1.xpose.msra.mxu0 0.0
        %456 = vmatprep.subr.mxu0 0.0
        %457 = vmatpush1.xpose.msra.mxu0 0.0
        %458 = vmatprep.subr.mxu0 0.0
        %459 = vmatpush1.xpose.msra.mxu0 0.0
        %460 = vmatprep.subr.mxu0 0.0
        %461 = vmatpush1.xpose.msra.mxu0 0.0
        %462 = vmatprep.subr.mxu0 0.0
        %463 = vmatpush1.xpose.msra.mxu0 0.0
        %464 = vmatprep.subr.mxu0 0.0
        %465 = vmatpush1.xpose.msra.mxu0 0.0
        %466 = vmatprep.subr.mxu0 0.0
        %467 = vmatpush1.xpose.msra.mxu0 0.0
        %468 = vmatprep.subr.mxu0 0.0
        %469 = vmatpush1.xpose.msra.mxu0 0.0
        %470 = vmatprep.subr.mxu0 0.0
        %471 = vmatpush1.xpose.msra.mxu0 0.0
        %472 = vmatprep.subr.mxu0 0.0
        %473 = vmatpush1.xpose.msra.mxu0 0.0
        %474 = vmatprep.subr.mxu0 0.0
        %475 = vmatpush1.xpose.msra.mxu0 0.0
        %476 = vmatprep.subr.mxu0 0.0
        %477 = vmatpush1.xpose.msra.mxu0 0.0
        %478 = vmatprep.subr.mxu0 0.0
        %479 = vmatpush1.xpose.msra.mxu0 0.0
        %480 = vmatprep.mubr.f32.mxu0 0.0
        %481 = vmatmul.mubr.f32.gmra.mrb[0].mxu0 %v411
        %v482 = vpop.f32.mrb[0].mxu0
        %v483 = vadd.f32 0.0, %v482
        %v484 = vpop.f32.mrb[0].mxu0
        %485 = vdwg.mxu0
        %v487 = vsel %vm409, %v398, 0
        %v490 = vsel %vm409, %v402, 0
        %492 = vmatprep.subr.mxu0 0.0
        %493 = vmatpush1.xpose.msra.mxu0 %v490
        %494 = vmatprep.subr.mxu0 0.0
        %495 = vmatpush1.xpose.msra.mxu0 0.0
        %496 = vmatprep.subr.mxu0 0.0
        %497 = vmatpush1.xpose.msra.mxu0 0.0
        %498 = vmatprep.subr.mxu0 0.0
        %499 = vmatpush1.xpose.msra.mxu0 0.0
        %500 = vmatprep.subr.mxu0 0.0
        %501 = vmatpush1.xpose.msra.mxu0 0.0
        %502 = vmatprep.subr.mxu0 0.0
        %503 = vmatpush1.xpose.msra.mxu0 0.0
        %504 = vmatprep.subr.mxu0 0.0
        %505 = vmatpush1.xpose.msra.mxu0 0.0
        %506 = vmatprep.subr.mxu0 0.0
        %507 = vmatpush1.xpose.msra.mxu0 0.0
        %508 = vmatprep.subr.mxu0 0.0
        %509 = vmatpush1.xpose.msra.mxu0 0.0
        %510 = vmatprep.subr.mxu0 0.0
        %511 = vmatpush1.xpose.msra.mxu0 0.0
        %512 = vmatprep.subr.mxu0 0.0
        %513 = vmatpush1.xpose.msra.mxu0 0.0
        %514 = vmatprep.subr.mxu0 0.0
        %515 = vmatpush1.xpose.msra.mxu0 0.0
        %516 = vmatprep.subr.mxu0 0.0
        %517 = vmatpush1.xpose.msra.mxu0 0.0
        %518 = vmatprep.subr.mxu0 0.0
        %519 = vmatpush1.xpose.msra.mxu0 0.0
        %520 = vmatprep.subr.mxu0 0.0
        %521 = vmatpush1.xpose.msra.mxu0 0.0
        %522 = vmatprep.subr.mxu0 0.0
        %523 = vmatpush1.xpose.msra.mxu0 0.0
        %524 = vmatprep.subr.mxu0 0.0
        %525 = vmatpush1.xpose.msra.mxu0 0.0
        %526 = vmatprep.subr.mxu0 0.0
        %527 = vmatpush1.xpose.msra.mxu0 0.0
        %528 = vmatprep.subr.mxu0 0.0
        %529 = vmatpush1.xpose.msra.mxu0 0.0
        %530 = vmatprep.subr.mxu0 0.0
        %531 = vmatpush1.xpose.msra.mxu0 0.0
        %532 = vmatprep.subr.mxu0 0.0
        %533 = vmatpush1.xpose.msra.mxu0 0.0
        %534 = vmatprep.subr.mxu0 0.0
        %535 = vmatpush1.xpose.msra.mxu0 0.0
        %536 = vmatprep.subr.mxu0 0.0
        %537 = vmatpush1.xpose.msra.mxu0 0.0
        %538 = vmatprep.subr.mxu0 0.0
        %539 = vmatpush1.xpose.msra.mxu0 0.0
        %540 = vmatprep.subr.mxu0 0.0
        %541 = vmatpush1.xpose.msra.mxu0 0.0
        %542 = vmatprep.subr.mxu0 0.0
        %543 = vmatpush1.xpose.msra.mxu0 0.0
        %544 = vmatprep.subr.mxu0 0.0
        %545 = vmatpush1.xpose.msra.mxu0 0.0
        %546 = vmatprep.subr.mxu0 0.0
        %547 = vmatpush1.xpose.msra.mxu0 0.0
        %548 = vmatprep.subr.mxu0 0.0
        %549 = vmatpush1.xpose.msra.mxu0 0.0
        %550 = vmatprep.subr.mxu0 0.0
        %551 = vmatpush1.xpose.msra.mxu0 0.0
        %552 = vmatprep.subr.mxu0 0.0
        %553 = vmatpush1.xpose.msra.mxu0 0.0
        %554 = vmatprep.subr.mxu0 0.0
        %555 = vmatpush1.xpose.msra.mxu0 0.0
        %556 = vmatprep.mubr.f32.mxu0 0.0
        %557 = vmatmul.mubr.f32.gmra.mrb[0].mxu0 %v487
        %v558 = vpop.f32.mrb[0].mxu0
        %v559 = vadd.f32 0.0, %v558
        %v560 = vpop.f32.mrb[0].mxu0
        %561 = vdwg.mxu0
        %v563 = vsel %vm409, %v399, 0
        %v566 = vsel %vm409, %v403, 0
        %568 = vmatprep.subr.mxu0 0.0
        %569 = vmatpush1.xpose.msra.mxu0 %v566
        %570 = vmatprep.subr.mxu0 0.0
        %571 = vmatpush1.xpose.msra.mxu0 0.0
        %572 = vmatprep.subr.mxu0 0.0
        %573 = vmatpush1.xpose.msra.mxu0 0.0
        %574 = vmatprep.subr.mxu0 0.0
        %575 = vmatpush1.xpose.msra.mxu0 0.0
        %576 = vmatprep.subr.mxu0 0.0
        %577 = vmatpush1.xpose.msra.mxu0 0.0
        %578 = vmatprep.subr.mxu0 0.0
        %579 = vmatpush1.xpose.msra.mxu0 0.0
        %580 = vmatprep.subr.mxu0 0.0
        %581 = vmatpush1.xpose.msra.mxu0 0.0
        %582 = vmatprep.subr.mxu0 0.0
        %583 = vmatpush1.xpose.msra.mxu0 0.0
        %584 = vmatprep.subr.mxu0 0.0
        %585 = vmatpush1.xpose.msra.mxu0 0.0
        %586 = vmatprep.subr.mxu0 0.0
        %587 = vmatpush1.xpose.msra.mxu0 0.0
        %588 = vmatprep.subr.mxu0 0.0
        %589 = vmatpush1.xpose.msra.mxu0 0.0
        %590 = vmatprep.subr.mxu0 0.0
        %591 = vmatpush1.xpose.msra.mxu0 0.0
        %592 = vmatprep.subr.mxu0 0.0
        %593 = vmatpush1.xpose.msra.mxu0 0.0
        %594 = vmatprep.subr.mxu0 0.0
        %595 = vmatpush1.xpose.msra.mxu0 0.0
        %596 = vmatprep.subr.mxu0 0.0
        %597 = vmatpush1.xpose.msra.mxu0 0.0
        %598 = vmatprep.subr.mxu0 0.0
        %599 = vmatpush1.xpose.msra.mxu0 0.0
        %600 = vmatprep.subr.mxu0 0.0
        %601 = vmatpush1.xpose.msra.mxu0 0.0
        %602 = vmatprep.subr.mxu0 0.0
        %603 = vmatpush1.xpose.msra.mxu0 0.0
        %604 = vmatprep.subr.mxu0 0.0
        %605 = vmatpush1.xpose.msra.mxu0 0.0
        %606 = vmatprep.subr.mxu0 0.0
        %607 = vmatpush1.xpose.msra.mxu0 0.0
        %608 = vmatprep.subr.mxu0 0.0
        %609 = vmatpush1.xpose.msra.mxu0 0.0
        %610 = vmatprep.subr.mxu0 0.0
        %611 = vmatpush1.xpose.msra.mxu0 0.0
        %612 = vmatprep.subr.mxu0 0.0
        %613 = vmatpush1.xpose.msra.mxu0 0.0
        %614 = vmatprep.subr.mxu0 0.0
        %615 = vmatpush1.xpose.msra.mxu0 0.0
        %616 = vmatprep.subr.mxu0 0.0
        %617 = vmatpush1.xpose.msra.mxu0 0.0
        %618 = vmatprep.subr.mxu0 0.0
        %619 = vmatpush1.xpose.msra.mxu0 0.0
        %620 = vmatprep.subr.mxu0 0.0
        %621 = vmatpush1.xpose.msra.mxu0 0.0
        %622 = vmatprep.subr.mxu0 0.0
        %623 = vmatpush1.xpose.msra.mxu0 0.0
        %624 = vmatprep.subr.mxu0 0.0
        %625 = vmatpush1.xpose.msra.mxu0 0.0
        %626 = vmatprep.subr.mxu0 0.0
        %627 = vmatpush1.xpose.msra.mxu0 0.0
        %628 = vmatprep.subr.mxu0 0.0
        %629 = vmatpush1.xpose.msra.mxu0 0.0
        %630 = vmatprep.subr.mxu0 0.0
        %631 = vmatpush1.xpose.msra.mxu0 0.0
        %632 = vmatprep.mubr.f32.mxu0 0.0
        %633 = vmatmul.mubr.f32.gmra.mrb[0].mxu0 %v563
        %v634 = vpop.f32.mrb[0].mxu0
        %v635 = vadd.f32 0.0, %v634
        %v636 = vpop.f32.mrb[0].mxu0
        %637 = vdwg.mxu0
        %v639 = vsel %vm409, %v400, 0
        %v642 = vsel %vm409, %v404, 0
        %644 = vmatprep.subr.mxu0 0.0
        %645 = vmatpush1.xpose.msra.mxu0 %v642
        %646 = vmatprep.subr.mxu0 0.0
        %647 = vmatpush1.xpose.msra.mxu0 0.0
        %648 = vmatprep.subr.mxu0 0.0
        %649 = vmatpush1.xpose.msra.mxu0 0.0
        %650 = vmatprep.subr.mxu0 0.0
        %651 = vmatpush1.xpose.msra.mxu0 0.0
        %652 = vmatprep.subr.mxu0 0.0
        %653 = vmatpush1.xpose.msra.mxu0 0.0
        %654 = vmatprep.subr.mxu0 0.0
        %655 = vmatpush1.xpose.msra.mxu0 0.0
        %656 = vmatprep.subr.mxu0 0.0
        %657 = vmatpush1.xpose.msra.mxu0 0.0
        %658 = vmatprep.subr.mxu0 0.0
        %659 = vmatpush1.xpose.msra.mxu0 0.0
        %660 = vmatprep.subr.mxu0 0.0
        %661 = vmatpush1.xpose.msra.mxu0 0.0
        %662 = vmatprep.subr.mxu0 0.0
        %663 = vmatpush1.xpose.msra.mxu0 0.0
        %664 = vmatprep.subr.mxu0 0.0
        %665 = vmatpush1.xpose.msra.mxu0 0.0
        %666 = vmatprep.subr.mxu0 0.0
        %667 = vmatpush1.xpose.msra.mxu0 0.0
        %668 = vmatprep.subr.mxu0 0.0
        %669 = vmatpush1.xpose.msra.mxu0 0.0
        %670 = vmatprep.subr.mxu0 0.0
        %671 = vmatpush1.xpose.msra.mxu0 0.0
        %672 = vmatprep.subr.mxu0 0.0
        %673 = vmatpush1.xpose.msra.mxu0 0.0
        %674 = vmatprep.subr.mxu0 0.0
        %675 = vmatpush1.xpose.msra.mxu0 0.0
        %676 = vmatprep.subr.mxu0 0.0
        %677 = vmatpush1.xpose.msra.mxu0 0.0
        %678 = vmatprep.subr.mxu0 0.0
        %679 = vmatpush1.xpose.msra.mxu0 0.0
        %680 = vmatprep.subr.mxu0 0.0
        %681 = vmatpush1.xpose.msra.mxu0 0.0
        %682 = vmatprep.subr.mxu0 0.0
        %683 = vmatpush1.xpose.msra.mxu0 0.0
        %684 = vmatprep.subr.mxu0 0.0
        %685 = vmatpush1.xpose.msra.mxu0 0.0
        %686 = vmatprep.subr.mxu0 0.0
        %687 = vmatpush1.xpose.msra.mxu0 0.0
        %688 = vmatprep.subr.mxu0 0.0
        %689 = vmatpush1.xpose.msra.mxu0 0.0
        %690 = vmatprep.subr.mxu0 0.0
        %691 = vmatpush1.xpose.msra.mxu0 0.0
        %692 = vmatprep.subr.mxu0 0.0
        %693 = vmatpush1.xpose.msra.mxu0 0.0
        %694 = vmatprep.subr.mxu0 0.0
        %695 = vmatpush1.xpose.msra.mxu0 0.0
        %696 = vmatprep.subr.mxu0 0.0
        %697 = vmatpush1.xpose.msra.mxu0 0.0
        %698 = vmatprep.subr.mxu0 0.0
        %699 = vmatpush1.xpose.msra.mxu0 0.0
        %700 = vmatprep.subr.mxu0 0.0
        %701 = vmatpush1.xpose.msra.mxu0 0.0
        %702 = vmatprep.subr.mxu0 0.0
        %703 = vmatpush1.xpose.msra.mxu0 0.0
        %704 = vmatprep.subr.mxu0 0.0
        %705 = vmatpush1.xpose.msra.mxu0 0.0
        %706 = vmatprep.subr.mxu0 0.0
        %707 = vmatpush1.xpose.msra.mxu0 0.0
        %708 = vmatprep.mubr.f32.mxu0 0.0
        %709 = vmatmul.mubr.f32.gmra.mrb[0].mxu0 %v639
        %v710 = vpop.f32.mrb[0].mxu0
        %v711 = vadd.f32 0.0, %v710
        %v712 = vpop.f32.mrb[0].mxu0
        %713 = vdwg.mxu0
        %v714 = vsel %vm409, %v483, -inf
        %715 = vmax.xlane.f32.xlu0 %v714
        %v716 = vpop.xlane.xlu0 %715
        %v717 = vsel %vm409, %v559, -inf
        %718 = vmax.xlane.f32.xlu0 %v717
        %v719 = vpop.xlane.xlu0 %718
        %v720 = vsel %vm409, %v635, -inf
        %721 = vmax.xlane.f32.xlu0 %v720
        %v722 = vpop.xlane.xlu0 %721
        %v723 = vsel %vm409, %v711, -inf
        %724 = vmax.xlane.f32.xlu0 %v723
        %v725 = vpop.xlane.xlu0 %724
        %v726 = vsub.f32 %v483, %v716
        %v727 = vsub.f32 %v559, %v719
        %v728 = vsub.f32 %v635, %v722
        %v729 = vsub.f32 %v711, %v725
        %v730 = vmul.f32 %v726, 1.442695
        %v731 = vpow.pop %v730
        %v732 = vmul.f32 %v727, 1.442695
        %v733 = vpow.pop %v732
        %v734 = vmul.f32 %v728, 1.442695
        %v735 = vpow.pop %v734
        %v736 = vmul.f32 %v729, 1.442695
        %v737 = vpow.pop %v736
        %v738 = vsel %vm409, %v731, 0.0
        %739 = vadd.xlane.f32.xlu0 %v738
        %v740 = vpop.xlane.xlu0 %739
        %v741 = vsel %vm409, %v733, 0.0
        %742 = vadd.xlane.f32.xlu0 %v741
        %v743 = vpop.xlane.xlu0 %742
        %v744 = vsel %vm409, %v735, 0.0
        %745 = vadd.xlane.f32.xlu0 %v744
        %v746 = vpop.xlane.xlu0 %745
        %v747 = vsel %vm409, %v737, 0.0
        %748 = vadd.xlane.f32.xlu0 %v747
        %v749 = vpop.xlane.xlu0 %748
        %v750 = vrcp.pop %v740
        %v751 = vrcp.pop %v743
        %v752 = vrcp.pop %v746
        %v753 = vrcp.pop %v749
        %v754 = vmul.f32 %v731, %v750
        %v755 = vmul.f32 %v733, %v751
        %v756 = vmul.f32 %v735, %v752
        %v757 = vmul.f32 %v737, %v753
        %v758 = vpack.c.bf16 %v754, %v754
        %v759 = vpack.c.bf16 %v755, %v755
        %v760 = vpack.c.bf16 %v756, %v756
        %v761 = vpack.c.bf16 %v757, %v757
        %vm762 = vcmask 60416
        %763 = vst.msk [vmem:[%s396] sm:$0xf] %vm762, %v758
        %764 = vst.msk [vmem:[%s396 + $0x4] sm:$0xf] %vm762, %v759
        %765 = vst.msk [vmem:[%s396 + $0x8] sm:$0xf] %vm762, %v760
        %766 = vst.msk [vmem:[%s396 + $0xc] sm:$0xf] %vm762, %v761
        %v768 = vsel %vm409, %v754, 0
        %770 = vmatprep.subr.mxu0 0.0
        %771 = vmatpush1.msra.mxu0 %v405
        %772 = vmatprep.subr.mxu0 0.0
        %773 = vmatpush1.msra.mxu0 0.0
        %774 = vmatprep.subr.mxu0 0.0
        %775 = vmatpush1.msra.mxu0 0.0
        %776 = vmatprep.subr.mxu0 0.0
        %777 = vmatpush1.msra.mxu0 0.0
        %778 = vmatprep.subr.mxu0 0.0
        %779 = vmatpush1.msra.mxu0 0.0
        %780 = vmatprep.subr.mxu0 0.0
        %781 = vmatpush1.msra.mxu0 0.0
        %782 = vmatprep.subr.mxu0 0.0
        %783 = vmatpush1.msra.mxu0 0.0
        %784 = vmatprep.subr.mxu0 0.0
        %785 = vmatpush1.msra.mxu0 0.0
        %786 = vmatprep.subr.mxu0 0.0
        %787 = vmatpush1.msra.mxu0 0.0
        %788 = vmatprep.subr.mxu0 0.0
        %789 = vmatpush1.msra.mxu0 0.0
        %790 = vmatprep.subr.mxu0 0.0
        %791 = vmatpush1.msra.mxu0 0.0
        %792 = vmatprep.subr.mxu0 0.0
        %793 = vmatpush1.msra.mxu0 0.0
        %794 = vmatprep.subr.mxu0 0.0
        %795 = vmatpush1.msra.mxu0 0.0
        %796 = vmatprep.subr.mxu0 0.0
        %797 = vmatpush1.msra.mxu0 0.0
        %798 = vmatprep.subr.mxu0 0.0
        %799 = vmatpush1.msra.mxu0 0.0
        %800 = vmatprep.subr.mxu0 0.0
        %801 = vmatpush1.msra.mxu0 0.0
        %802 = vmatprep.subr.mxu0 0.0
        %803 = vmatpush1.msra.mxu0 0.0
        %804 = vmatprep.subr.mxu0 0.0
        %805 = vmatpush1.msra.mxu0 0.0
        %806 = vmatprep.subr.mxu0 0.0
        %807 = vmatpush1.msra.mxu0 0.0
        %808 = vmatprep.subr.mxu0 0.0
        %809 = vmatpush1.msra.mxu0 0.0
        %810 = vmatprep.subr.mxu0 0.0
        %811 = vmatpush1.msra.mxu0 0.0
        %812 = vmatprep.subr.mxu0 0.0
        %813 = vmatpush1.msra.mxu0 0.0
        %814 = vmatprep.subr.mxu0 0.0
        %815 = vmatpush1.msra.mxu0 0.0
        %816 = vmatprep.subr.mxu0 0.0
        %817 = vmatpush1.msra.mxu0 0.0
        %818 = vmatprep.subr.mxu0 0.0
        %819 = vmatpush1.msra.mxu0 0.0
        %820 = vmatprep.subr.mxu0 0.0
        %821 = vmatpush1.msra.mxu0 0.0
        %822 = vmatprep.subr.mxu0 0.0
        %823 = vmatpush1.msra.mxu0 0.0
        %824 = vmatprep.subr.mxu0 0.0
        %825 = vmatpush1.msra.mxu0 0.0
        %826 = vmatprep.subr.mxu0 0.0
        %827 = vmatpush1.msra.mxu0 0.0
        %828 = vmatprep.subr.mxu0 0.0
        %829 = vmatpush1.msra.mxu0 0.0
        %830 = vmatprep.subr.mxu0 0.0
        %831 = vmatpush1.msra.mxu0 0.0
        %832 = vmatprep.subr.mxu0 0.0
        %833 = vmatpush1.msra.mxu0 0.0
        %834 = vmatprep.mubr.f32.mxu0 0.0
        %835 = vmatmul.mubr.f32.gmra.mrb[0].mxu0 %v768
        %v836 = vpop.f32.mrb[0].mxu0
        %v837 = vadd.f32 0.0, %v836
        %v838 = vpop.f32.mrb[0].mxu0
        %839 = vdwg.mxu0
        %v841 = vsel %vm409, %v755, 0
        %843 = vmatprep.subr.mxu0 0.0
        %844 = vmatpush1.msra.mxu0 %v406
        %845 = vmatprep.subr.mxu0 0.0
        %846 = vmatpush1.msra.mxu0 0.0
        %847 = vmatprep.subr.mxu0 0.0
        %848 = vmatpush1.msra.mxu0 0.0
        %849 = vmatprep.subr.mxu0 0.0
        %850 = vmatpush1.msra.mxu0 0.0
        %851 = vmatprep.subr.mxu0 0.0
        %852 = vmatpush1.msra.mxu0 0.0
        %853 = vmatprep.subr.mxu0 0.0
        %854 = vmatpush1.msra.mxu0 0.0
        %855 = vmatprep.subr.mxu0 0.0
        %856 = vmatpush1.msra.mxu0 0.0
        %857 = vmatprep.subr.mxu0 0.0
        %858 = vmatpush1.msra.mxu0 0.0
        %859 = vmatprep.subr.mxu0 0.0
        %860 = vmatpush1.msra.mxu0 0.0
        %861 = vmatprep.subr.mxu0 0.0
        %862 = vmatpush1.msra.mxu0 0.0
        %863 = vmatprep.subr.mxu0 0.0
        %864 = vmatpush1.msra.mxu0 0.0
        %865 = vmatprep.subr.mxu0 0.0
        %866 = vmatpush1.msra.mxu0 0.0
        %867 = vmatprep.subr.mxu0 0.0
        %868 = vmatpush1.msra.mxu0 0.0
        %869 = vmatprep.subr.mxu0 0.0
        %870 = vmatpush1.msra.mxu0 0.0
        %871 = vmatprep.subr.mxu0 0.0
        %872 = vmatpush1.msra.mxu0 0.0
        %873 = vmatprep.subr.mxu0 0.0
        %874 = vmatpush1.msra.mxu0 0.0
        %875 = vmatprep.subr.mxu0 0.0
        %876 = vmatpush1.msra.mxu0 0.0
        %877 = vmatprep.subr.mxu0 0.0
        %878 = vmatpush1.msra.mxu0 0.0
        %879 = vmatprep.subr.mxu0 0.0
        %880 = vmatpush1.msra.mxu0 0.0
        %881 = vmatprep.subr.mxu0 0.0
        %882 = vmatpush1.msra.mxu0 0.0
        %883 = vmatprep.subr.mxu0 0.0
        %884 = vmatpush1.msra.mxu0 0.0
        %885 = vmatprep.subr.mxu0 0.0
        %886 = vmatpush1.msra.mxu0 0.0
        %887 = vmatprep.subr.mxu0 0.0
        %888 = vmatpush1.msra.mxu0 0.0
        %889 = vmatprep.subr.mxu0 0.0
        %890 = vmatpush1.msra.mxu0 0.0
        %891 = vmatprep.subr.mxu0 0.0
        %892 = vmatpush1.msra.mxu0 0.0
        %893 = vmatprep.subr.mxu0 0.0
        %894 = vmatpush1.msra.mxu0 0.0
        %895 = vmatprep.subr.mxu0 0.0
        %896 = vmatpush1.msra.mxu0 0.0
        %897 = vmatprep.subr.mxu0 0.0
        %898 = vmatpush1.msra.mxu0 0.0
        %899 = vmatprep.subr.mxu0 0.0
        %900 = vmatpush1.msra.mxu0 0.0
        %901 = vmatprep.subr.mxu0 0.0
        %902 = vmatpush1.msra.mxu0 0.0
        %903 = vmatprep.subr.mxu0 0.0
        %904 = vmatpush1.msra.mxu0 0.0
        %905 = vmatprep.subr.mxu0 0.0
        %906 = vmatpush1.msra.mxu0 0.0
        %907 = vmatprep.mubr.f32.mxu0 0.0
        %908 = vmatmul.mubr.f32.gmra.mrb[0].mxu0 %v841
        %v909 = vpop.f32.mrb[0].mxu0
        %v910 = vadd.f32 0.0, %v909
        %v911 = vpop.f32.mrb[0].mxu0
        %912 = vdwg.mxu0
        %v914 = vsel %vm409, %v756, 0
        %916 = vmatprep.subr.mxu0 0.0
        %917 = vmatpush1.msra.mxu0 %v407
        %918 = vmatprep.subr.mxu0 0.0
        %919 = vmatpush1.msra.mxu0 0.0
        %920 = vmatprep.subr.mxu0 0.0
        %921 = vmatpush1.msra.mxu0 0.0
        %922 = vmatprep.subr.mxu0 0.0
        %923 = vmatpush1.msra.mxu0 0.0
        %924 = vmatprep.subr.mxu0 0.0
        %925 = vmatpush1.msra.mxu0 0.0
        %926 = vmatprep.subr.mxu0 0.0
        %927 = vmatpush1.msra.mxu0 0.0
        %928 = vmatprep.subr.mxu0 0.0
        %929 = vmatpush1.msra.mxu0 0.0
        %930 = vmatprep.subr.mxu0 0.0
        %931 = vmatpush1.msra.mxu0 0.0
        %932 = vmatprep.subr.mxu0 0.0
        %933 = vmatpush1.msra.mxu0 0.0
        %934 = vmatprep.subr.mxu0 0.0
        %935 = vmatpush1.msra.mxu0 0.0
        %936 = vmatprep.subr.mxu0 0.0
        %937 = vmatpush1.msra.mxu0 0.0
        %938 = vmatprep.subr.mxu0 0.0
        %939 = vmatpush1.msra.mxu0 0.0
        %940 = vmatprep.subr.mxu0 0.0
        %941 = vmatpush1.msra.mxu0 0.0
        %942 = vmatprep.subr.mxu0 0.0
        %943 = vmatpush1.msra.mxu0 0.0
        %944 = vmatprep.subr.mxu0 0.0
        %945 = vmatpush1.msra.mxu0 0.0
        %946 = vmatprep.subr.mxu0 0.0
        %947 = vmatpush1.msra.mxu0 0.0
        %948 = vmatprep.subr.mxu0 0.0
        %949 = vmatpush1.msra.mxu0 0.0
        %950 = vmatprep.subr.mxu0 0.0
        %951 = vmatpush1.msra.mxu0 0.0
        %952 = vmatprep.subr.mxu0 0.0
        %953 = vmatpush1.msra.mxu0 0.0
        %954 = vmatprep.subr.mxu0 0.0
        %955 = vmatpush1.msra.mxu0 0.0
        %956 = vmatprep.subr.mxu0 0.0
        %957 = vmatpush1.msra.mxu0 0.0
        %958 = vmatprep.subr.mxu0 0.0
        %959 = vmatpush1.msra.mxu0 0.0
        %960 = vmatprep.subr.mxu0 0.0
        %961 = vmatpush1.msra.mxu0 0.0
        %962 = vmatprep.subr.mxu0 0.0
        %963 = vmatpush1.msra.mxu0 0.0
        %964 = vmatprep.subr.mxu0 0.0
        %965 = vmatpush1.msra.mxu0 0.0
        %966 = vmatprep.subr.mxu0 0.0
        %967 = vmatpush1.msra.mxu0 0.0
        %968 = vmatprep.subr.mxu0 0.0
        %969 = vmatpush1.msra.mxu0 0.0
        %970 = vmatprep.subr.mxu0 0.0
        %971 = vmatpush1.msra.mxu0 0.0
        %972 = vmatprep.subr.mxu0 0.0
        %973 = vmatpush1.msra.mxu0 0.0
        %974 = vmatprep.subr.mxu0 0.0
        %975 = vmatpush1.msra.mxu0 0.0
        %976 = vmatprep.subr.mxu0 0.0
        %977 = vmatpush1.msra.mxu0 0.0
        %978 = vmatprep.subr.mxu0 0.0
        %979 = vmatpush1.msra.mxu0 0.0
        %980 = vmatprep.mubr.f32.mxu0 0.0
        %981 = vmatmul.mubr.f32.gmra.mrb[0].mxu0 %v914
        %v982 = vpop.f32.mrb[0].mxu0
        %v983 = vadd.f32 0.0, %v982
        %v984 = vpop.f32.mrb[0].mxu0
        %985 = vdwg.mxu0
        %v987 = vsel %vm409, %v757, 0
        %989 = vmatprep.subr.mxu0 0.0
        %990 = vmatpush1.msra.mxu0 %v408
        %991 = vmatprep.subr.mxu0 0.0
        %992 = vmatpush1.msra.mxu0 0.0
        %993 = vmatprep.subr.mxu0 0.0
        %994 = vmatpush1.msra.mxu0 0.0
        %995 = vmatprep.subr.mxu0 0.0
        %996 = vmatpush1.msra.mxu0 0.0
        %997 = vmatprep.subr.mxu0 0.0
        %998 = vmatpush1.msra.mxu0 0.0
        %999 = vmatprep.subr.mxu0 0.0
        %1000 = vmatpush1.msra.mxu0 0.0
        %1001 = vmatprep.subr.mxu0 0.0
        %1002 = vmatpush1.msra.mxu0 0.0
        %1003 = vmatprep.subr.mxu0 0.0
        %1004 = vmatpush1.msra.mxu0 0.0
        %1005 = vmatprep.subr.mxu0 0.0
        %1006 = vmatpush1.msra.mxu0 0.0
        %1007 = vmatprep.subr.mxu0 0.0
        %1008 = vmatpush1.msra.mxu0 0.0
        %1009 = vmatprep.subr.mxu0 0.0
        %1010 = vmatpush1.msra.mxu0 0.0
        %1011 = vmatprep.subr.mxu0 0.0
        %1012 = vmatpush1.msra.mxu0 0.0
        %1013 = vmatprep.subr.mxu0 0.0
        %1014 = vmatpush1.msra.mxu0 0.0
        %1015 = vmatprep.subr.mxu0 0.0
        %1016 = vmatpush1.msra.mxu0 0.0
        %1017 = vmatprep.subr.mxu0 0.0
        %1018 = vmatpush1.msra.mxu0 0.0
        %1019 = vmatprep.subr.mxu0 0.0
        %1020 = vmatpush1.msra.mxu0 0.0
        %1021 = vmatprep.subr.mxu0 0.0
        %1022 = vmatpush1.msra.mxu0 0.0
        %1023 = vmatprep.subr.mxu0 0.0
        %1024 = vmatpush1.msra.mxu0 0.0
        %1025 = vmatprep.subr.mxu0 0.0
        %1026 = vmatpush1.msra.mxu0 0.0
        %1027 = vmatprep.subr.mxu0 0.0
        %1028 = vmatpush1.msra.mxu0 0.0
        %1029 = vmatprep.subr.mxu0 0.0
        %1030 = vmatpush1.msra.mxu0 0.0
        %1031 = vmatprep.subr.mxu0 0.0
        %1032 = vmatpush1.msra.mxu0 0.0
        %1033 = vmatprep.subr.mxu0 0.0
        %1034 = vmatpush1.msra.mxu0 0.0
        %1035 = vmatprep.subr.mxu0 0.0
        %1036 = vmatpush1.msra.mxu0 0.0
        %1037 = vmatprep.subr.mxu0 0.0
        %1038 = vmatpush1.msra.mxu0 0.0
        %1039 = vmatprep.subr.mxu0 0.0
        %1040 = vmatpush1.msra.mxu0 0.0
        %1041 = vmatprep.subr.mxu0 0.0
        %1042 = vmatpush1.msra.mxu0 0.0
        %1043 = vmatprep.subr.mxu0 0.0
        %1044 = vmatpush1.msra.mxu0 0.0
        %1045 = vmatprep.subr.mxu0 0.0
        %1046 = vmatpush1.msra.mxu0 0.0
        %1047 = vmatprep.subr.mxu0 0.0
        %1048 = vmatpush1.msra.mxu0 0.0
        %1049 = vmatprep.subr.mxu0 0.0
        %1050 = vmatpush1.msra.mxu0 0.0
        %1051 = vmatprep.subr.mxu0 0.0
        %1052 = vmatpush1.msra.mxu0 0.0
        %1053 = vmatprep.mubr.f32.mxu0 0.0
        %1054 = vmatmul.mubr.f32.gmra.mrb[0].mxu0 %v987
        %v1055 = vpop.f32.mrb[0].mxu0
        %v1056 = vadd.f32 0.0, %v1055
        %v1057 = vpop.f32.mrb[0].mxu0
        %1058 = vdwg.mxu0
        %v1059 = vld [vmem:[%s358] sm:$0xff]
        %v1060 = vld [vmem:[#allocation8] sm:$0xff]
        %v1062 = vsel %vm409, %v837, 0
        %1064 = vmatprep.subr.mxu0 0.0
        %1065 = vmatpush1.msra.mxu0 %v1060
        %1066 = vmatprep.subr.mxu0 0.0
        %1067 = vmatpush1.msra.mxu0 0.0
        %1068 = vmatprep.subr.mxu0 0.0
        %1069 = vmatpush1.msra.mxu0 0.0
        %1070 = vmatprep.subr.mxu0 0.0
        %1071 = vmatpush1.msra.mxu0 0.0
        %1072 = vmatprep.subr.mxu0 0.0
        %1073 = vmatpush1.msra.mxu0 0.0
        %1074 = vmatprep.subr.mxu0 0.0
        %1075 = vmatpush1.msra.mxu0 0.0
        %1076 = vmatprep.subr.mxu0 0.0
        %1077 = vmatpush1.msra.mxu0 0.0
        %1078 = vmatprep.subr.mxu0 0.0
        %1079 = vmatpush1.msra.mxu0 0.0
        %1080 = vmatprep.subr.mxu0 0.0
        %1081 = vmatpush1.msra.mxu0 0.0
        %1082 = vmatprep.subr.mxu0 0.0
        %1083 = vmatpush1.msra.mxu0 0.0
        %1084 = vmatprep.subr.mxu0 0.0
        %1085 = vmatpush1.msra.mxu0 0.0
        %1086 = vmatprep.subr.mxu0 0.0
        %1087 = vmatpush1.msra.mxu0 0.0
        %1088 = vmatprep.subr.mxu0 0.0
        %1089 = vmatpush1.msra.mxu0 0.0
        %1090 = vmatprep.subr.mxu0 0.0
        %1091 = vmatpush1.msra.mxu0 0.0
        %1092 = vmatprep.subr.mxu0 0.0
        %1093 = vmatpush1.msra.mxu0 0.0
        %1094 = vmatprep.subr.mxu0 0.0
        %1095 = vmatpush1.msra.mxu0 0.0
        %1096 = vmatprep.subr.mxu0 0.0
        %1097 = vmatpush1.msra.mxu0 0.0
        %1098 = vmatprep.subr.mxu0 0.0
        %1099 = vmatpush1.msra.mxu0 0.0
        %1100 = vmatprep.subr.mxu0 0.0
        %1101 = vmatpush1.msra.mxu0 0.0
        %1102 = vmatprep.subr.mxu0 0.0
        %1103 = vmatpush1.msra.mxu0 0.0
        %1104 = vmatprep.subr.mxu0 0.0
        %1105 = vmatpush1.msra.mxu0 0.0
        %1106 = vmatprep.subr.mxu0 0.0
        %1107 = vmatpush1.msra.mxu0 0.0
        %1108 = vmatprep.subr.mxu0 0.0
        %1109 = vmatpush1.msra.mxu0 0.0
        %1110 = vmatprep.subr.mxu0 0.0
        %1111 = vmatpush1.msra.mxu0 0.0
        %1112 = vmatprep.subr.mxu0 0.0
        %1113 = vmatpush1.msra.mxu0 0.0
        %1114 = vmatprep.subr.mxu0 0.0
        %1115 = vmatpush1.msra.mxu0 0.0
        %1116 = vmatprep.subr.mxu0 0.0
        %1117 = vmatpush1.msra.mxu0 0.0
        %1118 = vmatprep.subr.mxu0 0.0
        %1119 = vmatpush1.msra.mxu0 0.0
        %1120 = vmatprep.subr.mxu0 0.0
        %1121 = vmatpush1.msra.mxu0 0.0
        %1122 = vmatprep.subr.mxu0 0.0
        %1123 = vmatpush1.msra.mxu0 0.0
        %1124 = vmatprep.subr.mxu0 0.0
        %1125 = vmatpush1.msra.mxu0 0.0
        %1126 = vmatprep.subr.mxu0 0.0
        %1127 = vmatpush1.msra.mxu0 0.0
        %1128 = vmatprep.mubr.f32.mxu0 0.0
        %1129 = vmatmul.mubr.f32.gmra.mrb[0].mxu0 %v1062
        %v1130 = vpop.f32.mrb[0].mxu0
        %v1131 = vadd.f32 0.0, %v1130
        %v1132 = vpop.f32.mrb[0].mxu0
        %1133 = vdwg.mxu0
        %v1134 = vadd.f32 %v1059, %v1131
        %s1135 = scalar_lea.vmem [#allocation8], 8
        %v1136 = vld [vmem:[%s1135] sm:$0xff]
        %v1138 = vsel %vm409, %v910, 0
        %1140 = vmatprep.subr.mxu0 0.0
        %1141 = vmatpush1.msra.mxu0 %v1136
        %1142 = vmatprep.subr.mxu0 0.0
        %1143 = vmatpush1.msra.mxu0 0.0
        %1144 = vmatprep.subr.mxu0 0.0
        %1145 = vmatpush1.msra.mxu0 0.0
        %1146 = vmatprep.subr.mxu0 0.0
        %1147 = vmatpush1.msra.mxu0 0.0
        %1148 = vmatprep.subr.mxu0 0.0
        %1149 = vmatpush1.msra.mxu0 0.0
        %1150 = vmatprep.subr.mxu0 0.0
        %1151 = vmatpush1.msra.mxu0 0.0
        %1152 = vmatprep.subr.mxu0 0.0
        %1153 = vmatpush1.msra.mxu0 0.0
        %1154 = vmatprep.subr.mxu0 0.0
        %1155 = vmatpush1.msra.mxu0 0.0
        %1156 = vmatprep.subr.mxu0 0.0
        %1157 = vmatpush1.msra.mxu0 0.0
        %1158 = vmatprep.subr.mxu0 0.0
        %1159 = vmatpush1.msra.mxu0 0.0
        %1160 = vmatprep.subr.mxu0 0.0
        %1161 = vmatpush1.msra.mxu0 0.0
        %1162 = vmatprep.subr.mxu0 0.0
        %1163 = vmatpush1.msra.mxu0 0.0
        %1164 = vmatprep.subr.mxu0 0.0
        %1165 = vmatpush1.msra.mxu0 0.0
        %1166 = vmatprep.subr.mxu0 0.0
        %1167 = vmatpush1.msra.mxu0 0.0
        %1168 = vmatprep.subr.mxu0 0.0
        %1169 = vmatpush1.msra.mxu0 0.0
        %1170 = vmatprep.subr.mxu0 0.0
        %1171 = vmatpush1.msra.mxu0 0.0
        %1172 = vmatprep.subr.mxu0 0.0
        %1173 = vmatpush1.msra.mxu0 0.0
        %1174 = vmatprep.subr.mxu0 0.0
        %1175 = vmatpush1.msra.mxu0 0.0
        %1176 = vmatprep.subr.mxu0 0.0
        %1177 = vmatpush1.msra.mxu0 0.0
        %1178 = vmatprep.subr.mxu0 0.0
        %1179 = vmatpush1.msra.mxu0 0.0
        %1180 = vmatprep.subr.mxu0 0.0
        %1181 = vmatpush1.msra.mxu0 0.0
        %1182 = vmatprep.subr.mxu0 0.0
        %1183 = vmatpush1.msra.mxu0 0.0
        %1184 = vmatprep.subr.mxu0 0.0
        %1185 = vmatpush1.msra.mxu0 0.0
        %1186 = vmatprep.subr.mxu0 0.0
        %1187 = vmatpush1.msra.mxu0 0.0
        %1188 = vmatprep.subr.mxu0 0.0
        %1189 = vmatpush1.msra.mxu0 0.0
        %1190 = vmatprep.subr.mxu0 0.0
        %1191 = vmatpush1.msra.mxu0 0.0
        %1192 = vmatprep.subr.mxu0 0.0
        %1193 = vmatpush1.msra.mxu0 0.0
        %1194 = vmatprep.subr.mxu0 0.0
        %1195 = vmatpush1.msra.mxu0 0.0
        %1196 = vmatprep.subr.mxu0 0.0
        %1197 = vmatpush1.msra.mxu0 0.0
        %1198 = vmatprep.subr.mxu0 0.0
        %1199 = vmatpush1.msra.mxu0 0.0
        %1200 = vmatprep.subr.mxu0 0.0
        %1201 = vmatpush1.msra.mxu0 0.0
        %1202 = vmatprep.subr.mxu0 0.0
        %1203 = vmatpush1.msra.mxu0 0.0
        %1204 = vmatprep.mubr.f32.mxu0 0.0
        %1205 = vmatmul.mubr.f32.gmra.mrb[0].mxu0 %v1138
        %v1206 = vpop.f32.mrb[0].mxu0
        %v1207 = vadd.f32 0.0, %v1206
        %v1208 = vpop.f32.mrb[0].mxu0
        %1209 = vdwg.mxu0
        %v1210 = vadd.f32 %v1134, %v1207
        %s1211 = scalar_lea.vmem [#allocation8], 16
        %v1212 = vld [vmem:[%s1211] sm:$0xff]
        %v1214 = vsel %vm409, %v983, 0
        %1216 = vmatprep.subr.mxu0 0.0
        %1217 = vmatpush1.msra.mxu0 %v1212
        %1218 = vmatprep.subr.mxu0 0.0
        %1219 = vmatpush1.msra.mxu0 0.0
        %1220 = vmatprep.subr.mxu0 0.0
        %1221 = vmatpush1.msra.mxu0 0.0
        %1222 = vmatprep.subr.mxu0 0.0
        %1223 = vmatpush1.msra.mxu0 0.0
        %1224 = vmatprep.subr.mxu0 0.0
        %1225 = vmatpush1.msra.mxu0 0.0
        %1226 = vmatprep.subr.mxu0 0.0
        %1227 = vmatpush1.msra.mxu0 0.0
        %1228 = vmatprep.subr.mxu0 0.0
        %1229 = vmatpush1.msra.mxu0 0.0
        %1230 = vmatprep.subr.mxu0 0.0
        %1231 = vmatpush1.msra.mxu0 0.0
        %1232 = vmatprep.subr.mxu0 0.0
        %1233 = vmatpush1.msra.mxu0 0.0
        %1234 = vmatprep.subr.mxu0 0.0
        %1235 = vmatpush1.msra.mxu0 0.0
        %1236 = vmatprep.subr.mxu0 0.0
        %1237 = vmatpush1.msra.mxu0 0.0
        %1238 = vmatprep.subr.mxu0 0.0
        %1239 = vmatpush1.msra.mxu0 0.0
        %1240 = vmatprep.subr.mxu0 0.0
        %1241 = vmatpush1.msra.mxu0 0.0
        %1242 = vmatprep.subr.mxu0 0.0
        %1243 = vmatpush1.msra.mxu0 0.0
        %1244 = vmatprep.subr.mxu0 0.0
        %1245 = vmatpush1.msra.mxu0 0.0
        %1246 = vmatprep.subr.mxu0 0.0
        %1247 = vmatpush1.msra.mxu0 0.0
        %1248 = vmatprep.subr.mxu0 0.0
        %1249 = vmatpush1.msra.mxu0 0.0
        %1250 = vmatprep.subr.mxu0 0.0
        %1251 = vmatpush1.msra.mxu0 0.0
        %1252 = vmatprep.subr.mxu0 0.0
        %1253 = vmatpush1.msra.mxu0 0.0
        %1254 = vmatprep.subr.mxu0 0.0
        %1255 = vmatpush1.msra.mxu0 0.0
        %1256 = vmatprep.subr.mxu0 0.0
        %1257 = vmatpush1.msra.mxu0 0.0
        %1258 = vmatprep.subr.mxu0 0.0
        %1259 = vmatpush1.msra.mxu0 0.0
        %1260 = vmatprep.subr.mxu0 0.0
        %1261 = vmatpush1.msra.mxu0 0.0
        %1262 = vmatprep.subr.mxu0 0.0
        %1263 = vmatpush1.msra.mxu0 0.0
        %1264 = vmatprep.subr.mxu0 0.0
        %1265 = vmatpush1.msra.mxu0 0.0
        %1266 = vmatprep.subr.mxu0 0.0
        %1267 = vmatpush1.msra.mxu0 0.0
        %1268 = vmatprep.subr.mxu0 0.0
        %1269 = vmatpush1.msra.mxu0 0.0
        %1270 = vmatprep.subr.mxu0 0.0
        %1271 = vmatpush1.msra.mxu0 0.0
        %1272 = vmatprep.subr.mxu0 0.0
        %1273 = vmatpush1.msra.mxu0 0.0
        %1274 = vmatprep.subr.mxu0 0.0
        %1275 = vmatpush1.msra.mxu0 0.0
        %1276 = vmatprep.subr.mxu0 0.0
        %1277 = vmatpush1.msra.mxu0 0.0
        %1278 = vmatprep.subr.mxu0 0.0
        %1279 = vmatpush1.msra.mxu0 0.0
        %1280 = vmatprep.mubr.f32.mxu0 0.0
        %1281 = vmatmul.mubr.f32.gmra.mrb[0].mxu0 %v1214
        %v1282 = vpop.f32.mrb[0].mxu0
        %v1283 = vadd.f32 0.0, %v1282
        %v1284 = vpop.f32.mrb[0].mxu0
        %1285 = vdwg.mxu0
        %v1286 = vadd.f32 %v1210, %v1283
        %s1287 = scalar_lea.vmem [#allocation8], 24
        %v1288 = vld [vmem:[%s1287] sm:$0xff]
        %v1290 = vsel %vm409, %v1056, 0
        %1292 = vmatprep.subr.mxu0 0.0
        %1293 = vmatpush1.msra.mxu0 %v1288
        %1294 = vmatprep.subr.mxu0 0.0
        %1295 = vmatpush1.msra.mxu0 0.0
        %1296 = vmatprep.subr.mxu0 0.0
        %1297 = vmatpush1.msra.mxu0 0.0
        %1298 = vmatprep.subr.mxu0 0.0
        %1299 = vmatpush1.msra.mxu0 0.0
        %1300 = vmatprep.subr.mxu0 0.0
        %1301 = vmatpush1.msra.mxu0 0.0
        %1302 = vmatprep.subr.mxu0 0.0
        %1303 = vmatpush1.msra.mxu0 0.0
        %1304 = vmatprep.subr.mxu0 0.0
        %1305 = vmatpush1.msra.mxu0 0.0
        %1306 = vmatprep.subr.mxu0 0.0
        %1307 = vmatpush1.msra.mxu0 0.0
        %1308 = vmatprep.subr.mxu0 0.0
        %1309 = vmatpush1.msra.mxu0 0.0
        %1310 = vmatprep.subr.mxu0 0.0
        %1311 = vmatpush1.msra.mxu0 0.0
        %1312 = vmatprep.subr.mxu0 0.0
        %1313 = vmatpush1.msra.mxu0 0.0
        %1314 = vmatprep.subr.mxu0 0.0
        %1315 = vmatpush1.msra.mxu0 0.0
        %1316 = vmatprep.subr.mxu0 0.0
        %1317 = vmatpush1.msra.mxu0 0.0
        %1318 = vmatprep.subr.mxu0 0.0
        %1319 = vmatpush1.msra.mxu0 0.0
        %1320 = vmatprep.subr.mxu0 0.0
        %1321 = vmatpush1.msra.mxu0 0.0
        %1322 = vmatprep.subr.mxu0 0.0
        %1323 = vmatpush1.msra.mxu0 0.0
        %1324 = vmatprep.subr.mxu0 0.0
        %1325 = vmatpush1.msra.mxu0 0.0
        %1326 = vmatprep.subr.mxu0 0.0
        %1327 = vmatpush1.msra.mxu0 0.0
        %1328 = vmatprep.subr.mxu0 0.0
        %1329 = vmatpush1.msra.mxu0 0.0
        %1330 = vmatprep.subr.mxu0 0.0
        %1331 = vmatpush1.msra.mxu0 0.0
        %1332 = vmatprep.subr.mxu0 0.0
        %1333 = vmatpush1.msra.mxu0 0.0
        %1334 = vmatprep.subr.mxu0 0.0
        %1335 = vmatpush1.msra.mxu0 0.0
        %1336 = vmatprep.subr.mxu0 0.0
        %1337 = vmatpush1.msra.mxu0 0.0
        %1338 = vmatprep.subr.mxu0 0.0
        %1339 = vmatpush1.msra.mxu0 0.0
        %1340 = vmatprep.subr.mxu0 0.0
        %1341 = vmatpush1.msra.mxu0 0.0
        %1342 = vmatprep.subr.mxu0 0.0
        %1343 = vmatpush1.msra.mxu0 0.0
        %1344 = vmatprep.subr.mxu0 0.0
        %1345 = vmatpush1.msra.mxu0 0.0
        %1346 = vmatprep.subr.mxu0 0.0
        %1347 = vmatpush1.msra.mxu0 0.0
        %1348 = vmatprep.subr.mxu0 0.0
        %1349 = vmatpush1.msra.mxu0 0.0
        %1350 = vmatprep.subr.mxu0 0.0
        %1351 = vmatpush1.msra.mxu0 0.0
        %1352 = vmatprep.subr.mxu0 0.0
        %1353 = vmatpush1.msra.mxu0 0.0
        %1354 = vmatprep.subr.mxu0 0.0
        %1355 = vmatpush1.msra.mxu0 0.0
        %1356 = vmatprep.mubr.f32.mxu0 0.0
        %1357 = vmatmul.mubr.f32.gmra.mrb[0].mxu0 %v1290
        %v1358 = vpop.f32.mrb[0].mxu0
        %v1359 = vadd.f32 0.0, %v1358
        %v1360 = vpop.f32.mrb[0].mxu0
        %1361 = vdwg.mxu0
        %v1362 = vadd.f32 %v1286, %v1359
        %vm1363 = vcmask 261120
        %1364 = vst.msk [vmem:[%s389] sm:$0xff] %vm1363, %v1362
        %s1365 = sand.u32 %s180, 1
        %s1366 = scalar_lea.sflag [#allocation4], %s1365
        %s1367 = sand.u32 %s180, 1
        %s1368 = smul.addr %s1367, 8
        %s1369 = scalar_lea.vmem [#allocation11], %s1368
        %s1370 = sand.u32 %s208, 1
        %s1371 = scalar_lea.sflag [#allocation13], %s1370
        %s1372 = sand.u32 %s208, 1
        %s1373 = smul.addr %s1372, 16
        %s1374 = scalar_lea.vmem [#allocation12], %s1373
        // Predicated region
        $region61: #{tpu_custom_call.1} parent=39 // pred_check
          %p1375 = pneg %p190
        $region62: #{tpu_custom_call.1} parent=39 // pred_check_branch
          %1377 = sbr.rel (%p1375) target = $region64
        $region63: #{tpu_custom_call.1} parent=39 // pred_region
          %s1379 = ssub.s32 128, 128
          %1380 = vsyncadd %s1366, %s1379
          %s1381 = sadd.s32 %s34, %s33
          %s1382 = smul.addr %s1381, 128
          %s1383 = scalar_lea.hbm %s5, %s1382
          %s1385 = sshll.u32 %s1369, 4
          %s1386 = int_to_ptr.vmem [resolvable:$true] %s1385
          %1388 = dma.vmem_to_hbm [thread:$0]  %s1386, 128, %s1383, %s1366
        $region64: #{tpu_custom_call.1} parent=39 // pred_fallthru
          _
        // Predicated region
        $region65: #{tpu_custom_call.1} parent=39 // pred_check
          %p1389 = pneg %p218
        $region66: #{tpu_custom_call.1} parent=39 // pred_check_branch
          %1391 = sbr.rel (%p1389) target = $region68
        $region67: #{tpu_custom_call.1} parent=39 // pred_region
          %s1393 = ssub.s32 256, 256
          %1394 = vsyncadd %s1371, %s1393
          %s1395 = smul.addr %s33, 4
          %s1396 = sadd.s32 %s34, %s1395
          %s1397 = smul.addr %s1396, 64
          %s1398 = scalar_lea.hbm %s6, %s1397
          %s1399 = sshll.u32 %s1374, 4
          %s1400 = int_to_ptr.vmem [resolvable:$true] %s1399
          %1405 = dma.vmem_to_hbm [thread:$0]  %s1400, 256, %s1398, %s1371, 64, 64, 4
        $region68: #{tpu_custom_call.1} parent=39 // pred_fallthru
          _
      $region40: #{tpu_custom_call.1} parent=5 // pred_fallthru
        _
      %p1406 = scmp.le.s32.totalorder 2, %s24
      // Predicated region
      $region69: #{tpu_custom_call.1} parent=5 // pred_check
        %p1407 = pneg %p1406
      $region70: #{tpu_custom_call.1} parent=5 // pred_check_branch
        %1409 = sbr.rel (%p1407) target = $region72
      $region71: #{tpu_custom_call.1} parent=5 // pred_region
        %s1410 = ssub.s32 %s24, 2
        // Predicated region
        $region73: #{tpu_custom_call.1} parent=71 // pred_check
          %p1411 = pneg %p196
        $region74: #{tpu_custom_call.1} parent=71 // pred_check_branch
          %1413 = sbr.rel (%p1411) target = $region76
        $region75: #{tpu_custom_call.1} parent=71 // pred_region
          %s1414 = sand.u32 %s181, 1
          %s1415 = scalar_lea.sflag [#allocation4], %s1414
          %s1416 = sand.u32 %s181, 1
          %s1417 = smul.addr %s1416, 8
          %s1418 = scalar_lea.vmem [#allocation11], %s1417
          %1419 = dma.done %s1415, 128
        $region76: #{tpu_custom_call.1} parent=71 // pred_fallthru
          _
        // Predicated region
        $region77: #{tpu_custom_call.1} parent=71 // pred_check
          %p1420 = pneg %p224
        $region78: #{tpu_custom_call.1} parent=71 // pred_check_branch
          %1422 = sbr.rel (%p1420) target = $region80
        $region79: #{tpu_custom_call.1} parent=71 // pred_region
          %s1423 = sand.u32 %s209, 1
          %s1424 = scalar_lea.sflag [#allocation13], %s1423
          %s1425 = sand.u32 %s209, 1
          %s1426 = smul.addr %s1425, 16
          %s1427 = scalar_lea.vmem [#allocation12], %s1426
          %1428 = dma.done %s1424, 256
        $region80: #{tpu_custom_call.1} parent=71 // pred_fallthru
          _
      $region72: #{tpu_custom_call.1} parent=5 // pred_fallthru
        _
    $region6: #{tpu_custom_call.1} parent=1 // loop_footer
      %s28 = sadd.s32 1, %s24
    $region7: #{tpu_custom_call.1} parent=1 // loop_footer_branch
      %23 = sbr.rel target = $region3
    $region8: #{tpu_custom_call.1} parent=1 // loop_exit
      _
    %1429 = vsyncpa [#allocation3], 1
    %s1430 = scalar_lea.sflag [#allocation3], 1
    %1431 = vsyncpa %s1430, 1
    %1432 = vsyncpa [#allocation6], 1
    %1433 = vsyncpa [#allocation9], 1
    %1434 = vsyncpa [#allocation4], 1
    %s1435 = scalar_lea.sflag [#allocation4], 1
    %1436 = vsyncpa %s1435, 1
    %1437 = vsyncpa [#allocation13], 1
    %s1438 = scalar_lea.sflag [#allocation13], 1
    %1439 = vsyncpa %s1438, 1

// kernel: tpu_custom_call.1
$region0: #{tpu_custom_call.1}
  #allocation0 [shape = 'u32[]', space=smem, size = 0x4, offset = 0x4, fixed_abs, tag = 'smem constant byte address 0x4 - core index']
  #allocation1 [shape = 'u32[144,128]{1,0:T(1,128)}', space=vmem, size = 0x12000, scoped, tag = 'internal scratch']
  %s0 = inlined_call_operand.hbm [shape: f32[2,4,8,8], index: 0, kind: input, shape index: {}]
  %s1 = inlined_call_operand.hbm [shape: f32[2,4,8,8], index: 1, kind: input, shape index: {}]
  %s2 = inlined_call_operand.hbm [shape: f32[2,4,8,8], index: 2, kind: input, shape index: {}]
  %s3 = inlined_call_operand.hbm [shape: f32[4,8,32], index: 3, kind: input, shape index: {}]
  %s4 = inlined_call_operand.hbm [shape: f32[2,8,32], index: 4, kind: input, shape index: {}]
  %s5 = inlined_call_operand.hbm [shape: f32[2,8,32], index: 5, kind: output, shape index: {0}]
  %s6 = inlined_call_operand.hbm [shape: bf16[2,4,8,8], index: 6, kind: output, shape index: {1}]
  %7 = xla_tuple %s5, %s6
  %s8 = sld [smem:[#allocation0]]
  $region81: #{tpu_custom_call.1} parent=0
    _
  %s10 = ssub.s32 1, %s8
  %s11 = scalar_select 0, %s10, %s8
  $region1: #{tpu_custom_call.1} parent=0
    #allocation2 [shape = 'u8[32768]{0}', space=vmem, size = 0x8000, scoped, tag = 'input window, operand 0']
    #allocation3 [shape = 's32[2]{0}', space=sflag, size = 0x8, scoped, tag = 'scoped memory for tpu_custom_call.1']
    #allocation4 [shape = 's32[2]{0}', space=sflag, size = 0x8, scoped, tag = 'scoped memory for tpu_custom_call.1']
    #allocation5 [shape = 'u8[32768]{0}', space=vmem, size = 0x8000, scoped, tag = 'input window, operand 1']
    #allocation6 [shape = 's32[2]{0}', space=sflag, size = 0x8, scoped, tag = 'scoped memory for tpu_custom_call.1']
    #allocation7 [shape = 'u8[32768]{0}', space=vmem, size = 0x8000, scoped, tag = 'input window, operand 2']
    #allocation8 [shape = 'u8[16384]{0}', space=vmem, size = 0x4000, scoped, tag = 'input window, operand 3, single buffered']
    #allocation9 [shape = 's32[1]{0}', space=sflag, size = 0x4, scoped, tag = 'scoped memory for tpu_custom_call.1']
    #allocation10 [shape = 'u8[8192]{0}', space=vmem, size = 0x2000, scoped, tag = 'input window, operand 4']
    #allocation11 [shape = 'u8[8192]{0}', space=vmem, size = 0x2000, scoped, tag = 'output window, operand 0']
    #allocation12 [shape = 'u8[16384]{0}', space=vmem, size = 0x4000, scoped, tag = 'output window, operand 1']
    #allocation13 [shape = 's32[2]{0}', space=sflag, size = 0x8, scoped, tag = 'scoped memory for tpu_custom_call.1']
    %12 = vsyncpa [#allocation3], 0
    %s13 = scalar_lea.sflag [#allocation3], 1
    %14 = vsyncpa %s13, 0
    %15 = vsyncpa [#allocation6], 0
    %s16 = scalar_lea.sflag [#allocation6], 1
    %17 = vsyncpa %s16, 0
    %18 = vsyncpa [#allocation9], 0
    %19 = vsyncpa [#allocation4], 0
    %s20 = scalar_lea.sflag [#allocation4], 1
    %21 = vsyncpa %s20, 0
    %22 = vsyncpa [#allocation13], 0
    %s23 = scalar_lea.sflag [#allocation13], 1
    %24 = vsyncpa %s23, 0
    loop: start=0, step=1, limit=4
    $region2: #{tpu_custom_call.1} parent=1 // loop_pre_header
      _
    $region3: #{tpu_custom_call.1} parent=1 // loop_header
      %s26 = sphi 0, %s30
      %p27 = scmp.ge.s32.totalorder %s26, 4
      %s33 = sphi 0, %s45
      %s34 = sphi 0, %s41
      %s35 = sphi 0, %s33
      %s36 = sphi 0, %s34
      %s37 = sphi 0, %s35
      %s38 = sphi 0, %s36
      %s50 = sphi 0, %s52
      %s53 = sphi 0, %s50
      %s54 = sphi 0, %s53
      %s70 = sphi 0, %s54
      %s76 = sphi 0, %s78
      %s79 = sphi 0, %s76
      %s80 = sphi 0, %s79
      %s96 = sphi 0, %s80
      %s102 = sphi 0, %s104
      %s105 = sphi 0, %s102
      %s106 = sphi 0, %s105
      %s122 = sphi 0, %s106
      %s126 = sphi 0, %s126
      %s128 = sphi 0, %s126
      %s129 = sphi 0, %s128
      %s143 = sphi 0, %s129
      %s151 = sphi 0, %s153
      %s154 = sphi 0, %s151
      %s155 = sphi 0, %s154
      %s171 = sphi 0, %s155
      %s179 = sphi 0, %s181
      %s182 = sphi 0, %s179
      %s183 = sphi 0, %s182
      %s199 = sphi 0, %s183
      %s207 = sphi 0, %s209
      %s210 = sphi 0, %s207
      %s211 = sphi 0, %s210
      %s227 = sphi 0, %s211
    $region4: #{tpu_custom_call.1} parent=1 // loop_header_branch
      %29 = sbr.rel (%p27) target = $region8
    $region5: #{tpu_custom_call.1} parent=1 // loop_body
      %s31 = ssub.s32 %s26, 1
      %s32 = ssub.s32 %s26, 2
      %s39 = sadd.s32 1, %s34
      %p40 = scmp.ge.s32.totalorder %s39, 1
      %s41 = scalar_select %p40, 0, %s39
      %s42 = sadd.s32 1, %s33
      %s43 = scalar_select %p40, %s42, %s33
      %p44 = scmp.ge.s32.totalorder %s43, 2
      %s45 = scalar_select %p44, 0, %s43
      %s46 = ssub.s32 %s33, %s45
      %s47 = ssub.s32 %s34, %s41
      %s48 = sor.u32 %s46, %s47
      %p49 = scmp.eq.s32.totalorder %s48, 0
      %s51 = sadd.s32 %s50, 1
      %s52 = scalar_select %p49, %s50, %s51
      %p55 = pneg %p49
      %p56 = scmp.eq.s32.totalorder %s26, 1
      %p57 = por %p55, %p56
      %p58 = scmp.ne.s32.totalorder %s50, %s53
      %p59 = scmp.eq.s32.totalorder %s26, 0
      %p60 = por %p58, %p59
      %p61 = scmp.ne.s32.totalorder %s50, %s53
      %p62 = scmp.eq.s32.totalorder %s31, 1
      %p63 = por %p61, %p62
      %p64 = scmp.ne.s32.totalorder %s53, %s54
      %p65 = scmp.eq.s32.totalorder %s31, 0
      %p66 = por %p64, %p65
      %p67 = scmp.ne.s32.totalorder %s53, %s54
      %p68 = scmp.eq.s32.totalorder %s32, 1
      %p69 = por %p67, %p68
      %p71 = scmp.ne.s32.totalorder %s54, %s70
      %p72 = scmp.eq.s32.totalorder %s32, 0
      %p73 = por %p71, %p72
      %s74 = ssub.s32 %s33, %s45
      %p75 = scmp.eq.s32.totalorder %s74, 0
      %s77 = sadd.s32 %s76, 1
      %s78 = scalar_select %p75, %s76, %s77
      %p81 = pneg %p75
      %p82 = scmp.eq.s32.totalorder %s26, 1
      %p83 = por %p81, %p82
      %p84 = scmp.ne.s32.totalorder %s76, %s79
      %p85 = scmp.eq.s32.totalorder %s26, 0
      %p86 = por %p84, %p85
      %p87 = scmp.ne.s32.totalorder %s76, %s79
      %p88 = scmp.eq.s32.totalorder %s31, 1
      %p89 = por %p87, %p88
      %p90 = scmp.ne.s32.totalorder %s79, %s80
      %p91 = scmp.eq.s32.totalorder %s31, 0
      %p92 = por %p90, %p91
      %p93 = scmp.ne.s32.totalorder %s79, %s80
      %p94 = scmp.eq.s32.totalorder %s32, 1
      %p95 = por %p93, %p94
      %p97 = scmp.ne.s32.totalorder %s80, %s96
      %p98 = scmp.eq.s32.totalorder %s32, 0
      %p99 = por %p97, %p98
      %s100 = ssub.s32 %s33, %s45
      %p101 = scmp.eq.s32.totalorder %s100, 0
      %s103 = sadd.s32 %s102, 1
      %s104 = scalar_select %p101, %s102, %s103
      %p107 = pneg %p101
      %p108 = scmp.eq.s32.totalorder %s26, 1
      %p109 = por %p107, %p108
      %p110 = scmp.ne.s32.totalorder %s102, %s105
      %p111 = scmp.eq.s32.totalorder %s26, 0
      %p112 = por %p110, %p111
      %p113 = scmp.ne.s32.totalorder %s102, %s105
      %p114 = scmp.eq.s32.totalorder %s31, 1
      %p115 = por %p113, %p114
      %p116 = scmp.ne.s32.totalorder %s105, %s106
      %p117 = scmp.eq.s32.totalorder %s31, 0
      %p118 = por %p116, %p117
      %p119 = scmp.ne.s32.totalorder %s105, %s106
      %p120 = scmp.eq.s32.totalorder %s32, 1
      %p121 = por %p119, %p120
      %p123 = scmp.ne.s32.totalorder %s106, %s122
      %p124 = scmp.eq.s32.totalorder %s32, 0
      %p125 = por %p123, %p124
      %s127 = sadd.s32 %s126, 1
      %p130 = scmp.eq.s32.totalorder %s26, 1
      %p131 = scmp.ne.s32.totalorder %s126, %s128
      %p132 = scmp.eq.s32.totalorder %s26, 0
      %p133 = por %p131, %p132
      %p134 = scmp.ne.s32.totalorder %s126, %s128
      %p135 = scmp.eq.s32.totalorder %s31, 1
      %p136 = por %p134, %p135
      %p137 = scmp.ne.s32.totalorder %s128, %s129
      %p138 = scmp.eq.s32.totalorder %s31, 0
      %p139 = por %p137, %p138
      %p140 = scmp.ne.s32.totalorder %s128, %s129
      %p141 = scmp.eq.s32.totalorder %s32, 1
      %p142 = por %p140, %p141
      %p144 = scmp.ne.s32.totalorder %s129, %s143
      %p145 = scmp.eq.s32.totalorder %s32, 0
      %p146 = por %p144, %p145
      %s147 = ssub.s32 %s33, %s45
      %s148 = ssub.s32 %s34, %s41
      %s149 = sor.u32 %s147, %s148
      %p150 = scmp.eq.s32.totalorder %s149, 0
      %s152 = sadd.s32 %s151, 1
      %s153 = scalar_select %p150, %s151, %s152
      %p156 = pneg %p150
      %p157 = scmp.eq.s32.totalorder %s26, 1
      %p158 = por %p156, %p157
      %p159 = scmp.ne.s32.totalorder %s151, %s154
      %p160 = scmp.eq.s32.totalorder %s26, 0
      %p161 = por %p159, %p160
      %p162 = scmp.ne.s32.totalorder %s151, %s154
      %p163 = scmp.eq.s32.totalorder %s31, 1
      %p164 = por %p162, %p163
      %p165 = scmp.ne.s32.totalorder %s154, %s155
      %p166 = scmp.eq.s32.totalorder %s31, 0
      %p167 = por %p165, %p166
      %p168 = scmp.ne.s32.totalorder %s154, %s155
      %p169 = scmp.eq.s32.totalorder %s32, 1
      %p170 = por %p168, %p169
      %p172 = scmp.ne.s32.totalorder %s155, %s171
      %p173 = scmp.eq.s32.totalorder %s32, 0
      %p174 = por %p172, %p173
      %s175 = ssub.s32 %s33, %s45
      %s176 = ssub.s32 %s34, %s41
      %s177 = sor.u32 %s175, %s176
      %p178 = scmp.eq.s32.totalorder %s177, 0
      %s180 = sadd.s32 %s179, 1
      %s181 = scalar_select %p178, %s179, %s180
      %p184 = pneg %p178
      %p185 = scmp.eq.s32.totalorder %s26, 1
      %p186 = por %p184, %p185
      %p187 = scmp.ne.s32.totalorder %s179, %s182
      %p188 = scmp.eq.s32.totalorder %s26, 0
      %p189 = por %p187, %p188
      %p190 = scmp.ne.s32.totalorder %s179, %s182
      %p191 = scmp.eq.s32.totalorder %s31, 1
      %p192 = por %p190, %p191
      %p193 = scmp.ne.s32.totalorder %s182, %s183
      %p194 = scmp.eq.s32.totalorder %s31, 0
      %p195 = por %p193, %p194
      %p196 = scmp.ne.s32.totalorder %s182, %s183
      %p197 = scmp.eq.s32.totalorder %s32, 1
      %p198 = por %p196, %p197
      %p200 = scmp.ne.s32.totalorder %s183, %s199
      %p201 = scmp.eq.s32.totalorder %s32, 0
      %p202 = por %p200, %p201
      %s203 = ssub.s32 %s33, %s45
      %s204 = ssub.s32 %s34, %s41
      %s205 = sor.u32 %s203, %s204
      %p206 = scmp.eq.s32.totalorder %s205, 0
      %s208 = sadd.s32 %s207, 1
      %s209 = scalar_select %p206, %s207, %s208
      %p212 = pneg %p206
      %p213 = scmp.eq.s32.totalorder %s26, 1
      %p214 = por %p212, %p213
      %p215 = scmp.ne.s32.totalorder %s207, %s210
      %p216 = scmp.eq.s32.totalorder %s26, 0
      %p217 = por %p215, %p216
      %p218 = scmp.ne.s32.totalorder %s207, %s210
      %p219 = scmp.eq.s32.totalorder %s31, 1
      %p220 = por %p218, %p219
      %p221 = scmp.ne.s32.totalorder %s210, %s211
      %p222 = scmp.eq.s32.totalorder %s31, 0
      %p223 = por %p221, %p222
      %p224 = scmp.ne.s32.totalorder %s210, %s211
      %p225 = scmp.eq.s32.totalorder %s32, 1
      %p226 = por %p224, %p225
      %p228 = scmp.ne.s32.totalorder %s211, %s227
      %p229 = scmp.eq.s32.totalorder %s32, 0
      %p230 = por %p228, %p229
      %p231 = scmp.le.s32.totalorder 1, %s26
      %p232 = scmp.lt.s32.totalorder %s26, 3
      %p233 = pnand %p231, %p232
      %p234 = pneg %p233
      // Predicated region
      $region9: #{tpu_custom_call.1} parent=5 // pred_check
        _
      $region10: #{tpu_custom_call.1} parent=5 // pred_check_branch
        %236 = sbr.rel (%p233) target = $region12
      $region11: #{tpu_custom_call.1} parent=5 // pred_region
        %s237 = ssub.s32 %s26, 1
        // Predicated region
        $region13: #{tpu_custom_call.1} parent=11 // pred_check
          %p238 = pneg %p139
        $region14: #{tpu_custom_call.1} parent=11 // pred_check_branch
          %240 = sbr.rel (%p238) target = $region16
        $region15: #{tpu_custom_call.1} parent=11 // pred_region
          %s242 = ssub.s32 512, 512
          %243 = vsyncadd [#allocation9], %s242
          %s244 = sshll.u32 [#allocation8], 4
          %s245 = int_to_ptr.vmem [resolvable:$true] %s244
          %250 = dma.hbm_to_vmem [thread:$0]  %s3, 512, %s245, [#allocation9], 128, 128, 8
        $region16: #{tpu_custom_call.1} parent=11 // pred_fallthru
          _
      $region12: #{tpu_custom_call.1} parent=5 // pred_fallthru
        _
      %p251 = scmp.lt.s32.totalorder %s26, 2
      // Predicated region
      $region17: #{tpu_custom_call.1} parent=5 // pred_check
        %p252 = pneg %p251
      $region18: #{tpu_custom_call.1} parent=5 // pred_check_branch
        %254 = sbr.rel (%p252) target = $region20
      $region19: #{tpu_custom_call.1} parent=5 // pred_region
        // Predicated region
        $region21: #{tpu_custom_call.1} parent=19 // pred_check
          %p255 = pneg %p60
        $region22: #{tpu_custom_call.1} parent=19 // pred_check_branch
          %257 = sbr.rel (%p255) target = $region24
        $region23: #{tpu_custom_call.1} parent=19 // pred_region
          %s258 = sand.u32 %s26, 1
          %s259 = scalar_lea.sflag [#allocation3], %s258
          %s260 = sand.u32 %s50, 1
          %s261 = smul.addr %s260, 32
          %s262 = scalar_lea.vmem [#allocation2], %s261
          %s264 = ssub.s32 512, 512
          %265 = vsyncadd %s259, %s264
          %s266 = smul.addr %s33, 4
          %s267 = sadd.s32 %s34, %s266
          %s268 = smul.addr %s267, 128
          %s269 = scalar_lea.hbm %s0, %s268
          %s270 = sshll.u32 %s262, 4
          %s271 = int_to_ptr.vmem [resolvable:$true] %s270
          %276 = dma.hbm_to_vmem [thread:$0]  %s269, 512, %s271, %s259, 128, 128, 8
        $region24: #{tpu_custom_call.1} parent=19 // pred_fallthru
          _
        // Predicated region
        $region25: #{tpu_custom_call.1} parent=19 // pred_check
          %p277 = pneg %p86
        $region26: #{tpu_custom_call.1} parent=19 // pred_check_branch
          %279 = sbr.rel (%p277) target = $region28
        $region27: #{tpu_custom_call.1} parent=19 // pred_region
          %s280 = sand.u32 %s26, 1
          %s281 = scalar_lea.sflag [#allocation6], %s280
          %s282 = sand.u32 %s76, 1
          %s283 = smul.addr %s282, 32
          %s284 = scalar_lea.vmem [#allocation5], %s283
          %s286 = ssub.s32 512, 512
          %287 = vsyncadd %s281, %s286
          %s288 = smul.addr %s33, 4
          %s289 = smul.addr %s288, 128
          %s290 = scalar_lea.hbm %s1, %s289
          %s291 = sshll.u32 %s284, 4
          %s292 = int_to_ptr.vmem [resolvable:$true] %s291
          %297 = dma.hbm_to_vmem [thread:$0]  %s290, 512, %s292, %s281, 128, 128, 8
        $region28: #{tpu_custom_call.1} parent=19 // pred_fallthru
          _
        // Predicated region
        $region29: #{tpu_custom_call.1} parent=19 // pred_check
          %p298 = pneg %p112
        $region30: #{tpu_custom_call.1} parent=19 // pred_check_branch
          %300 = sbr.rel (%p298) target = $region32
        $region31: #{tpu_custom_call.1} parent=19 // pred_region
          %s301 = sand.u32 %s26, 1
          %s302 = scalar_lea.sflag [#allocation6], %s301
          %s303 = sand.u32 %s102, 1
          %s304 = smul.addr %s303, 32
          %s305 = scalar_lea.vmem [#allocation7], %s304
          %s307 = ssub.s32 512, 512
          %308 = vsyncadd %s302, %s307
          %s309 = smul.addr %s33, 4
          %s310 = smul.addr %s309, 128
          %s311 = scalar_lea.hbm %s2, %s310
          %s312 = sshll.u32 %s305, 4
          %s313 = int_to_ptr.vmem [resolvable:$true] %s312
          %318 = dma.hbm_to_vmem [thread:$0]  %s311, 512, %s313, %s302, 128, 128, 8
        $region32: #{tpu_custom_call.1} parent=19 // pred_fallthru
          _
        // Predicated region
        $region33: #{tpu_custom_call.1} parent=19 // pred_check
          %p319 = pneg %p161
        $region34: #{tpu_custom_call.1} parent=19 // pred_check_branch
          %321 = sbr.rel (%p319) target = $region36
        $region35: #{tpu_custom_call.1} parent=19 // pred_region
          %s322 = sand.u32 %s26, 1
          %s323 = scalar_lea.sflag [#allocation3], %s322
          %s324 = sand.u32 %s151, 1
          %s325 = smul.addr %s324, 8
          %s326 = scalar_lea.vmem [#allocation10], %s325
          %s328 = ssub.s32 128, 128
          %329 = vsyncadd %s323, %s328
          %s330 = sadd.s32 %s34, %s33
          %s331 = smul.addr %s330, 128
          %s332 = scalar_lea.hbm %s4, %s331
          %s334 = sshll.u32 %s326, 4
          %s335 = int_to_ptr.vmem [resolvable:$true] %s334
          %337 = dma.hbm_to_vmem [thread:$0]  %s332, 128, %s335, %s323
        $region36: #{tpu_custom_call.1} parent=19 // pred_fallthru
          _
      $region20: #{tpu_custom_call.1} parent=5 // pred_fallthru
        _
      %p338 = scmp.le.s32.totalorder 1, %s26
      %p339 = scmp.lt.s32.totalorder %s26, 3
      %p340 = pnand %p338, %p339
      %p341 = pneg %p340
      // Predicated region
      $region37: #{tpu_custom_call.1} parent=5 // pred_check
        _
      $region38: #{tpu_custom_call.1} parent=5 // pred_check_branch
        %343 = sbr.rel (%p340) target = $region40
      $region39: #{tpu_custom_call.1} parent=5 // pred_region
        %s344 = ssub.s32 %s26, 1
        %s345 = sand.u32 %s31, 1
        %s346 = scalar_lea.sflag [#allocation3], %s345
        %s347 = sand.u32 %s53, 1
        %s348 = smul.addr %s347, 32
        %s349 = scalar_lea.vmem [#allocation2], %s348
        // Predicated region
        $region41: #{tpu_custom_call.1} parent=39 // pred_check
          %p350 = pneg %p66
        $region42: #{tpu_custom_call.1} parent=39 // pred_check_branch
          %352 = sbr.rel (%p350) target = $region44
        $region43: #{tpu_custom_call.1} parent=39 // pred_region
          %353 = dma.done %s346, 512
        $region44: #{tpu_custom_call.1} parent=39 // pred_fallthru
          _
        %s354 = sand.u32 %s31, 1
        %s355 = scalar_lea.sflag [#allocation6], %s354
        %s356 = sand.u32 %s79, 1
        %s357 = smul.addr %s356, 32
        %s358 = scalar_lea.vmem [#allocation5], %s357
        // Predicated region
        $region45: #{tpu_custom_call.1} parent=39 // pred_check
          %p359 = pneg %p92
        $region46: #{tpu_custom_call.1} parent=39 // pred_check_branch
          %361 = sbr.rel (%p359) target = $region48
        $region47: #{tpu_custom_call.1} parent=39 // pred_region
          %362 = dma.done %s355, 512
        $region48: #{tpu_custom_call.1} parent=39 // pred_fallthru
          _
        %s363 = sand.u32 %s31, 1
        %s364 = scalar_lea.sflag [#allocation6], %s363
        %s365 = sand.u32 %s105, 1
        %s366 = smul.addr %s365, 32
        %s367 = scalar_lea.vmem [#allocation7], %s366
        // Predicated region
        $region49: #{tpu_custom_call.1} parent=39 // pred_check
          %p368 = pneg %p118
        $region50: #{tpu_custom_call.1} parent=39 // pred_check_branch
          %370 = sbr.rel (%p368) target = $region52
        $region51: #{tpu_custom_call.1} parent=39 // pred_region
          %371 = dma.done %s364, 512
        $region52: #{tpu_custom_call.1} parent=39 // pred_fallthru
          _
        // Predicated region
        $region53: #{tpu_custom_call.1} parent=39 // pred_check
          %p372 = pneg %p139
        $region54: #{tpu_custom_call.1} parent=39 // pred_check_branch
          %374 = sbr.rel (%p372) target = $region56
        $region55: #{tpu_custom_call.1} parent=39 // pred_region
          %375 = dma.done [#allocation9], 512
        $region56: #{tpu_custom_call.1} parent=39 // pred_fallthru
          _
        %s376 = sand.u32 %s31, 1
        %s377 = scalar_lea.sflag [#allocation3], %s376
        %s378 = sand.u32 %s154, 1
        %s379 = smul.addr %s378, 8
        %s380 = scalar_lea.vmem [#allocation10], %s379
        // Predicated region
        $region57: #{tpu_custom_call.1} parent=39 // pred_check
          %p381 = pneg %p167
        $region58: #{tpu_custom_call.1} parent=39 // pred_check_branch
          %383 = sbr.rel (%p381) target = $region60
        $region59: #{tpu_custom_call.1} parent=39 // pred_region
          %384 = dma.done %s377, 128
        $region60: #{tpu_custom_call.1} parent=39 // pred_fallthru
          _
        %s385 = sand.u32 %s31, 1
        %s386 = scalar_lea.sflag [#allocation3], %s385
        %s387 = sand.u32 %s53, 1
        %s388 = smul.addr %s387, 32
        %s389 = scalar_lea.vmem [#allocation2], %s388
        %p390 = pneg %p66
        %p391 = pneg %p63
        %s392 = sand.u32 %s31, 1
        %s393 = scalar_lea.sflag [#allocation6], %s392
        %s394 = sand.u32 %s79, 1
        %s395 = smul.addr %s394, 32
        %s396 = scalar_lea.vmem [#allocation5], %s395
        %p397 = pneg %p92
        %p398 = pneg %p89
        %s399 = sand.u32 %s31, 1
        %s400 = scalar_lea.sflag [#allocation6], %s399
        %s401 = sand.u32 %s105, 1
        %s402 = smul.addr %s401, 32
        %s403 = scalar_lea.vmem [#allocation7], %s402
        %p404 = pneg %p118
        %p405 = pneg %p115
        %p406 = pneg %p139
        %p407 = pneg %p136
        %s408 = sand.u32 %s31, 1
        %s409 = scalar_lea.sflag [#allocation3], %s408
        %s410 = sand.u32 %s154, 1
        %s411 = smul.addr %s410, 8
        %s412 = scalar_lea.vmem [#allocation10], %s411
        %p413 = pneg %p167
        %p414 = pneg %p164
        %p415 = pneg %p195
        %p416 = pneg %p192
        %s417 = sand.u32 %s182, 1
        %s418 = scalar_lea.sflag [#allocation4], %s417
        %s419 = sand.u32 %s182, 1
        %s420 = smul.addr %s419, 8
        %s421 = scalar_lea.vmem [#allocation11], %s420
        %p422 = pneg %p223
        %p423 = pneg %p220
        %s424 = sand.u32 %s210, 1
        %s425 = scalar_lea.sflag [#allocation13], %s424
        %s426 = sand.u32 %s210, 1
        %s427 = smul.addr %s426, 16
        %s428 = scalar_lea.vmem [#allocation12], %s427
        %v429 = vld [vmem:[%s349] sm:$0xff]
        %v430 = vld [vmem:[%s349 + $0x8] sm:$0xff]
        %v431 = vld [vmem:[%s349 + $0x10] sm:$0xff]
        %v432 = vld [vmem:[%s349 + $0x18] sm:$0xff]
        %v433 = vld [vmem:[%s358] sm:$0xff]
        %v434 = vld [vmem:[%s358 + $0x8] sm:$0xff]
        %v435 = vld [vmem:[%s358 + $0x10] sm:$0xff]
        %v436 = vld [vmem:[%s358 + $0x18] sm:$0xff]
        %v437 = vld [vmem:[%s367] sm:$0xff]
        %v438 = vld [vmem:[%s367 + $0x8] sm:$0xff]
        %v439 = vld [vmem:[%s367 + $0x10] sm:$0xff]
        %v440 = vld [vmem:[%s367 + $0x18] sm:$0xff]
        %vm441 = vcmask 64512
        %v443 = vsel %vm441, %v429, 0
        %v446 = vsel %vm441, %v433, 0
        %448 = vmatprep.subr.mxu0 0.0
        %449 = vmatpush1.xpose.msra.mxu0 %v446
        %450 = vmatprep.subr.mxu0 0.0
        %451 = vmatpush1.xpose.msra.mxu0 0.0
        %452 = vmatprep.subr.mxu0 0.0
        %453 = vmatpush1.xpose.msra.mxu0 0.0
        %454 = vmatprep.subr.mxu0 0.0
        %455 = vmatpush1.xpose.msra.mxu0 0.0
        %456 = vmatprep.subr.mxu0 0.0
        %457 = vmatpush1.xpose.msra.mxu0 0.0
        %458 = vmatprep.subr.mxu0 0.0
        %459 = vmatpush1.xpose.msra.mxu0 0.0
        %460 = vmatprep.subr.mxu0 0.0
        %461 = vmatpush1.xpose.msra.mxu0 0.0
        %462 = vmatprep.subr.mxu0 0.0
        %463 = vmatpush1.xpose.msra.mxu0 0.0
        %464 = vmatprep.subr.mxu0 0.0
        %465 = vmatpush1.xpose.msra.mxu0 0.0
        %466 = vmatprep.subr.mxu0 0.0
        %467 = vmatpush1.xpose.msra.mxu0 0.0
        %468 = vmatprep.subr.mxu0 0.0
        %469 = vmatpush1.xpose.msra.mxu0 0.0
        %470 = vmatprep.subr.mxu0 0.0
        %471 = vmatpush1.xpose.msra.mxu0 0.0
        %472 = vmatprep.subr.mxu0 0.0
        %473 = vmatpush1.xpose.msra.mxu0 0.0
        %474 = vmatprep.subr.mxu0 0.0
        %475 = vmatpush1.xpose.msra.mxu0 0.0
        %476 = vmatprep.subr.mxu0 0.0
        %477 = vmatpush1.xpose.msra.mxu0 0.0
        %478 = vmatprep.subr.mxu0 0.0
        %479 = vmatpush1.xpose.msra.mxu0 0.0
        %480 = vmatprep.subr.mxu0 0.0
        %481 = vmatpush1.xpose.msra.mxu0 0.0
        %482 = vmatprep.subr.mxu0 0.0
        %483 = vmatpush1.xpose.msra.mxu0 0.0
        %484 = vmatprep.subr.mxu0 0.0
        %485 = vmatpush1.xpose.msra.mxu0 0.0
        %486 = vmatprep.subr.mxu0 0.0
        %487 = vmatpush1.xpose.msra.mxu0 0.0
        %488 = vmatprep.subr.mxu0 0.0
        %489 = vmatpush1.xpose.msra.mxu0 0.0
        %490 = vmatprep.subr.mxu0 0.0
        %491 = vmatpush1.xpose.msra.mxu0 0.0
        %492 = vmatprep.subr.mxu0 0.0
        %493 = vmatpush1.xpose.msra.mxu0 0.0
        %494 = vmatprep.subr.mxu0 0.0
        %495 = vmatpush1.xpose.msra.mxu0 0.0
        %496 = vmatprep.subr.mxu0 0.0
        %497 = vmatpush1.xpose.msra.mxu0 0.0
        %498 = vmatprep.subr.mxu0 0.0
        %499 = vmatpush1.xpose.msra.mxu0 0.0
        %500 = vmatprep.subr.mxu0 0.0
        %501 = vmatpush1.xpose.msra.mxu0 0.0
        %502 = vmatprep.subr.mxu0 0.0
        %503 = vmatpush1.xpose.msra.mxu0 0.0
        %504 = vmatprep.subr.mxu0 0.0
        %505 = vmatpush1.xpose.msra.mxu0 0.0
        %506 = vmatprep.subr.mxu0 0.0
        %507 = vmatpush1.xpose.msra.mxu0 0.0
        %508 = vmatprep.subr.mxu0 0.0
        %509 = vmatpush1.xpose.msra.mxu0 0.0
        %510 = vmatprep.subr.mxu0 0.0
        %511 = vmatpush1.xpose.msra.mxu0 0.0
        %512 = vmatprep.mubr.f32.mxu0 0.0
        %513 = vmatmul.mubr.f32.gmra.mrb[0].mxu0 %v443
        %v514 = vpop.f32.mrb[0].mxu0
        %v515 = vadd.f32 0.0, %v514
        %v516 = vpop.f32.mrb[0].mxu0
        %517 = vdwg.mxu0
        %v519 = vsel %vm441, %v430, 0
        %v522 = vsel %vm441, %v434, 0
        %524 = vmatprep.subr.mxu0 0.0
        %525 = vmatpush1.xpose.msra.mxu0 %v522
        %526 = vmatprep.subr.mxu0 0.0
        %527 = vmatpush1.xpose.msra.mxu0 0.0
        %528 = vmatprep.subr.mxu0 0.0
        %529 = vmatpush1.xpose.msra.mxu0 0.0
        %530 = vmatprep.subr.mxu0 0.0
        %531 = vmatpush1.xpose.msra.mxu0 0.0
        %532 = vmatprep.subr.mxu0 0.0
        %533 = vmatpush1.xpose.msra.mxu0 0.0
        %534 = vmatprep.subr.mxu0 0.0
        %535 = vmatpush1.xpose.msra.mxu0 0.0
        %536 = vmatprep.subr.mxu0 0.0
        %537 = vmatpush1.xpose.msra.mxu0 0.0
        %538 = vmatprep.subr.mxu0 0.0
        %539 = vmatpush1.xpose.msra.mxu0 0.0
        %540 = vmatprep.subr.mxu0 0.0
        %541 = vmatpush1.xpose.msra.mxu0 0.0
        %542 = vmatprep.subr.mxu0 0.0
        %543 = vmatpush1.xpose.msra.mxu0 0.0
        %544 = vmatprep.subr.mxu0 0.0
        %545 = vmatpush1.xpose.msra.mxu0 0.0
        %546 = vmatprep.subr.mxu0 0.0
        %547 = vmatpush1.xpose.msra.mxu0 0.0
        %548 = vmatprep.subr.mxu0 0.0
        %549 = vmatpush1.xpose.msra.mxu0 0.0
        %550 = vmatprep.subr.mxu0 0.0
        %551 = vmatpush1.xpose.msra.mxu0 0.0
        %552 = vmatprep.subr.mxu0 0.0
        %553 = vmatpush1.xpose.msra.mxu0 0.0
        %554 = vmatprep.subr.mxu0 0.0
        %555 = vmatpush1.xpose.msra.mxu0 0.0
        %556 = vmatprep.subr.mxu0 0.0
        %557 = vmatpush1.xpose.msra.mxu0 0.0
        %558 = vmatprep.subr.mxu0 0.0
        %559 = vmatpush1.xpose.msra.mxu0 0.0
        %560 = vmatprep.subr.mxu0 0.0
        %561 = vmatpush1.xpose.msra.mxu0 0.0
        %562 = vmatprep.subr.mxu0 0.0
        %563 = vmatpush1.xpose.msra.mxu0 0.0
        %564 = vmatprep.subr.mxu0 0.0
        %565 = vmatpush1.xpose.msra.mxu0 0.0
        %566 = vmatprep.subr.mxu0 0.0
        %567 = vmatpush1.xpose.msra.mxu0 0.0
        %568 = vmatprep.subr.mxu0 0.0
        %569 = vmatpush1.xpose.msra.mxu0 0.0
        %570 = vmatprep.subr.mxu0 0.0
        %571 = vmatpush1.xpose.msra.mxu0 0.0
        %572 = vmatprep.subr.mxu0 0.0
        %573 = vmatpush1.xpose.msra.mxu0 0.0
        %574 = vmatprep.subr.mxu0 0.0
        %575 = vmatpush1.xpose.msra.mxu0 0.0
        %576 = vmatprep.subr.mxu0 0.0
        %577 = vmatpush1.xpose.msra.mxu0 0.0
        %578 = vmatprep.subr.mxu0 0.0
        %579 = vmatpush1.xpose.msra.mxu0 0.0
        %580 = vmatprep.subr.mxu0 0.0
        %581 = vmatpush1.xpose.msra.mxu0 0.0
        %582 = vmatprep.subr.mxu0 0.0
        %583 = vmatpush1.xpose.msra.mxu0 0.0
        %584 = vmatprep.subr.mxu0 0.0
        %585 = vmatpush1.xpose.msra.mxu0 0.0
        %586 = vmatprep.subr.mxu0 0.0
        %587 = vmatpush1.xpose.msra.mxu0 0.0
        %588 = vmatprep.mubr.f32.mxu0 0.0
        %589 = vmatmul.mubr.f32.gmra.mrb[0].mxu0 %v519
        %v590 = vpop.f32.mrb[0].mxu0
        %v591 = vadd.f32 0.0, %v590
        %v592 = vpop.f32.mrb[0].mxu0
        %593 = vdwg.mxu0
        %v595 = vsel %vm441, %v431, 0
        %v598 = vsel %vm441, %v435, 0
        %600 = vmatprep.subr.mxu0 0.0
        %601 = vmatpush1.xpose.msra.mxu0 %v598
        %602 = vmatprep.subr.mxu0 0.0
        %603 = vmatpush1.xpose.msra.mxu0 0.0
        %604 = vmatprep.subr.mxu0 0.0
        %605 = vmatpush1.xpose.msra.mxu0 0.0
        %606 = vmatprep.subr.mxu0 0.0
        %607 = vmatpush1.xpose.msra.mxu0 0.0
        %608 = vmatprep.subr.mxu0 0.0
        %609 = vmatpush1.xpose.msra.mxu0 0.0
        %610 = vmatprep.subr.mxu0 0.0
        %611 = vmatpush1.xpose.msra.mxu0 0.0
        %612 = vmatprep.subr.mxu0 0.0
        %613 = vmatpush1.xpose.msra.mxu0 0.0
        %614 = vmatprep.subr.mxu0 0.0
        %615 = vmatpush1.xpose.msra.mxu0 0.0
        %616 = vmatprep.subr.mxu0 0.0
        %617 = vmatpush1.xpose.msra.mxu0 0.0
        %618 = vmatprep.subr.mxu0 0.0
        %619 = vmatpush1.xpose.msra.mxu0 0.0
        %620 = vmatprep.subr.mxu0 0.0
        %621 = vmatpush1.xpose.msra.mxu0 0.0
        %622 = vmatprep.subr.mxu0 0.0
        %623 = vmatpush1.xpose.msra.mxu0 0.0
        %624 = vmatprep.subr.mxu0 0.0
        %625 = vmatpush1.xpose.msra.mxu0 0.0
        %626 = vmatprep.subr.mxu0 0.0
        %627 = vmatpush1.xpose.msra.mxu0 0.0
        %628 = vmatprep.subr.mxu0 0.0
        %629 = vmatpush1.xpose.msra.mxu0 0.0
        %630 = vmatprep.subr.mxu0 0.0
        %631 = vmatpush1.xpose.msra.mxu0 0.0
        %632 = vmatprep.subr.mxu0 0.0
        %633 = vmatpush1.xpose.msra.mxu0 0.0
        %634 = vmatprep.subr.mxu0 0.0
        %635 = vmatpush1.xpose.msra.mxu0 0.0
        %636 = vmatprep.subr.mxu0 0.0
        %637 = vmatpush1.xpose.msra.mxu0 0.0
        %638 = vmatprep.subr.mxu0 0.0
        %639 = vmatpush1.xpose.msra.mxu0 0.0
        %640 = vmatprep.subr.mxu0 0.0
        %641 = vmatpush1.xpose.msra.mxu0 0.0
        %642 = vmatprep.subr.mxu0 0.0
        %643 = vmatpush1.xpose.msra.mxu0 0.0
        %644 = vmatprep.subr.mxu0 0.0
        %645 = vmatpush1.xpose.msra.mxu0 0.0
        %646 = vmatprep.subr.mxu0 0.0
        %647 = vmatpush1.xpose.msra.mxu0 0.0
        %648 = vmatprep.subr.mxu0 0.0
        %649 = vmatpush1.xpose.msra.mxu0 0.0
        %650 = vmatprep.subr.mxu0 0.0
        %651 = vmatpush1.xpose.msra.mxu0 0.0
        %652 = vmatprep.subr.mxu0 0.0
        %653 = vmatpush1.xpose.msra.mxu0 0.0
        %654 = vmatprep.subr.mxu0 0.0
        %655 = vmatpush1.xpose.msra.mxu0 0.0
        %656 = vmatprep.subr.mxu0 0.0
        %657 = vmatpush1.xpose.msra.mxu0 0.0
        %658 = vmatprep.subr.mxu0 0.0
        %659 = vmatpush1.xpose.msra.mxu0 0.0
        %660 = vmatprep.subr.mxu0 0.0
        %661 = vmatpush1.xpose.msra.mxu0 0.0
        %662 = vmatprep.subr.mxu0 0.0
        %663 = vmatpush1.xpose.msra.mxu0 0.0
        %664 = vmatprep.mubr.f32.mxu0 0.0
        %665 = vmatmul.mubr.f32.gmra.mrb[0].mxu0 %v595
        %v666 = vpop.f32.mrb[0].mxu0
        %v667 = vadd.f32 0.0, %v666
        %v668 = vpop.f32.mrb[0].mxu0
        %669 = vdwg.mxu0
        %v671 = vsel %vm441, %v432, 0
        %v674 = vsel %vm441, %v436, 0
        %676 = vmatprep.subr.mxu0 0.0
        %677 = vmatpush1.xpose.msra.mxu0 %v674
        %678 = vmatprep.subr.mxu0 0.0
        %679 = vmatpush1.xpose.msra.mxu0 0.0
        %680 = vmatprep.subr.mxu0 0.0
        %681 = vmatpush1.xpose.msra.mxu0 0.0
        %682 = vmatprep.subr.mxu0 0.0
        %683 = vmatpush1.xpose.msra.mxu0 0.0
        %684 = vmatprep.subr.mxu0 0.0
        %685 = vmatpush1.xpose.msra.mxu0 0.0
        %686 = vmatprep.subr.mxu0 0.0
        %687 = vmatpush1.xpose.msra.mxu0 0.0
        %688 = vmatprep.subr.mxu0 0.0
        %689 = vmatpush1.xpose.msra.mxu0 0.0
        %690 = vmatprep.subr.mxu0 0.0
        %691 = vmatpush1.xpose.msra.mxu0 0.0
        %692 = vmatprep.subr.mxu0 0.0
        %693 = vmatpush1.xpose.msra.mxu0 0.0
        %694 = vmatprep.subr.mxu0 0.0
        %695 = vmatpush1.xpose.msra.mxu0 0.0
        %696 = vmatprep.subr.mxu0 0.0
        %697 = vmatpush1.xpose.msra.mxu0 0.0
        %698 = vmatprep.subr.mxu0 0.0
        %699 = vmatpush1.xpose.msra.mxu0 0.0
        %700 = vmatprep.subr.mxu0 0.0
        %701 = vmatpush1.xpose.msra.mxu0 0.0
        %702 = vmatprep.subr.mxu0 0.0
        %703 = vmatpush1.xpose.msra.mxu0 0.0
        %704 = vmatprep.subr.mxu0 0.0
        %705 = vmatpush1.xpose.msra.mxu0 0.0
        %706 = vmatprep.subr.mxu0 0.0
        %707 = vmatpush1.xpose.msra.mxu0 0.0
        %708 = vmatprep.subr.mxu0 0.0
        %709 = vmatpush1.xpose.msra.mxu0 0.0
        %710 = vmatprep.subr.mxu0 0.0
        %711 = vmatpush1.xpose.msra.mxu0 0.0
        %712 = vmatprep.subr.mxu0 0.0
        %713 = vmatpush1.xpose.msra.mxu0 0.0
        %714 = vmatprep.subr.mxu0 0.0
        %715 = vmatpush1.xpose.msra.mxu0 0.0
        %716 = vmatprep.subr.mxu0 0.0
        %717 = vmatpush1.xpose.msra.mxu0 0.0
        %718 = vmatprep.subr.mxu0 0.0
        %719 = vmatpush1.xpose.msra.mxu0 0.0
        %720 = vmatprep.subr.mxu0 0.0
        %721 = vmatpush1.xpose.msra.mxu0 0.0
        %722 = vmatprep.subr.mxu0 0.0
        %723 = vmatpush1.xpose.msra.mxu0 0.0
        %724 = vmatprep.subr.mxu0 0.0
        %725 = vmatpush1.xpose.msra.mxu0 0.0
        %726 = vmatprep.subr.mxu0 0.0
        %727 = vmatpush1.xpose.msra.mxu0 0.0
        %728 = vmatprep.subr.mxu0 0.0
        %729 = vmatpush1.xpose.msra.mxu0 0.0
        %730 = vmatprep.subr.mxu0 0.0
        %731 = vmatpush1.xpose.msra.mxu0 0.0
        %732 = vmatprep.subr.mxu0 0.0
        %733 = vmatpush1.xpose.msra.mxu0 0.0
        %734 = vmatprep.subr.mxu0 0.0
        %735 = vmatpush1.xpose.msra.mxu0 0.0
        %736 = vmatprep.subr.mxu0 0.0
        %737 = vmatpush1.xpose.msra.mxu0 0.0
        %738 = vmatprep.subr.mxu0 0.0
        %739 = vmatpush1.xpose.msra.mxu0 0.0
        %740 = vmatprep.mubr.f32.mxu0 0.0
        %741 = vmatmul.mubr.f32.gmra.mrb[0].mxu0 %v671
        %v742 = vpop.f32.mrb[0].mxu0
        %v743 = vadd.f32 0.0, %v742
        %v744 = vpop.f32.mrb[0].mxu0
        %745 = vdwg.mxu0
        %v746 = vsel %vm441, %v515, -inf
        %747 = vmax.xlane.f32.xlu0 %v746
        %v748 = vpop.xlane.xlu0 %747
        %v749 = vsel %vm441, %v591, -inf
        %750 = vmax.xlane.f32.xlu0 %v749
        %v751 = vpop.xlane.xlu0 %750
        %v752 = vsel %vm441, %v667, -inf
        %753 = vmax.xlane.f32.xlu0 %v752
        %v754 = vpop.xlane.xlu0 %753
        %v755 = vsel %vm441, %v743, -inf
        %756 = vmax.xlane.f32.xlu0 %v755
        %v757 = vpop.xlane.xlu0 %756
        %v758 = vsub.f32 %v515, %v748
        %v759 = vsub.f32 %v591, %v751
        %v760 = vsub.f32 %v667, %v754
        %v761 = vsub.f32 %v743, %v757
        %v762 = vmul.f32 %v758, 1.442695
        %v763 = vpow.pop %v762
        %v764 = vmul.f32 %v759, 1.442695
        %v765 = vpow.pop %v764
        %v766 = vmul.f32 %v760, 1.442695
        %v767 = vpow.pop %v766
        %v768 = vmul.f32 %v761, 1.442695
        %v769 = vpow.pop %v768
        %v770 = vsel %vm441, %v763, 0.0
        %771 = vadd.xlane.f32.xlu0 %v770
        %v772 = vpop.xlane.xlu0 %771
        %v773 = vsel %vm441, %v765, 0.0
        %774 = vadd.xlane.f32.xlu0 %v773
        %v775 = vpop.xlane.xlu0 %774
        %v776 = vsel %vm441, %v767, 0.0
        %777 = vadd.xlane.f32.xlu0 %v776
        %v778 = vpop.xlane.xlu0 %777
        %v779 = vsel %vm441, %v769, 0.0
        %780 = vadd.xlane.f32.xlu0 %v779
        %v781 = vpop.xlane.xlu0 %780
        %v782 = vrcp.pop %v772
        %v783 = vrcp.pop %v775
        %v784 = vrcp.pop %v778
        %v785 = vrcp.pop %v781
        %v786 = vmul.f32 %v763, %v782
        %v787 = vmul.f32 %v765, %v783
        %v788 = vmul.f32 %v767, %v784
        %v789 = vmul.f32 %v769, %v785
        %v790 = vpack.c.bf16 %v786, %v786
        %v791 = vpack.c.bf16 %v787, %v787
        %v792 = vpack.c.bf16 %v788, %v788
        %v793 = vpack.c.bf16 %v789, %v789
        %vm794 = vcmask 60416
        %795 = vst.msk [vmem:[%s428] sm:$0xf] %vm794, %v790
        %796 = vst.msk [vmem:[%s428 + $0x4] sm:$0xf] %vm794, %v791
        %797 = vst.msk [vmem:[%s428 + $0x8] sm:$0xf] %vm794, %v792
        %798 = vst.msk [vmem:[%s428 + $0xc] sm:$0xf] %vm794, %v793
        %v800 = vsel %vm441, %v786, 0
        %802 = vmatprep.subr.mxu0 0.0
        %803 = vmatpush1.msra.mxu0 %v437
        %804 = vmatprep.subr.mxu0 0.0
        %805 = vmatpush1.msra.mxu0 0.0
        %806 = vmatprep.subr.mxu0 0.0
        %807 = vmatpush1.msra.mxu0 0.0
        %808 = vmatprep.subr.mxu0 0.0
        %809 = vmatpush1.msra.mxu0 0.0
        %810 = vmatprep.subr.mxu0 0.0
        %811 = vmatpush1.msra.mxu0 0.0
        %812 = vmatprep.subr.mxu0 0.0
        %813 = vmatpush1.msra.mxu0 0.0
        %814 = vmatprep.subr.mxu0 0.0
        %815 = vmatpush1.msra.mxu0 0.0
        %816 = vmatprep.subr.mxu0 0.0
        %817 = vmatpush1.msra.mxu0 0.0
        %818 = vmatprep.subr.mxu0 0.0
        %819 = vmatpush1.msra.mxu0 0.0
        %820 = vmatprep.subr.mxu0 0.0
        %821 = vmatpush1.msra.mxu0 0.0
        %822 = vmatprep.subr.mxu0 0.0
        %823 = vmatpush1.msra.mxu0 0.0
        %824 = vmatprep.subr.mxu0 0.0
        %825 = vmatpush1.msra.mxu0 0.0
        %826 = vmatprep.subr.mxu0 0.0
        %827 = vmatpush1.msra.mxu0 0.0
        %828 = vmatprep.subr.mxu0 0.0
        %829 = vmatpush1.msra.mxu0 0.0
        %830 = vmatprep.subr.mxu0 0.0
        %831 = vmatpush1.msra.mxu0 0.0
        %832 = vmatprep.subr.mxu0 0.0
        %833 = vmatpush1.msra.mxu0 0.0
        %834 = vmatprep.subr.mxu0 0.0
        %835 = vmatpush1.msra.mxu0 0.0
        %836 = vmatprep.subr.mxu0 0.0
        %837 = vmatpush1.msra.mxu0 0.0
        %838 = vmatprep.subr.mxu0 0.0
        %839 = vmatpush1.msra.mxu0 0.0
        %840 = vmatprep.subr.mxu0 0.0
        %841 = vmatpush1.msra.mxu0 0.0
        %842 = vmatprep.subr.mxu0 0.0
        %843 = vmatpush1.msra.mxu0 0.0
        %844 = vmatprep.subr.mxu0 0.0
        %845 = vmatpush1.msra.mxu0 0.0
        %846 = vmatprep.subr.mxu0 0.0
        %847 = vmatpush1.msra.mxu0 0.0
        %848 = vmatprep.subr.mxu0 0.0
        %849 = vmatpush1.msra.mxu0 0.0
        %850 = vmatprep.subr.mxu0 0.0
        %851 = vmatpush1.msra.mxu0 0.0
        %852 = vmatprep.subr.mxu0 0.0
        %853 = vmatpush1.msra.mxu0 0.0
        %854 = vmatprep.subr.mxu0 0.0
        %855 = vmatpush1.msra.mxu0 0.0
        %856 = vmatprep.subr.mxu0 0.0
        %857 = vmatpush1.msra.mxu0 0.0
        %858 = vmatprep.subr.mxu0 0.0
        %859 = vmatpush1.msra.mxu0 0.0
        %860 = vmatprep.subr.mxu0 0.0
        %861 = vmatpush1.msra.mxu0 0.0
        %862 = vmatprep.subr.mxu0 0.0
        %863 = vmatpush1.msra.mxu0 0.0
        %864 = vmatprep.subr.mxu0 0.0
        %865 = vmatpush1.msra.mxu0 0.0
        %866 = vmatprep.mubr.f32.mxu0 0.0
        %867 = vmatmul.mubr.f32.gmra.mrb[0].mxu0 %v800
        %v868 = vpop.f32.mrb[0].mxu0
        %v869 = vadd.f32 0.0, %v868
        %v870 = vpop.f32.mrb[0].mxu0
        %871 = vdwg.mxu0
        %v873 = vsel %vm441, %v787, 0
        %875 = vmatprep.subr.mxu0 0.0
        %876 = vmatpush1.msra.mxu0 %v438
        %877 = vmatprep.subr.mxu0 0.0
        %878 = vmatpush1.msra.mxu0 0.0
        %879 = vmatprep.subr.mxu0 0.0
        %880 = vmatpush1.msra.mxu0 0.0
        %881 = vmatprep.subr.mxu0 0.0
        %882 = vmatpush1.msra.mxu0 0.0
        %883 = vmatprep.subr.mxu0 0.0
        %884 = vmatpush1.msra.mxu0 0.0
        %885 = vmatprep.subr.mxu0 0.0
        %886 = vmatpush1.msra.mxu0 0.0
        %887 = vmatprep.subr.mxu0 0.0
        %888 = vmatpush1.msra.mxu0 0.0
        %889 = vmatprep.subr.mxu0 0.0
        %890 = vmatpush1.msra.mxu0 0.0
        %891 = vmatprep.subr.mxu0 0.0
        %892 = vmatpush1.msra.mxu0 0.0
        %893 = vmatprep.subr.mxu0 0.0
        %894 = vmatpush1.msra.mxu0 0.0
        %895 = vmatprep.subr.mxu0 0.0
        %896 = vmatpush1.msra.mxu0 0.0
        %897 = vmatprep.subr.mxu0 0.0
        %898 = vmatpush1.msra.mxu0 0.0
        %899 = vmatprep.subr.mxu0 0.0
        %900 = vmatpush1.msra.mxu0 0.0
        %901 = vmatprep.subr.mxu0 0.0
        %902 = vmatpush1.msra.mxu0 0.0
        %903 = vmatprep.subr.mxu0 0.0
        %904 = vmatpush1.msra.mxu0 0.0
        %905 = vmatprep.subr.mxu0 0.0
        %906 = vmatpush1.msra.mxu0 0.0
        %907 = vmatprep.subr.mxu0 0.0
        %908 = vmatpush1.msra.mxu0 0.0
        %909 = vmatprep.subr.mxu0 0.0
        %910 = vmatpush1.msra.mxu0 0.0
        %911 = vmatprep.subr.mxu0 0.0
        %912 = vmatpush1.msra.mxu0 0.0
        %913 = vmatprep.subr.mxu0 0.0
        %914 = vmatpush1.msra.mxu0 0.0
        %915 = vmatprep.subr.mxu0 0.0
        %916 = vmatpush1.msra.mxu0 0.0
        %917 = vmatprep.subr.mxu0 0.0
        %918 = vmatpush1.msra.mxu0 0.0
        %919 = vmatprep.subr.mxu0 0.0
        %920 = vmatpush1.msra.mxu0 0.0
        %921 = vmatprep.subr.mxu0 0.0
        %922 = vmatpush1.msra.mxu0 0.0
        %923 = vmatprep.subr.mxu0 0.0
        %924 = vmatpush1.msra.mxu0 0.0
        %925 = vmatprep.subr.mxu0 0.0
        %926 = vmatpush1.msra.mxu0 0.0
        %927 = vmatprep.subr.mxu0 0.0
        %928 = vmatpush1.msra.mxu0 0.0
        %929 = vmatprep.subr.mxu0 0.0
        %930 = vmatpush1.msra.mxu0 0.0
        %931 = vmatprep.subr.mxu0 0.0
        %932 = vmatpush1.msra.mxu0 0.0
        %933 = vmatprep.subr.mxu0 0.0
        %934 = vmatpush1.msra.mxu0 0.0
        %935 = vmatprep.subr.mxu0 0.0
        %936 = vmatpush1.msra.mxu0 0.0
        %937 = vmatprep.subr.mxu0 0.0
        %938 = vmatpush1.msra.mxu0 0.0
        %939 = vmatprep.mubr.f32.mxu0 0.0
        %940 = vmatmul.mubr.f32.gmra.mrb[0].mxu0 %v873
        %v941 = vpop.f32.mrb[0].mxu0
        %v942 = vadd.f32 0.0, %v941
        %v943 = vpop.f32.mrb[0].mxu0
        %944 = vdwg.mxu0
        %v946 = vsel %vm441, %v788, 0
        %948 = vmatprep.subr.mxu0 0.0
        %949 = vmatpush1.msra.mxu0 %v439
        %950 = vmatprep.subr.mxu0 0.0
        %951 = vmatpush1.msra.mxu0 0.0
        %952 = vmatprep.subr.mxu0 0.0
        %953 = vmatpush1.msra.mxu0 0.0
        %954 = vmatprep.subr.mxu0 0.0
        %955 = vmatpush1.msra.mxu0 0.0
        %956 = vmatprep.subr.mxu0 0.0
        %957 = vmatpush1.msra.mxu0 0.0
        %958 = vmatprep.subr.mxu0 0.0
        %959 = vmatpush1.msra.mxu0 0.0
        %960 = vmatprep.subr.mxu0 0.0
        %961 = vmatpush1.msra.mxu0 0.0
        %962 = vmatprep.subr.mxu0 0.0
        %963 = vmatpush1.msra.mxu0 0.0
        %964 = vmatprep.subr.mxu0 0.0
        %965 = vmatpush1.msra.mxu0 0.0
        %966 = vmatprep.subr.mxu0 0.0
        %967 = vmatpush1.msra.mxu0 0.0
        %968 = vmatprep.subr.mxu0 0.0
        %969 = vmatpush1.msra.mxu0 0.0
        %970 = vmatprep.subr.mxu0 0.0
        %971 = vmatpush1.msra.mxu0 0.0
        %972 = vmatprep.subr.mxu0 0.0
        %973 = vmatpush1.msra.mxu0 0.0
        %974 = vmatprep.subr.mxu0 0.0
        %975 = vmatpush1.msra.mxu0 0.0
        %976 = vmatprep.subr.mxu0 0.0
        %977 = vmatpush1.msra.mxu0 0.0
        %978 = vmatprep.subr.mxu0 0.0
        %979 = vmatpush1.msra.mxu0 0.0
        %980 = vmatprep.subr.mxu0 0.0
        %981 = vmatpush1.msra.mxu0 0.0
        %982 = vmatprep.subr.mxu0 0.0
        %983 = vmatpush1.msra.mxu0 0.0
        %984 = vmatprep.subr.mxu0 0.0
        %985 = vmatpush1.msra.mxu0 0.0
        %986 = vmatprep.subr.mxu0 0.0
        %987 = vmatpush1.msra.mxu0 0.0
        %988 = vmatprep.subr.mxu0 0.0
        %989 = vmatpush1.msra.mxu0 0.0
        %990 = vmatprep.subr.mxu0 0.0
        %991 = vmatpush1.msra.mxu0 0.0
        %992 = vmatprep.subr.mxu0 0.0
        %993 = vmatpush1.msra.mxu0 0.0
        %994 = vmatprep.subr.mxu0 0.0
        %995 = vmatpush1.msra.mxu0 0.0
        %996 = vmatprep.subr.mxu0 0.0
        %997 = vmatpush1.msra.mxu0 0.0
        %998 = vmatprep.subr.mxu0 0.0
        %999 = vmatpush1.msra.mxu0 0.0
        %1000 = vmatprep.subr.mxu0 0.0
        %1001 = vmatpush1.msra.mxu0 0.0
        %1002 = vmatprep.subr.mxu0 0.0
        %1003 = vmatpush1.msra.mxu0 0.0
        %1004 = vmatprep.subr.mxu0 0.0
        %1005 = vmatpush1.msra.mxu0 0.0
        %1006 = vmatprep.subr.mxu0 0.0
        %1007 = vmatpush1.msra.mxu0 0.0
        %1008 = vmatprep.subr.mxu0 0.0
        %1009 = vmatpush1.msra.mxu0 0.0
        %1010 = vmatprep.subr.mxu0 0.0
        %1011 = vmatpush1.msra.mxu0 0.0
        %1012 = vmatprep.mubr.f32.mxu0 0.0
        %1013 = vmatmul.mubr.f32.gmra.mrb[0].mxu0 %v946
        %v1014 = vpop.f32.mrb[0].mxu0
        %v1015 = vadd.f32 0.0, %v1014
        %v1016 = vpop.f32.mrb[0].mxu0
        %1017 = vdwg.mxu0
        %v1019 = vsel %vm441, %v789, 0
        %1021 = vmatprep.subr.mxu0 0.0
        %1022 = vmatpush1.msra.mxu0 %v440
        %1023 = vmatprep.subr.mxu0 0.0
        %1024 = vmatpush1.msra.mxu0 0.0
        %1025 = vmatprep.subr.mxu0 0.0
        %1026 = vmatpush1.msra.mxu0 0.0
        %1027 = vmatprep.subr.mxu0 0.0
        %1028 = vmatpush1.msra.mxu0 0.0
        %1029 = vmatprep.subr.mxu0 0.0
        %1030 = vmatpush1.msra.mxu0 0.0
        %1031 = vmatprep.subr.mxu0 0.0
        %1032 = vmatpush1.msra.mxu0 0.0
        %1033 = vmatprep.subr.mxu0 0.0
        %1034 = vmatpush1.msra.mxu0 0.0
        %1035 = vmatprep.subr.mxu0 0.0
        %1036 = vmatpush1.msra.mxu0 0.0
        %1037 = vmatprep.subr.mxu0 0.0
        %1038 = vmatpush1.msra.mxu0 0.0
        %1039 = vmatprep.subr.mxu0 0.0
        %1040 = vmatpush1.msra.mxu0 0.0
        %1041 = vmatprep.subr.mxu0 0.0
        %1042 = vmatpush1.msra.mxu0 0.0
        %1043 = vmatprep.subr.mxu0 0.0
        %1044 = vmatpush1.msra.mxu0 0.0
        %1045 = vmatprep.subr.mxu0 0.0
        %1046 = vmatpush1.msra.mxu0 0.0
        %1047 = vmatprep.subr.mxu0 0.0
        %1048 = vmatpush1.msra.mxu0 0.0
        %1049 = vmatprep.subr.mxu0 0.0
        %1050 = vmatpush1.msra.mxu0 0.0
        %1051 = vmatprep.subr.mxu0 0.0
        %1052 = vmatpush1.msra.mxu0 0.0
        %1053 = vmatprep.subr.mxu0 0.0
        %1054 = vmatpush1.msra.mxu0 0.0
        %1055 = vmatprep.subr.mxu0 0.0
        %1056 = vmatpush1.msra.mxu0 0.0
        %1057 = vmatprep.subr.mxu0 0.0
        %1058 = vmatpush1.msra.mxu0 0.0
        %1059 = vmatprep.subr.mxu0 0.0
        %1060 = vmatpush1.msra.mxu0 0.0
        %1061 = vmatprep.subr.mxu0 0.0
        %1062 = vmatpush1.msra.mxu0 0.0
        %1063 = vmatprep.subr.mxu0 0.0
        %1064 = vmatpush1.msra.mxu0 0.0
        %1065 = vmatprep.subr.mxu0 0.0
        %1066 = vmatpush1.msra.mxu0 0.0
        %1067 = vmatprep.subr.mxu0 0.0
        %1068 = vmatpush1.msra.mxu0 0.0
        %1069 = vmatprep.subr.mxu0 0.0
        %1070 = vmatpush1.msra.mxu0 0.0
        %1071 = vmatprep.subr.mxu0 0.0
        %1072 = vmatpush1.msra.mxu0 0.0
        %1073 = vmatprep.subr.mxu0 0.0
        %1074 = vmatpush1.msra.mxu0 0.0
        %1075 = vmatprep.subr.mxu0 0.0
        %1076 = vmatpush1.msra.mxu0 0.0
        %1077 = vmatprep.subr.mxu0 0.0
        %1078 = vmatpush1.msra.mxu0 0.0
        %1079 = vmatprep.subr.mxu0 0.0
        %1080 = vmatpush1.msra.mxu0 0.0
        %1081 = vmatprep.subr.mxu0 0.0
        %1082 = vmatpush1.msra.mxu0 0.0
        %1083 = vmatprep.subr.mxu0 0.0
        %1084 = vmatpush1.msra.mxu0 0.0
        %1085 = vmatprep.mubr.f32.mxu0 0.0
        %1086 = vmatmul.mubr.f32.gmra.mrb[0].mxu0 %v1019
        %v1087 = vpop.f32.mrb[0].mxu0
        %v1088 = vadd.f32 0.0, %v1087
        %v1089 = vpop.f32.mrb[0].mxu0
        %1090 = vdwg.mxu0
        %v1091 = vld [vmem:[%s380] sm:$0xff]
        %v1092 = vld [vmem:[#allocation8] sm:$0xff]
        %v1094 = vsel %vm441, %v869, 0
        %1096 = vmatprep.subr.mxu0 0.0
        %1097 = vmatpush1.msra.mxu0 %v1092
        %1098 = vmatprep.subr.mxu0 0.0
        %1099 = vmatpush1.msra.mxu0 0.0
        %1100 = vmatprep.subr.mxu0 0.0
        %1101 = vmatpush1.msra.mxu0 0.0
        %1102 = vmatprep.subr.mxu0 0.0
        %1103 = vmatpush1.msra.mxu0 0.0
        %1104 = vmatprep.subr.mxu0 0.0
        %1105 = vmatpush1.msra.mxu0 0.0
        %1106 = vmatprep.subr.mxu0 0.0
        %1107 = vmatpush1.msra.mxu0 0.0
        %1108 = vmatprep.subr.mxu0 0.0
        %1109 = vmatpush1.msra.mxu0 0.0
        %1110 = vmatprep.subr.mxu0 0.0
        %1111 = vmatpush1.msra.mxu0 0.0
        %1112 = vmatprep.subr.mxu0 0.0
        %1113 = vmatpush1.msra.mxu0 0.0
        %1114 = vmatprep.subr.mxu0 0.0
        %1115 = vmatpush1.msra.mxu0 0.0
        %1116 = vmatprep.subr.mxu0 0.0
        %1117 = vmatpush1.msra.mxu0 0.0
        %1118 = vmatprep.subr.mxu0 0.0
        %1119 = vmatpush1.msra.mxu0 0.0
        %1120 = vmatprep.subr.mxu0 0.0
        %1121 = vmatpush1.msra.mxu0 0.0
        %1122 = vmatprep.subr.mxu0 0.0
        %1123 = vmatpush1.msra.mxu0 0.0
        %1124 = vmatprep.subr.mxu0 0.0
        %1125 = vmatpush1.msra.mxu0 0.0
        %1126 = vmatprep.subr.mxu0 0.0
        %1127 = vmatpush1.msra.mxu0 0.0
        %1128 = vmatprep.subr.mxu0 0.0
        %1129 = vmatpush1.msra.mxu0 0.0
        %1130 = vmatprep.subr.mxu0 0.0
        %1131 = vmatpush1.msra.mxu0 0.0
        %1132 = vmatprep.subr.mxu0 0.0
        %1133 = vmatpush1.msra.mxu0 0.0
        %1134 = vmatprep.subr.mxu0 0.0
        %1135 = vmatpush1.msra.mxu0 0.0
        %1136 = vmatprep.subr.mxu0 0.0
        %1137 = vmatpush1.msra.mxu0 0.0
        %1138 = vmatprep.subr.mxu0 0.0
        %1139 = vmatpush1.msra.mxu0 0.0
        %1140 = vmatprep.subr.mxu0 0.0
        %1141 = vmatpush1.msra.mxu0 0.0
        %1142 = vmatprep.subr.mxu0 0.0
        %1143 = vmatpush1.msra.mxu0 0.0
        %1144 = vmatprep.subr.mxu0 0.0
        %1145 = vmatpush1.msra.mxu0 0.0
        %1146 = vmatprep.subr.mxu0 0.0
        %1147 = vmatpush1.msra.mxu0 0.0
        %1148 = vmatprep.subr.mxu0 0.0
        %1149 = vmatpush1.msra.mxu0 0.0
        %1150 = vmatprep.subr.mxu0 0.0
        %1151 = vmatpush1.msra.mxu0 0.0
        %1152 = vmatprep.subr.mxu0 0.0
        %1153 = vmatpush1.msra.mxu0 0.0
        %1154 = vmatprep.subr.mxu0 0.0
        %1155 = vmatpush1.msra.mxu0 0.0
        %1156 = vmatprep.subr.mxu0 0.0
        %1157 = vmatpush1.msra.mxu0 0.0
        %1158 = vmatprep.subr.mxu0 0.0
        %1159 = vmatpush1.msra.mxu0 0.0
        %1160 = vmatprep.mubr.f32.mxu0 0.0
        %1161 = vmatmul.mubr.f32.gmra.mrb[0].mxu0 %v1094
        %v1162 = vpop.f32.mrb[0].mxu0
        %v1163 = vadd.f32 0.0, %v1162
        %v1164 = vpop.f32.mrb[0].mxu0
        %1165 = vdwg.mxu0
        %v1166 = vadd.f32 %v1091, %v1163
        %s1167 = scalar_lea.vmem [#allocation8], 8
        %v1168 = vld [vmem:[%s1167] sm:$0xff]
        %v1170 = vsel %vm441, %v942, 0
        %1172 = vmatprep.subr.mxu0 0.0
        %1173 = vmatpush1.msra.mxu0 %v1168
        %1174 = vmatprep.subr.mxu0 0.0
        %1175 = vmatpush1.msra.mxu0 0.0
        %1176 = vmatprep.subr.mxu0 0.0
        %1177 = vmatpush1.msra.mxu0 0.0
        %1178 = vmatprep.subr.mxu0 0.0
        %1179 = vmatpush1.msra.mxu0 0.0
        %1180 = vmatprep.subr.mxu0 0.0
        %1181 = vmatpush1.msra.mxu0 0.0
        %1182 = vmatprep.subr.mxu0 0.0
        %1183 = vmatpush1.msra.mxu0 0.0
        %1184 = vmatprep.subr.mxu0 0.0
        %1185 = vmatpush1.msra.mxu0 0.0
        %1186 = vmatprep.subr.mxu0 0.0
        %1187 = vmatpush1.msra.mxu0 0.0
        %1188 = vmatprep.subr.mxu0 0.0
        %1189 = vmatpush1.msra.mxu0 0.0
        %1190 = vmatprep.subr.mxu0 0.0
        %1191 = vmatpush1.msra.mxu0 0.0
        %1192 = vmatprep.subr.mxu0 0.0
        %1193 = vmatpush1.msra.mxu0 0.0
        %1194 = vmatprep.subr.mxu0 0.0
        %1195 = vmatpush1.msra.mxu0 0.0
        %1196 = vmatprep.subr.mxu0 0.0
        %1197 = vmatpush1.msra.mxu0 0.0
        %1198 = vmatprep.subr.mxu0 0.0
        %1199 = vmatpush1.msra.mxu0 0.0
        %1200 = vmatprep.subr.mxu0 0.0
        %1201 = vmatpush1.msra.mxu0 0.0
        %1202 = vmatprep.subr.mxu0 0.0
        %1203 = vmatpush1.msra.mxu0 0.0
        %1204 = vmatprep.subr.mxu0 0.0
        %1205 = vmatpush1.msra.mxu0 0.0
        %1206 = vmatprep.subr.mxu0 0.0
        %1207 = vmatpush1.msra.mxu0 0.0
        %1208 = vmatprep.subr.mxu0 0.0
        %1209 = vmatpush1.msra.mxu0 0.0
        %1210 = vmatprep.subr.mxu0 0.0
        %1211 = vmatpush1.msra.mxu0 0.0
        %1212 = vmatprep.subr.mxu0 0.0
        %1213 = vmatpush1.msra.mxu0 0.0
        %1214 = vmatprep.subr.mxu0 0.0
        %1215 = vmatpush1.msra.mxu0 0.0
        %1216 = vmatprep.subr.mxu0 0.0
        %1217 = vmatpush1.msra.mxu0 0.0
        %1218 = vmatprep.subr.mxu0 0.0
        %1219 = vmatpush1.msra.mxu0 0.0
        %1220 = vmatprep.subr.mxu0 0.0
        %1221 = vmatpush1.msra.mxu0 0.0
        %1222 = vmatprep.subr.mxu0 0.0
        %1223 = vmatpush1.msra.mxu0 0.0
        %1224 = vmatprep.subr.mxu0 0.0
        %1225 = vmatpush1.msra.mxu0 0.0
        %1226 = vmatprep.subr.mxu0 0.0
        %1227 = vmatpush1.msra.mxu0 0.0
        %1228 = vmatprep.subr.mxu0 0.0
        %1229 = vmatpush1.msra.mxu0 0.0
        %1230 = vmatprep.subr.mxu0 0.0
        %1231 = vmatpush1.msra.mxu0 0.0
        %1232 = vmatprep.subr.mxu0 0.0
        %1233 = vmatpush1.msra.mxu0 0.0
        %1234 = vmatprep.subr.mxu0 0.0
        %1235 = vmatpush1.msra.mxu0 0.0
        %1236 = vmatprep.mubr.f32.mxu0 0.0
        %1237 = vmatmul.mubr.f32.gmra.mrb[0].mxu0 %v1170
        %v1238 = vpop.f32.mrb[0].mxu0
        %v1239 = vadd.f32 0.0, %v1238
        %v1240 = vpop.f32.mrb[0].mxu0
        %1241 = vdwg.mxu0
        %v1242 = vadd.f32 %v1166, %v1239
        %s1243 = scalar_lea.vmem [#allocation8], 16
        %v1244 = vld [vmem:[%s1243] sm:$0xff]
        %v1246 = vsel %vm441, %v1015, 0
        %1248 = vmatprep.subr.mxu0 0.0
        %1249 = vmatpush1.msra.mxu0 %v1244
        %1250 = vmatprep.subr.mxu0 0.0
        %1251 = vmatpush1.msra.mxu0 0.0
        %1252 = vmatprep.subr.mxu0 0.0
        %1253 = vmatpush1.msra.mxu0 0.0
        %1254 = vmatprep.subr.mxu0 0.0
        %1255 = vmatpush1.msra.mxu0 0.0
        %1256 = vmatprep.subr.mxu0 0.0
        %1257 = vmatpush1.msra.mxu0 0.0
        %1258 = vmatprep.subr.mxu0 0.0
        %1259 = vmatpush1.msra.mxu0 0.0
        %1260 = vmatprep.subr.mxu0 0.0
        %1261 = vmatpush1.msra.mxu0 0.0
        %1262 = vmatprep.subr.mxu0 0.0
        %1263 = vmatpush1.msra.mxu0 0.0
        %1264 = vmatprep.subr.mxu0 0.0
        %1265 = vmatpush1.msra.mxu0 0.0
        %1266 = vmatprep.subr.mxu0 0.0
        %1267 = vmatpush1.msra.mxu0 0.0
        %1268 = vmatprep.subr.mxu0 0.0
        %1269 = vmatpush1.msra.mxu0 0.0
        %1270 = vmatprep.subr.mxu0 0.0
        %1271 = vmatpush1.msra.mxu0 0.0
        %1272 = vmatprep.subr.mxu0 0.0
        %1273 = vmatpush1.msra.mxu0 0.0
        %1274 = vmatprep.subr.mxu0 0.0
        %1275 = vmatpush1.msra.mxu0 0.0
        %1276 = vmatprep.subr.mxu0 0.0
        %1277 = vmatpush1.msra.mxu0 0.0
        %1278 = vmatprep.subr.mxu0 0.0
        %1279 = vmatpush1.msra.mxu0 0.0
        %1280 = vmatprep.subr.mxu0 0.0
        %1281 = vmatpush1.msra.mxu0 0.0
        %1282 = vmatprep.subr.mxu0 0.0
        %1283 = vmatpush1.msra.mxu0 0.0
        %1284 = vmatprep.subr.mxu0 0.0
        %1285 = vmatpush1.msra.mxu0 0.0
        %1286 = vmatprep.subr.mxu0 0.0
        %1287 = vmatpush1.msra.mxu0 0.0
        %1288 = vmatprep.subr.mxu0 0.0
        %1289 = vmatpush1.msra.mxu0 0.0
        %1290 = vmatprep.subr.mxu0 0.0
        %1291 = vmatpush1.msra.mxu0 0.0
        %1292 = vmatprep.subr.mxu0 0.0
        %1293 = vmatpush1.msra.mxu0 0.0
        %1294 = vmatprep.subr.mxu0 0.0
        %1295 = vmatpush1.msra.mxu0 0.0
        %1296 = vmatprep.subr.mxu0 0.0
        %1297 = vmatpush1.msra.mxu0 0.0
        %1298 = vmatprep.subr.mxu0 0.0
        %1299 = vmatpush1.msra.mxu0 0.0
        %1300 = vmatprep.subr.mxu0 0.0
        %1301 = vmatpush1.msra.mxu0 0.0
        %1302 = vmatprep.subr.mxu0 0.0
        %1303 = vmatpush1.msra.mxu0 0.0
        %1304 = vmatprep.subr.mxu0 0.0
        %1305 = vmatpush1.msra.mxu0 0.0
        %1306 = vmatprep.subr.mxu0 0.0
        %1307 = vmatpush1.msra.mxu0 0.0
        %1308 = vmatprep.subr.mxu0 0.0
        %1309 = vmatpush1.msra.mxu0 0.0
        %1310 = vmatprep.subr.mxu0 0.0
        %1311 = vmatpush1.msra.mxu0 0.0
        %1312 = vmatprep.mubr.f32.mxu0 0.0
        %1313 = vmatmul.mubr.f32.gmra.mrb[0].mxu0 %v1246
        %v1314 = vpop.f32.mrb[0].mxu0
        %v1315 = vadd.f32 0.0, %v1314
        %v1316 = vpop.f32.mrb[0].mxu0
        %1317 = vdwg.mxu0
        %v1318 = vadd.f32 %v1242, %v1315
        %s1319 = scalar_lea.vmem [#allocation8], 24
        %v1320 = vld [vmem:[%s1319] sm:$0xff]
        %v1322 = vsel %vm441, %v1088, 0
        %1324 = vmatprep.subr.mxu0 0.0
        %1325 = vmatpush1.msra.mxu0 %v1320
        %1326 = vmatprep.subr.mxu0 0.0
        %1327 = vmatpush1.msra.mxu0 0.0
        %1328 = vmatprep.subr.mxu0 0.0
        %1329 = vmatpush1.msra.mxu0 0.0
        %1330 = vmatprep.subr.mxu0 0.0
        %1331 = vmatpush1.msra.mxu0 0.0
        %1332 = vmatprep.subr.mxu0 0.0
        %1333 = vmatpush1.msra.mxu0 0.0
        %1334 = vmatprep.subr.mxu0 0.0
        %1335 = vmatpush1.msra.mxu0 0.0
        %1336 = vmatprep.subr.mxu0 0.0
        %1337 = vmatpush1.msra.mxu0 0.0
        %1338 = vmatprep.subr.mxu0 0.0
        %1339 = vmatpush1.msra.mxu0 0.0
        %1340 = vmatprep.subr.mxu0 0.0
        %1341 = vmatpush1.msra.mxu0 0.0
        %1342 = vmatprep.subr.mxu0 0.0
        %1343 = vmatpush1.msra.mxu0 0.0
        %1344 = vmatprep.subr.mxu0 0.0
        %1345 = vmatpush1.msra.mxu0 0.0
        %1346 = vmatprep.subr.mxu0 0.0
        %1347 = vmatpush1.msra.mxu0 0.0
        %1348 = vmatprep.subr.mxu0 0.0
        %1349 = vmatpush1.msra.mxu0 0.0
        %1350 = vmatprep.subr.mxu0 0.0
        %1351 = vmatpush1.msra.mxu0 0.0
        %1352 = vmatprep.subr.mxu0 0.0
        %1353 = vmatpush1.msra.mxu0 0.0
        %1354 = vmatprep.subr.mxu0 0.0
        %1355 = vmatpush1.msra.mxu0 0.0
        %1356 = vmatprep.subr.mxu0 0.0
        %1357 = vmatpush1.msra.mxu0 0.0
        %1358 = vmatprep.subr.mxu0 0.0
        %1359 = vmatpush1.msra.mxu0 0.0
        %1360 = vmatprep.subr.mxu0 0.0
        %1361 = vmatpush1.msra.mxu0 0.0
        %1362 = vmatprep.subr.mxu0 0.0
        %1363 = vmatpush1.msra.mxu0 0.0
        %1364 = vmatprep.subr.mxu0 0.0
        %1365 = vmatpush1.msra.mxu0 0.0
        %1366 = vmatprep.subr.mxu0 0.0
        %1367 = vmatpush1.msra.mxu0 0.0
        %1368 = vmatprep.subr.mxu0 0.0
        %1369 = vmatpush1.msra.mxu0 0.0
        %1370 = vmatprep.subr.mxu0 0.0
        %1371 = vmatpush1.msra.mxu0 0.0
        %1372 = vmatprep.subr.mxu0 0.0
        %1373 = vmatpush1.msra.mxu0 0.0
        %1374 = vmatprep.subr.mxu0 0.0
        %1375 = vmatpush1.msra.mxu0 0.0
        %1376 = vmatprep.subr.mxu0 0.0
        %1377 = vmatpush1.msra.mxu0 0.0
        %1378 = vmatprep.subr.mxu0 0.0
        %1379 = vmatpush1.msra.mxu0 0.0
        %1380 = vmatprep.subr.mxu0 0.0
        %1381 = vmatpush1.msra.mxu0 0.0
        %1382 = vmatprep.subr.mxu0 0.0
        %1383 = vmatpush1.msra.mxu0 0.0
        %1384 = vmatprep.subr.mxu0 0.0
        %1385 = vmatpush1.msra.mxu0 0.0
        %1386 = vmatprep.subr.mxu0 0.0
        %1387 = vmatpush1.msra.mxu0 0.0
        %1388 = vmatprep.mubr.f32.mxu0 0.0
        %1389 = vmatmul.mubr.f32.gmra.mrb[0].mxu0 %v1322
        %v1390 = vpop.f32.mrb[0].mxu0
        %v1391 = vadd.f32 0.0, %v1390
        %v1392 = vpop.f32.mrb[0].mxu0
        %1393 = vdwg.mxu0
        %v1394 = vadd.f32 %v1318, %v1391
        %vm1395 = vcmask 261120
        %1396 = vst.msk [vmem:[%s421] sm:$0xff] %vm1395, %v1394
        %s1397 = sand.u32 %s182, 1
        %s1398 = scalar_lea.sflag [#allocation4], %s1397
        %s1399 = sand.u32 %s182, 1
        %s1400 = smul.addr %s1399, 8
        %s1401 = scalar_lea.vmem [#allocation11], %s1400
        %s1402 = sand.u32 %s210, 1
        %s1403 = scalar_lea.sflag [#allocation13], %s1402
        %s1404 = sand.u32 %s210, 1
        %s1405 = smul.addr %s1404, 16
        %s1406 = scalar_lea.vmem [#allocation12], %s1405
        // Predicated region
        $region61: #{tpu_custom_call.1} parent=39 // pred_check
          %p1407 = pneg %p192
        $region62: #{tpu_custom_call.1} parent=39 // pred_check_branch
          %1409 = sbr.rel (%p1407) target = $region64
        $region63: #{tpu_custom_call.1} parent=39 // pred_region
          %s1411 = ssub.s32 128, 128
          %1412 = vsyncadd %s1398, %s1411
          %s1413 = sadd.s32 %s36, %s35
          %s1414 = smul.addr %s1413, 128
          %s1415 = scalar_lea.hbm %s5, %s1414
          %s1417 = sshll.u32 %s1401, 4
          %s1418 = int_to_ptr.vmem [resolvable:$true] %s1417
          %1420 = dma.vmem_to_hbm [thread:$0]  %s1418, 128, %s1415, %s1398
        $region64: #{tpu_custom_call.1} parent=39 // pred_fallthru
          _
        // Predicated region
        $region65: #{tpu_custom_call.1} parent=39 // pred_check
          %p1421 = pneg %p220
        $region66: #{tpu_custom_call.1} parent=39 // pred_check_branch
          %1423 = sbr.rel (%p1421) target = $region68
        $region67: #{tpu_custom_call.1} parent=39 // pred_region
          %s1425 = ssub.s32 256, 256
          %1426 = vsyncadd %s1403, %s1425
          %s1427 = smul.addr %s35, 4
          %s1428 = sadd.s32 %s36, %s1427
          %s1429 = smul.addr %s1428, 64
          %s1430 = scalar_lea.hbm %s6, %s1429
          %s1431 = sshll.u32 %s1406, 4
          %s1432 = int_to_ptr.vmem [resolvable:$true] %s1431
          %1437 = dma.vmem_to_hbm [thread:$0]  %s1432, 256, %s1430, %s1403, 64, 64, 4
        $region68: #{tpu_custom_call.1} parent=39 // pred_fallthru
          _
      $region40: #{tpu_custom_call.1} parent=5 // pred_fallthru
        _
      %p1438 = scmp.le.s32.totalorder 2, %s26
      // Predicated region
      $region69: #{tpu_custom_call.1} parent=5 // pred_check
        %p1439 = pneg %p1438
      $region70: #{tpu_custom_call.1} parent=5 // pred_check_branch
        %1441 = sbr.rel (%p1439) target = $region72
      $region71: #{tpu_custom_call.1} parent=5 // pred_region
        %s1442 = ssub.s32 %s26, 2
        // Predicated region
        $region73: #{tpu_custom_call.1} parent=71 // pred_check
          %p1443 = pneg %p198
        $region74: #{tpu_custom_call.1} parent=71 // pred_check_branch
          %1445 = sbr.rel (%p1443) target = $region76
        $region75: #{tpu_custom_call.1} parent=71 // pred_region
          %s1446 = sand.u32 %s183, 1
          %s1447 = scalar_lea.sflag [#allocation4], %s1446
          %s1448 = sand.u32 %s183, 1
          %s1449 = smul.addr %s1448, 8
          %s1450 = scalar_lea.vmem [#allocation11], %s1449
          %1451 = dma.done %s1447, 128
        $region76: #{tpu_custom_call.1} parent=71 // pred_fallthru
          _
        // Predicated region
        $region77: #{tpu_custom_call.1} parent=71 // pred_check
          %p1452 = pneg %p226
        $region78: #{tpu_custom_call.1} parent=71 // pred_check_branch
          %1454 = sbr.rel (%p1452) target = $region80
        $region79: #{tpu_custom_call.1} parent=71 // pred_region
          %s1455 = sand.u32 %s211, 1
          %s1456 = scalar_lea.sflag [#allocation13], %s1455
          %s1457 = sand.u32 %s211, 1
          %s1458 = smul.addr %s1457, 16
          %s1459 = scalar_lea.vmem [#allocation12], %s1458
          %1460 = dma.done %s1456, 256
        $region80: #{tpu_custom_call.1} parent=71 // pred_fallthru
          _
      $region72: #{tpu_custom_call.1} parent=5 // pred_fallthru
        _
    $region6: #{tpu_custom_call.1} parent=1 // loop_footer
      %s30 = sadd.s32 1, %s26
    $region7: #{tpu_custom_call.1} parent=1 // loop_footer_branch
      %25 = sbr.rel target = $region3
    $region8: #{tpu_custom_call.1} parent=1 // loop_exit
      _
    %1461 = vsyncpa [#allocation3], 1
    %s1462 = scalar_lea.sflag [#allocation3], 1
    %1463 = vsyncpa %s1462, 1
    %1464 = vsyncpa [#allocation6], 1
    %s1465 = scalar_lea.sflag [#allocation6], 1
    %1466 = vsyncpa %s1465, 1
    %1467 = vsyncpa [#allocation9], 1
    %1468 = vsyncpa [#allocation4], 1
    %s1469 = scalar_lea.sflag [#allocation4], 1
    %1470 = vsyncpa %s1469, 1
    %1471 = vsyncpa [#allocation13], 1
    %s1472 = scalar_lea.sflag [#allocation13], 1
    %1473 = vsyncpa %s1472, 1

</llo_original>
